<compile_context>
chip_gen: v5e
topology: v5e:2x2
jax: 0.10.0
libtpu: 0.0.40
codegen_flags: <defaults>
</compile_context>

<pallas_src>
import functools

import jax
import jax.numpy as jnp
from jax.experimental import pallas as pl
from jax.experimental.pallas import tpu as pltpu

# ----------------------------- hyper-parameters ------------------------------
BATCH       = 2
PATHS       = 2                     # path_num
CHANNELS    = 3
IMAGE_SIZE  = 16                    # 1-D signal length
PATCH       = 4
NUM_PATCHES = IMAGE_SIZE // PATCH   # 4
PATCH_DIM   = PATCH * CHANNELS      # 12
SEQ         = NUM_PATCHES + 1       # cls token + patches = 5
DIM         = 32
DEPTH       = 2
HEADS       = 2
DIM_HEAD    = 16
INNER       = HEADS * DIM_HEAD      # 32
MLP_DIM     = 64
NUM_CLASSES = 4
LN_EPS      = 1e-5
SCALE       = DIM_HEAD ** -0.5
PB          = PATHS * BATCH         # fused (path, batch) axis, path-major


# ------------------------------ kernel helpers -------------------------------
def _layernorm(x, g, b):
    mu = jnp.mean(x, axis=-1, keepdims=True)
    var = jnp.mean(jnp.square(x - mu), axis=-1, keepdims=True)
    return (x - mu) * jax.lax.rsqrt(var + LN_EPS) * g + b


def _gelu(x):
    c = jnp.float32(0.7978845608028654)  # sqrt(2/pi)
    return 0.5 * x * (1.0 + jnp.tanh(c * (x + 0.044715 * x * x * x)))


# ------------------------ fully fused forward kernel -------------------------
def vit_kernel(xp_ref, wpe_ref, posplus_ref,
               ln1g_ref, ln1b_ref, wq_ref, wk_ref, wv_ref, wo_ref, bo_ref,
               ln2g_ref, ln2b_ref, w1_ref, b1_ref, w2_ref, b2_ref,
               hg_ref, hb_ref, hw_ref, hbias_ref,
               feats_ref, logits_ref):
    # Patch embedding for all (path, batch) rows at once.  Row 0 of every
    # sequence is zero-padded in the wrapper, so proj row 0 == 0 and the cls
    # token arrives purely through posplus -> no sublane concat in-kernel.
    x = jnp.einsum('bnp,bpd->bnd', xp_ref[...], wpe_ref[...],
                   preferred_element_type=jnp.float32)
    x = x + posplus_ref[...]                                   # [PB, SEQ, DIM]
    # emb_dropout / dropout are identity at inference

    for d in range(DEPTH):
        # ---------------- PreNorm + Attention ----------------
        xn = _layernorm(x, ln1g_ref[d], ln1b_ref[d])
        attn_out = None
        for h in range(HEADS):
            l = d * HEADS + h
            q = jnp.einsum('bnd,bde->bne', xn, wq_ref[l],
                           preferred_element_type=jnp.float32)
            k = jnp.einsum('bnd,bde->bne', xn, wk_ref[l],
                           preferred_element_type=jnp.float32)
            v = jnp.einsum('bnd,bde->bne', xn, wv_ref[l],
                           preferred_element_type=jnp.float32)
            s = jnp.einsum('bqe,bke->bqk', q, k,
                           preferred_element_type=jnp.float32) * SCALE
            s = s - jnp.max(s, axis=-1, keepdims=True)
            e = jnp.exp(s)
            attn = e * pl.reciprocal(jnp.sum(e, axis=-1, keepdims=True),
                                     approx=True)
            o = jnp.einsum('bqk,bke->bqe', attn, v,
                           preferred_element_type=jnp.float32)
            # Per-head output projection accumulated in f32 on the MXU:
            # identical to concat-of-heads @ W_o, without the lane concat.
            proj = jnp.einsum('bne,bed->bnd', o, wo_ref[l],
                              preferred_element_type=jnp.float32)
            attn_out = proj if attn_out is None else attn_out + proj
        x = x + attn_out + bo_ref[d]

        # ---------------- PreNorm + FeedForward ----------------
        xn = _layernorm(x, ln2g_ref[d], ln2b_ref[d])
        hmid = _gelu(jnp.einsum('bnd,bde->bne', xn, w1_ref[d],
                                preferred_element_type=jnp.float32) + b1_ref[d])
        x = x + jnp.einsum('bne,bed->bnd', hmid, w2_ref[d],
                           preferred_element_type=jnp.float32) + b2_ref[d]

    # pool = 'cls' -> token 0 of each (path, batch) row.  PB is path-major
    # (idx = p*BATCH + b), so torch.cat((x[0], x[1]), dim=1) is a lane concat
    # of the two per-path row blocks.
    pooled = x[:, 0, :]                                        # [PB, DIM]
    feats = jnp.concatenate(
        [pooled[p * BATCH:(p + 1) * BATCH] for p in range(PATHS)], axis=-1)
    feats_ref[...] = feats                                     # [B, PATHS*DIM]

    # fused mlp_head: LayerNorm(dim*path_num) + Linear(dim*path_num, classes)
    mu = jnp.mean(feats, axis=-1, keepdims=True)
    var = jnp.mean(jnp.square(feats - mu), axis=-1, keepdims=True)
    xh = (feats - mu) * jax.lax.rsqrt(var + LN_EPS) * hg_ref[...] + hb_ref[...]
    logits_ref[...] = jnp.dot(xh, hw_ref[...],
                              preferred_element_type=jnp.float32) + hbias_ref[...]


# --------------------------------- wrapper ------------------------------------
def _repeat_paths(w, axis=0):
    """Per-path axis -> fused path-major (p*BATCH + b) axis of size PB."""
    return jnp.repeat(w, BATCH, axis=axis)


@functools.partial(jax.jit, static_argnames=('feature_out',))
def vit_forward(img, params, feature_out=False):
    # img: [B, PATHS, C, L]  (float32)
    # Rearrange 'b c (l p) -> b l (p c)' per path (glue, fused under jit) and
    # zero-pad a row at sequence position 0 (the cls slot).
    xp = img.astype(jnp.float32).reshape(
        BATCH, PATHS, CHANNELS, NUM_PATCHES, PATCH)
    xp = jnp.transpose(xp, (0, 1, 3, 4, 2)).reshape(
        BATCH, PATHS, NUM_PATCHES, PATCH_DIM)
    xp = jnp.pad(xp, ((0, 0), (0, 0), (1, 0), (0, 0)))         # cls slot = 0
    xp = jnp.transpose(xp, (1, 0, 2, 3)).reshape(PB, SEQ, PATCH_DIM)

    # pos_plus: row 0 = cls + pos[0]; rows 1.. = pos[1..] + b_pe (since the
    # padded proj row 0 is exactly zero, x = proj + pos_plus is exact).
    row0 = params['cls'] + params['pos'][:, 0]                 # [PATHS, DIM]
    rest = params['pos'][:, 1:] + params['b_pe'][:, None, :]   # [PATHS, N, DIM]
    pos_plus = jnp.concatenate([row0[:, None, :], rest], axis=1)

    def per_layer(w):       # [PATHS, DEPTH, ...] -> [DEPTH, PB, ...]
        return _repeat_paths(jnp.swapaxes(w, 0, 1), axis=1)

    def per_layer_vec(w):   # [PATHS, DEPTH, E] -> [DEPTH, PB, 1, E]
        return per_layer(w)[:, :, None, :]

    def per_head(w):        # [PATHS, DEPTH, HEADS, A, B] -> [DEPTH*HEADS, PB, A, B]
        w = jnp.transpose(w, (1, 2, 0, 3, 4))
        w = w.reshape(DEPTH * HEADS, PATHS, w.shape[-2], w.shape[-1])
        return _repeat_paths(w, axis=1)

    operands = (
        xp,
        _repeat_paths(params['w_pe']),
        _repeat_paths(pos_plus),
        per_layer_vec(params['ln1_g']), per_layer_vec(params['ln1_b']),
        per_head(params['w_q']), per_head(params['w_k']), per_head(params['w_v']),
        per_head(params['w_o']),
        per_layer_vec(params['b_o']),
        per_layer_vec(params['ln2_g']), per_layer_vec(params['ln2_b']),
        per_layer(params['w1']), per_layer_vec(params['b1']),
        per_layer(params['w2']), per_layer_vec(params['b2']),
        params['head_g'][None, :], params['head_b'][None, :],
        params['head_w'], params['head_bias'][None, :],
    )

    vmem = pl.BlockSpec(memory_space=pltpu.MemorySpace.VMEM)
    feats, logits = pl.pallas_call(
        vit_kernel,
        out_shape=(jax.ShapeDtypeStruct((BATCH, PATHS * DIM), jnp.float32),
                   jax.ShapeDtypeStruct((BATCH, NUM_CLASSES), jnp.float32)),
        in_specs=[vmem] * len(operands),
        out_specs=(vmem, vmem),
    )(*operands)

    return feats if feature_out else logits


# ------------------------------ parameter init --------------------------------
def init_params(key):
    keys = jax.random.split(key, 15)

    def rn(k, shape, scale=0.05):
        return scale * jax.random.normal(k, shape, dtype=jnp.float32)

    return dict(
        # patch embedding (per path); weights stored pre-transposed for x @ W
        w_pe=rn(keys[0], (PATHS, PATCH_DIM, DIM)),
        b_pe=rn(keys[1], (PATHS, DIM)),
        cls=rn(keys[2], (PATHS, DIM), 1.0),
        pos=rn(keys[3], (PATHS, SEQ, DIM), 1.0),
        # transformer layers, stacked over (path, depth); QKV / out-proj
        # weights pre-split per head (no lane slicing in-kernel), no QKV bias.
        ln1_g=jnp.ones((PATHS, DEPTH, DIM), jnp.float32),
        ln1_b=jnp.zeros((PATHS, DEPTH, DIM), jnp.float32),
        w_q=rn(keys[4], (PATHS, DEPTH, HEADS, DIM, DIM_HEAD)),
        w_k=rn(keys[5], (PATHS, DEPTH, HEADS, DIM, DIM_HEAD)),
        w_v=rn(keys[6], (PATHS, DEPTH, HEADS, DIM, DIM_HEAD)),
        w_o=rn(keys[7], (PATHS, DEPTH, HEADS, DIM_HEAD, DIM)),
        b_o=rn(keys[8], (PATHS, DEPTH, DIM)),
        ln2_g=jnp.ones((PATHS, DEPTH, DIM), jnp.float32),
        ln2_b=jnp.zeros((PATHS, DEPTH, DIM), jnp.float32),
        w1=rn(keys[9], (PATHS, DEPTH, DIM, MLP_DIM)),
        b1=rn(keys[10], (PATHS, DEPTH, MLP_DIM)),
        w2=rn(keys[11], (PATHS, DEPTH, MLP_DIM, DIM)),
        b2=rn(keys[12], (PATHS, DEPTH, DIM)),
        # mlp head: LayerNorm(dim*path_num) + Linear(dim*path_num, num_classes)
        head_g=jnp.ones((PATHS * DIM,), jnp.float32),
        head_b=jnp.zeros((PATHS * DIM,), jnp.float32),
        head_w=rn(keys[13], (PATHS * DIM, NUM_CLASSES)),
        head_bias=rn(keys[14], (NUM_CLASSES,)),
    )


# ----------------------------------- main --------------------------------------
if __name__ == "__main__":
    key = jax.random.PRNGKey(0)
    k_img, k_par = jax.random.split(key)
    img = jax.random.normal(
        k_img, (BATCH, PATHS, CHANNELS, IMAGE_SIZE), dtype=jnp.float32)
    params = init_params(k_par)

    logits = jax.block_until_ready(vit_forward(img, params))
    assert logits.shape == (BATCH, NUM_CLASSES)
    assert bool(jnp.all(jnp.isfinite(logits)))

    feats = jax.block_until_ready(vit_forward(img, params, feature_out=True))
    assert feats.shape == (BATCH, PATHS * DIM)
    assert bool(jnp.all(jnp.isfinite(feats)))

    print("KERNEL_OK")
</pallas_src>

<mosaic_0001>
module attributes {stable_mosaic.version = 11 : i64} {
  func.func @vit_kernel(%arg0: memref<4x5x12xf32, #tpu.memory_space<vmem>>, %arg1: memref<4x12x32xf32, #tpu.memory_space<vmem>>, %arg2: memref<4x5x32xf32, #tpu.memory_space<vmem>>, %arg3: memref<2x4x1x32xf32, #tpu.memory_space<vmem>>, %arg4: memref<2x4x1x32xf32, #tpu.memory_space<vmem>>, %arg5: memref<4x4x32x16xf32, #tpu.memory_space<vmem>>, %arg6: memref<4x4x32x16xf32, #tpu.memory_space<vmem>>, %arg7: memref<4x4x32x16xf32, #tpu.memory_space<vmem>>, %arg8: memref<4x4x16x32xf32, #tpu.memory_space<vmem>>, %arg9: memref<2x4x1x32xf32, #tpu.memory_space<vmem>>, %arg10: memref<2x4x1x32xf32, #tpu.memory_space<vmem>>, %arg11: memref<2x4x1x32xf32, #tpu.memory_space<vmem>>, %arg12: memref<2x4x32x64xf32, #tpu.memory_space<vmem>>, %arg13: memref<2x4x1x64xf32, #tpu.memory_space<vmem>>, %arg14: memref<2x4x64x32xf32, #tpu.memory_space<vmem>>, %arg15: memref<2x4x1x32xf32, #tpu.memory_space<vmem>>, %arg16: memref<1x64xf32, #tpu.memory_space<vmem>>, %arg17: memref<1x64xf32, #tpu.memory_space<vmem>>, %arg18: memref<64x4xf32, #tpu.memory_space<vmem>>, %arg19: memref<1x4xf32, #tpu.memory_space<vmem>>, %arg20: memref<2x64xf32, #tpu.memory_space<vmem>>, %arg21: memref<2x4xf32, #tpu.memory_space<vmem>>) attributes {dimension_semantics = [], scalar_prefetch = 0 : i64, scratch_operands = 0 : i64, tpu.core_type = #tpu.core_type<tc>} {
    %c0 = arith.constant 0 : index
    %c0_0 = arith.constant 0 : index
    %c0_1 = arith.constant 0 : index
    %0 = vector.load %arg0[%c0, %c0_0, %c0_1] : memref<4x5x12xf32, #tpu.memory_space<vmem>>, vector<4x5x12xf32>
    %c0_2 = arith.constant 0 : index
    %c0_3 = arith.constant 0 : index
    %c0_4 = arith.constant 0 : index
    %1 = vector.load %arg1[%c0_2, %c0_3, %c0_4] : memref<4x12x32xf32, #tpu.memory_space<vmem>>, vector<4x12x32xf32>
    "tpu.trace_start"() <{level = 10 : i32, message = "bnp,bpd->bnd"}> : () -> ()
    %cst = arith.constant dense<0.000000e+00> : vector<4x5x32xf32>
    %2 = tpu.matmul %0, %1, %cst {dimension_numbers = #tpu.dot_dimension_numbers<[2], [1], [1], [2], [0, 0, 0, 1, 1, 2], [0], [0]>} : vector<4x5x12xf32>, vector<4x12x32xf32>, vector<4x5x32xf32> -> vector<4x5x32xf32>
    "tpu.trace_stop"() : () -> ()
    %c0_5 = arith.constant 0 : index
    %c0_6 = arith.constant 0 : index
    %c0_7 = arith.constant 0 : index
    %3 = vector.load %arg2[%c0_5, %c0_6, %c0_7] : memref<4x5x32xf32, #tpu.memory_space<vmem>>, vector<4x5x32xf32>
    %4 = arith.addf %2, %3 : vector<4x5x32xf32>
    %c0_8 = arith.constant 0 : index
    %c0_9 = arith.constant 0 : index
    %c0_10 = arith.constant 0 : index
    %c0_11 = arith.constant 0 : index
    %5 = vector.load %arg3[%c0_8, %c0_9, %c0_10, %c0_11] : memref<2x4x1x32xf32, #tpu.memory_space<vmem>>, vector<1x4x1x32xf32>
    %6 = vector.shape_cast %5 : vector<1x4x1x32xf32> to vector<4x1x32xf32>
    %c0_12 = arith.constant 0 : index
    %c0_13 = arith.constant 0 : index
    %c0_14 = arith.constant 0 : index
    %c0_15 = arith.constant 0 : index
    %7 = vector.load %arg4[%c0_12, %c0_13, %c0_14, %c0_15] : memref<2x4x1x32xf32, #tpu.memory_space<vmem>>, vector<1x4x1x32xf32>
    %8 = vector.shape_cast %7 : vector<1x4x1x32xf32> to vector<4x1x32xf32>
    %cst_16 = arith.constant dense<0.000000e+00> : vector<4x5xf32>
    %9 = vector.multi_reduction <add>, %4, %cst_16 [2] : vector<4x5x32xf32> to vector<4x5xf32>
    %10 = vector.shape_cast %9 : vector<4x5xf32> to vector<4x5x1xf32>
    %cst_17 = arith.constant 3.200000e+01 : f32
    %11 = vector.broadcast %cst_17 : f32 to vector<4x5x1xf32>
    %12 = arith.divf %10, %11 : vector<4x5x1xf32>
    %13 = vector.broadcast %12 : vector<4x5x1xf32> to vector<4x5x32xf32>
    %14 = arith.subf %4, %13 : vector<4x5x32xf32>
    %15 = arith.mulf %14, %14 : vector<4x5x32xf32>
    %cst_18 = arith.constant dense<0.000000e+00> : vector<4x5xf32>
    %16 = vector.multi_reduction <add>, %15, %cst_18 [2] : vector<4x5x32xf32> to vector<4x5xf32>
    %17 = vector.shape_cast %16 : vector<4x5xf32> to vector<4x5x1xf32>
    %cst_19 = arith.constant 3.200000e+01 : f32
    %18 = vector.broadcast %cst_19 : f32 to vector<4x5x1xf32>
    %19 = arith.divf %17, %18 : vector<4x5x1xf32>
    %20 = vector.broadcast %12 : vector<4x5x1xf32> to vector<4x5x32xf32>
    %21 = arith.subf %4, %20 : vector<4x5x32xf32>
    %cst_20 = arith.constant 9.99999974E-6 : f32
    %22 = vector.broadcast %cst_20 : f32 to vector<4x5x1xf32>
    %23 = arith.addf %19, %22 : vector<4x5x1xf32>
    %24 = math.rsqrt %23 : vector<4x5x1xf32>
    %25 = vector.broadcast %24 : vector<4x5x1xf32> to vector<4x5x32xf32>
    %26 = arith.mulf %21, %25 : vector<4x5x32xf32>
    %27 = vector.broadcast %6 : vector<4x1x32xf32> to vector<4x5x32xf32>
    %28 = arith.mulf %26, %27 : vector<4x5x32xf32>
    %29 = vector.broadcast %8 : vector<4x1x32xf32> to vector<4x5x32xf32>
    %30 = arith.addf %28, %29 : vector<4x5x32xf32>
    %c0_21 = arith.constant 0 : index
    %c0_22 = arith.constant 0 : index
    %c0_23 = arith.constant 0 : index
    %c0_24 = arith.constant 0 : index
    %31 = vector.load %arg5[%c0_21, %c0_22, %c0_23, %c0_24] : memref<4x4x32x16xf32, #tpu.memory_space<vmem>>, vector<1x4x32x16xf32>
    %32 = vector.shape_cast %31 : vector<1x4x32x16xf32> to vector<4x32x16xf32>
    "tpu.trace_start"() <{level = 10 : i32, message = "bnd,bde->bne"}> : () -> ()
    %cst_25 = arith.constant dense<0.000000e+00> : vector<4x5x16xf32>
    %33 = tpu.matmul %30, %32, %cst_25 {dimension_numbers = #tpu.dot_dimension_numbers<[2], [1], [1], [2], [0, 0, 0, 1, 1, 2], [0], [0]>} : vector<4x5x32xf32>, vector<4x32x16xf32>, vector<4x5x16xf32> -> vector<4x5x16xf32>
    "tpu.trace_stop"() : () -> ()
    %c0_26 = arith.constant 0 : index
    %c0_27 = arith.constant 0 : index
    %c0_28 = arith.constant 0 : index
    %c0_29 = arith.constant 0 : index
    %34 = vector.load %arg6[%c0_26, %c0_27, %c0_28, %c0_29] : memref<4x4x32x16xf32, #tpu.memory_space<vmem>>, vector<1x4x32x16xf32>
    %35 = vector.shape_cast %34 : vector<1x4x32x16xf32> to vector<4x32x16xf32>
    "tpu.trace_start"() <{level = 10 : i32, message = "bnd,bde->bne"}> : () -> ()
    %cst_30 = arith.constant dense<0.000000e+00> : vector<4x5x16xf32>
    %36 = tpu.matmul %30, %35, %cst_30 {dimension_numbers = #tpu.dot_dimension_numbers<[2], [1], [1], [2], [0, 0, 0, 1, 1, 2], [0], [0]>} : vector<4x5x32xf32>, vector<4x32x16xf32>, vector<4x5x16xf32> -> vector<4x5x16xf32>
    "tpu.trace_stop"() : () -> ()
    %c0_31 = arith.constant 0 : index
    %c0_32 = arith.constant 0 : index
    %c0_33 = arith.constant 0 : index
    %c0_34 = arith.constant 0 : index
    %37 = vector.load %arg7[%c0_31, %c0_32, %c0_33, %c0_34] : memref<4x4x32x16xf32, #tpu.memory_space<vmem>>, vector<1x4x32x16xf32>
    %38 = vector.shape_cast %37 : vector<1x4x32x16xf32> to vector<4x32x16xf32>
    "tpu.trace_start"() <{level = 10 : i32, message = "bnd,bde->bne"}> : () -> ()
    %cst_35 = arith.constant dense<0.000000e+00> : vector<4x5x16xf32>
    %39 = tpu.matmul %30, %38, %cst_35 {dimension_numbers = #tpu.dot_dimension_numbers<[2], [1], [1], [2], [0, 0, 0, 1, 1, 2], [0], [0]>} : vector<4x5x32xf32>, vector<4x32x16xf32>, vector<4x5x16xf32> -> vector<4x5x16xf32>
    "tpu.trace_stop"() : () -> ()
    "tpu.trace_start"() <{level = 10 : i32, message = "bqe,bke->bqk"}> : () -> ()
    %cst_36 = arith.constant dense<0.000000e+00> : vector<4x5x5xf32>
    %40 = tpu.matmul %33, %36, %cst_36 {dimension_numbers = #tpu.dot_dimension_numbers<[2], [2], [1], [1], [0, 0, 0, 1, 1, 1], [0], [0]>} : vector<4x5x16xf32>, vector<4x5x16xf32>, vector<4x5x5xf32> -> vector<4x5x5xf32>
    "tpu.trace_stop"() : () -> ()
    %cst_37 = arith.constant 2.500000e-01 : f32
    %41 = vector.broadcast %cst_37 : f32 to vector<4x5x5xf32>
    %42 = arith.mulf %40, %41 : vector<4x5x5xf32>
    %cst_38 = arith.constant dense<0xFF800000> : vector<4x5xf32>
    %43 = vector.multi_reduction <maximumf>, %42, %cst_38 [2] : vector<4x5x5xf32> to vector<4x5xf32>
    %44 = vector.shape_cast %43 : vector<4x5xf32> to vector<4x5x1xf32>
    %45 = vector.broadcast %44 : vector<4x5x1xf32> to vector<4x5x5xf32>
    %46 = arith.subf %42, %45 : vector<4x5x5xf32>
    %47 = math.exp %46 : vector<4x5x5xf32>
    %cst_39 = arith.constant dense<0.000000e+00> : vector<4x5xf32>
    %48 = vector.multi_reduction <add>, %47, %cst_39 [2] : vector<4x5x5xf32> to vector<4x5xf32>
    %49 = vector.shape_cast %48 : vector<4x5xf32> to vector<4x5x1xf32>
    %50 = tpu.reciprocal %49 {approx = true} : vector<4x5x1xf32> -> vector<4x5x1xf32>
    %51 = vector.broadcast %50 : vector<4x5x1xf32> to vector<4x5x5xf32>
    %52 = arith.mulf %47, %51 : vector<4x5x5xf32>
    "tpu.trace_start"() <{level = 10 : i32, message = "bqk,bke->bqe"}> : () -> ()
    %cst_40 = arith.constant dense<0.000000e+00> : vector<4x5x16xf32>
    %53 = tpu.matmul %52, %39, %cst_40 {dimension_numbers = #tpu.dot_dimension_numbers<[2], [1], [1], [2], [0, 0, 0, 1, 1, 2], [0], [0]>} : vector<4x5x5xf32>, vector<4x5x16xf32>, vector<4x5x16xf32> -> vector<4x5x16xf32>
    "tpu.trace_stop"() : () -> ()
    %c0_41 = arith.constant 0 : index
    %c0_42 = arith.constant 0 : index
    %c0_43 = arith.constant 0 : index
    %c0_44 = arith.constant 0 : index
    %54 = vector.load %arg8[%c0_41, %c0_42, %c0_43, %c0_44] : memref<4x4x16x32xf32, #tpu.memory_space<vmem>>, vector<1x4x16x32xf32>
    %55 = vector.shape_cast %54 : vector<1x4x16x32xf32> to vector<4x16x32xf32>
    "tpu.trace_start"() <{level = 10 : i32, message = "bne,bed->bnd"}> : () -> ()
    %cst_45 = arith.constant dense<0.000000e+00> : vector<4x5x32xf32>
    %56 = tpu.matmul %53, %55, %cst_45 {dimension_numbers = #tpu.dot_dimension_numbers<[2], [1], [1], [2], [0, 0, 0, 1, 1, 2], [0], [0]>} : vector<4x5x16xf32>, vector<4x16x32xf32>, vector<4x5x32xf32> -> vector<4x5x32xf32>
    "tpu.trace_stop"() : () -> ()
    %c1 = arith.constant 1 : index
    %c0_46 = arith.constant 0 : index
    %c0_47 = arith.constant 0 : index
    %c0_48 = arith.constant 0 : index
    %57 = vector.load %arg5[%c1, %c0_46, %c0_47, %c0_48] : memref<4x4x32x16xf32, #tpu.memory_space<vmem>>, vector<1x4x32x16xf32>
    %58 = vector.shape_cast %57 : vector<1x4x32x16xf32> to vector<4x32x16xf32>
    "tpu.trace_start"() <{level = 10 : i32, message = "bnd,bde->bne"}> : () -> ()
    %cst_49 = arith.constant dense<0.000000e+00> : vector<4x5x16xf32>
    %59 = tpu.matmul %30, %58, %cst_49 {dimension_numbers = #tpu.dot_dimension_numbers<[2], [1], [1], [2], [0, 0, 0, 1, 1, 2], [0], [0]>} : vector<4x5x32xf32>, vector<4x32x16xf32>, vector<4x5x16xf32> -> vector<4x5x16xf32>
    "tpu.trace_stop"() : () -> ()
    %c1_50 = arith.constant 1 : index
    %c0_51 = arith.constant 0 : index
    %c0_52 = arith.constant 0 : index
    %c0_53 = arith.constant 0 : index
    %60 = vector.load %arg6[%c1_50, %c0_51, %c0_52, %c0_53] : memref<4x4x32x16xf32, #tpu.memory_space<vmem>>, vector<1x4x32x16xf32>
    %61 = vector.shape_cast %60 : vector<1x4x32x16xf32> to vector<4x32x16xf32>
    "tpu.trace_start"() <{level = 10 : i32, message = "bnd,bde->bne"}> : () -> ()
    %cst_54 = arith.constant dense<0.000000e+00> : vector<4x5x16xf32>
    %62 = tpu.matmul %30, %61, %cst_54 {dimension_numbers = #tpu.dot_dimension_numbers<[2], [1], [1], [2], [0, 0, 0, 1, 1, 2], [0], [0]>} : vector<4x5x32xf32>, vector<4x32x16xf32>, vector<4x5x16xf32> -> vector<4x5x16xf32>
    "tpu.trace_stop"() : () -> ()
    %c1_55 = arith.constant 1 : index
    %c0_56 = arith.constant 0 : index
    %c0_57 = arith.constant 0 : index
    %c0_58 = arith.constant 0 : index
    %63 = vector.load %arg7[%c1_55, %c0_56, %c0_57, %c0_58] : memref<4x4x32x16xf32, #tpu.memory_space<vmem>>, vector<1x4x32x16xf32>
    %64 = vector.shape_cast %63 : vector<1x4x32x16xf32> to vector<4x32x16xf32>
    "tpu.trace_start"() <{level = 10 : i32, message = "bnd,bde->bne"}> : () -> ()
    %cst_59 = arith.constant dense<0.000000e+00> : vector<4x5x16xf32>
    %65 = tpu.matmul %30, %64, %cst_59 {dimension_numbers = #tpu.dot_dimension_numbers<[2], [1], [1], [2], [0, 0, 0, 1, 1, 2], [0], [0]>} : vector<4x5x32xf32>, vector<4x32x16xf32>, vector<4x5x16xf32> -> vector<4x5x16xf32>
    "tpu.trace_stop"() : () -> ()
    "tpu.trace_start"() <{level = 10 : i32, message = "bqe,bke->bqk"}> : () -> ()
    %cst_60 = arith.constant dense<0.000000e+00> : vector<4x5x5xf32>
    %66 = tpu.matmul %59, %62, %cst_60 {dimension_numbers = #tpu.dot_dimension_numbers<[2], [2], [1], [1], [0, 0, 0, 1, 1, 1], [0], [0]>} : vector<4x5x16xf32>, vector<4x5x16xf32>, vector<4x5x5xf32> -> vector<4x5x5xf32>
    "tpu.trace_stop"() : () -> ()
    %cst_61 = arith.constant 2.500000e-01 : f32
    %67 = vector.broadcast %cst_61 : f32 to vector<4x5x5xf32>
    %68 = arith.mulf %66, %67 : vector<4x5x5xf32>
    %cst_62 = arith.constant dense<0xFF800000> : vector<4x5xf32>
    %69 = vector.multi_reduction <maximumf>, %68, %cst_62 [2] : vector<4x5x5xf32> to vector<4x5xf32>
    %70 = vector.shape_cast %69 : vector<4x5xf32> to vector<4x5x1xf32>
    %71 = vector.broadcast %70 : vector<4x5x1xf32> to vector<4x5x5xf32>
    %72 = arith.subf %68, %71 : vector<4x5x5xf32>
    %73 = math.exp %72 : vector<4x5x5xf32>
    %cst_63 = arith.constant dense<0.000000e+00> : vector<4x5xf32>
    %74 = vector.multi_reduction <add>, %73, %cst_63 [2] : vector<4x5x5xf32> to vector<4x5xf32>
    %75 = vector.shape_cast %74 : vector<4x5xf32> to vector<4x5x1xf32>
    %76 = tpu.reciprocal %75 {approx = true} : vector<4x5x1xf32> -> vector<4x5x1xf32>
    %77 = vector.broadcast %76 : vector<4x5x1xf32> to vector<4x5x5xf32>
    %78 = arith.mulf %73, %77 : vector<4x5x5xf32>
    "tpu.trace_start"() <{level = 10 : i32, message = "bqk,bke->bqe"}> : () -> ()
    %cst_64 = arith.constant dense<0.000000e+00> : vector<4x5x16xf32>
    %79 = tpu.matmul %78, %65, %cst_64 {dimension_numbers = #tpu.dot_dimension_numbers<[2], [1], [1], [2], [0, 0, 0, 1, 1, 2], [0], [0]>} : vector<4x5x5xf32>, vector<4x5x16xf32>, vector<4x5x16xf32> -> vector<4x5x16xf32>
    "tpu.trace_stop"() : () -> ()
    %c1_65 = arith.constant 1 : index
    %c0_66 = arith.constant 0 : index
    %c0_67 = arith.constant 0 : index
    %c0_68 = arith.constant 0 : index
    %80 = vector.load %arg8[%c1_65, %c0_66, %c0_67, %c0_68] : memref<4x4x16x32xf32, #tpu.memory_space<vmem>>, vector<1x4x16x32xf32>
    %81 = vector.shape_cast %80 : vector<1x4x16x32xf32> to vector<4x16x32xf32>
    "tpu.trace_start"() <{level = 10 : i32, message = "bne,bed->bnd"}> : () -> ()
    %cst_69 = arith.constant dense<0.000000e+00> : vector<4x5x32xf32>
    %82 = tpu.matmul %79, %81, %cst_69 {dimension_numbers = #tpu.dot_dimension_numbers<[2], [1], [1], [2], [0, 0, 0, 1, 1, 2], [0], [0]>} : vector<4x5x16xf32>, vector<4x16x32xf32>, vector<4x5x32xf32> -> vector<4x5x32xf32>
    "tpu.trace_stop"() : () -> ()
    %83 = arith.addf %56, %82 : vector<4x5x32xf32>
    %84 = arith.addf %4, %83 : vector<4x5x32xf32>
    %c0_70 = arith.constant 0 : index
    %c0_71 = arith.constant 0 : index
    %c0_72 = arith.constant 0 : index
    %c0_73 = arith.constant 0 : index
    %85 = vector.load %arg9[%c0_70, %c0_71, %c0_72, %c0_73] : memref<2x4x1x32xf32, #tpu.memory_space<vmem>>, vector<1x4x1x32xf32>
    %86 = vector.shape_cast %85 : vector<1x4x1x32xf32> to vector<4x1x32xf32>
    %87 = vector.broadcast %86 : vector<4x1x32xf32> to vector<4x5x32xf32>
    %88 = arith.addf %84, %87 : vector<4x5x32xf32>
    %c0_74 = arith.constant 0 : index
    %c0_75 = arith.constant 0 : index
    %c0_76 = arith.constant 0 : index
    %c0_77 = arith.constant 0 : index
    %89 = vector.load %arg10[%c0_74, %c0_75, %c0_76, %c0_77] : memref<2x4x1x32xf32, #tpu.memory_space<vmem>>, vector<1x4x1x32xf32>
    %90 = vector.shape_cast %89 : vector<1x4x1x32xf32> to vector<4x1x32xf32>
    %c0_78 = arith.constant 0 : index
    %c0_79 = arith.constant 0 : index
    %c0_80 = arith.constant 0 : index
    %c0_81 = arith.constant 0 : index
    %91 = vector.load %arg11[%c0_78, %c0_79, %c0_80, %c0_81] : memref<2x4x1x32xf32, #tpu.memory_space<vmem>>, vector<1x4x1x32xf32>
    %92 = vector.shape_cast %91 : vector<1x4x1x32xf32> to vector<4x1x32xf32>
    %cst_82 = arith.constant dense<0.000000e+00> : vector<4x5xf32>
    %93 = vector.multi_reduction <add>, %88, %cst_82 [2] : vector<4x5x32xf32> to vector<4x5xf32>
    %94 = vector.shape_cast %93 : vector<4x5xf32> to vector<4x5x1xf32>
    %cst_83 = arith.constant 3.200000e+01 : f32
    %95 = vector.broadcast %cst_83 : f32 to vector<4x5x1xf32>
    %96 = arith.divf %94, %95 : vector<4x5x1xf32>
    %97 = vector.broadcast %96 : vector<4x5x1xf32> to vector<4x5x32xf32>
    %98 = arith.subf %88, %97 : vector<4x5x32xf32>
    %99 = arith.mulf %98, %98 : vector<4x5x32xf32>
    %cst_84 = arith.constant dense<0.000000e+00> : vector<4x5xf32>
    %100 = vector.multi_reduction <add>, %99, %cst_84 [2] : vector<4x5x32xf32> to vector<4x5xf32>
    %101 = vector.shape_cast %100 : vector<4x5xf32> to vector<4x5x1xf32>
    %cst_85 = arith.constant 3.200000e+01 : f32
    %102 = vector.broadcast %cst_85 : f32 to vector<4x5x1xf32>
    %103 = arith.divf %101, %102 : vector<4x5x1xf32>
    %104 = vector.broadcast %96 : vector<4x5x1xf32> to vector<4x5x32xf32>
    %105 = arith.subf %88, %104 : vector<4x5x32xf32>
    %cst_86 = arith.constant 9.99999974E-6 : f32
    %106 = vector.broadcast %cst_86 : f32 to vector<4x5x1xf32>
    %107 = arith.addf %103, %106 : vector<4x5x1xf32>
    %108 = math.rsqrt %107 : vector<4x5x1xf32>
    %109 = vector.broadcast %108 : vector<4x5x1xf32> to vector<4x5x32xf32>
    %110 = arith.mulf %105, %109 : vector<4x5x32xf32>
    %111 = vector.broadcast %90 : vector<4x1x32xf32> to vector<4x5x32xf32>
    %112 = arith.mulf %110, %111 : vector<4x5x32xf32>
    %113 = vector.broadcast %92 : vector<4x1x32xf32> to vector<4x5x32xf32>
    %114 = arith.addf %112, %113 : vector<4x5x32xf32>
    %c0_87 = arith.constant 0 : index
    %c0_88 = arith.constant 0 : index
    %c0_89 = arith.constant 0 : index
    %c0_90 = arith.constant 0 : index
    %115 = vector.load %arg12[%c0_87, %c0_88, %c0_89, %c0_90] : memref<2x4x32x64xf32, #tpu.memory_space<vmem>>, vector<1x4x32x64xf32>
    %116 = vector.shape_cast %115 : vector<1x4x32x64xf32> to vector<4x32x64xf32>
    "tpu.trace_start"() <{level = 10 : i32, message = "bnd,bde->bne"}> : () -> ()
    %cst_91 = arith.constant dense<0.000000e+00> : vector<4x5x64xf32>
    %117 = tpu.matmul %114, %116, %cst_91 {dimension_numbers = #tpu.dot_dimension_numbers<[2], [1], [1], [2], [0, 0, 0, 1, 1, 2], [0], [0]>} : vector<4x5x32xf32>, vector<4x32x64xf32>, vector<4x5x64xf32> -> vector<4x5x64xf32>
    "tpu.trace_stop"() : () -> ()
    %c0_92 = arith.constant 0 : index
    %c0_93 = arith.constant 0 : index
    %c0_94 = arith.constant 0 : index
    %c0_95 = arith.constant 0 : index
    %118 = vector.load %arg13[%c0_92, %c0_93, %c0_94, %c0_95] : memref<2x4x1x64xf32, #tpu.memory_space<vmem>>, vector<1x4x1x64xf32>
    %119 = vector.shape_cast %118 : vector<1x4x1x64xf32> to vector<4x1x64xf32>
    %120 = vector.broadcast %119 : vector<4x1x64xf32> to vector<4x5x64xf32>
    %121 = arith.addf %117, %120 : vector<4x5x64xf32>
    %cst_96 = arith.constant 5.000000e-01 : f32
    %122 = vector.broadcast %cst_96 : f32 to vector<4x5x64xf32>
    %123 = arith.mulf %122, %121 : vector<4x5x64xf32>
    %cst_97 = arith.constant 4.471500e-02 : f32
    %124 = vector.broadcast %cst_97 : f32 to vector<4x5x64xf32>
    %125 = arith.mulf %124, %121 : vector<4x5x64xf32>
    %126 = arith.mulf %125, %121 : vector<4x5x64xf32>
    %127 = arith.mulf %126, %121 : vector<4x5x64xf32>
    %128 = arith.addf %121, %127 : vector<4x5x64xf32>
    %cst_98 = arith.constant 0.797884583 : f32
    %129 = vector.broadcast %cst_98 : f32 to vector<4x5x64xf32>
    %130 = arith.mulf %129, %128 : vector<4x5x64xf32>
    %131 = math.tanh %130 : vector<4x5x64xf32>
    %cst_99 = arith.constant 1.000000e+00 : f32
    %132 = vector.broadcast %cst_99 : f32 to vector<4x5x64xf32>
    %133 = arith.addf %132, %131 : vector<4x5x64xf32>
    %134 = arith.mulf %123, %133 : vector<4x5x64xf32>
    %c0_100 = arith.constant 0 : index
    %c0_101 = arith.constant 0 : index
    %c0_102 = arith.constant 0 : index
    %c0_103 = arith.constant 0 : index
    %135 = vector.load %arg14[%c0_100, %c0_101, %c0_102, %c0_103] : memref<2x4x64x32xf32, #tpu.memory_space<vmem>>, vector<1x4x64x32xf32>
    %136 = vector.shape_cast %135 : vector<1x4x64x32xf32> to vector<4x64x32xf32>
    "tpu.trace_start"() <{level = 10 : i32, message = "bne,bed->bnd"}> : () -> ()
    %cst_104 = arith.constant dense<0.000000e+00> : vector<4x5x32xf32>
    %137 = tpu.matmul %134, %136, %cst_104 {dimension_numbers = #tpu.dot_dimension_numbers<[2], [1], [1], [2], [0, 0, 0, 1, 1, 2], [0], [0]>} : vector<4x5x64xf32>, vector<4x64x32xf32>, vector<4x5x32xf32> -> vector<4x5x32xf32>
    "tpu.trace_stop"() : () -> ()
    %138 = arith.addf %88, %137 : vector<4x5x32xf32>
    %c0_105 = arith.constant 0 : index
    %c0_106 = arith.constant 0 : index
    %c0_107 = arith.constant 0 : index
    %c0_108 = arith.constant 0 : index
    %139 = vector.load %arg15[%c0_105, %c0_106, %c0_107, %c0_108] : memref<2x4x1x32xf32, #tpu.memory_space<vmem>>, vector<1x4x1x32xf32>
    %140 = vector.shape_cast %139 : vector<1x4x1x32xf32> to vector<4x1x32xf32>
    %141 = vector.broadcast %140 : vector<4x1x32xf32> to vector<4x5x32xf32>
    %142 = arith.addf %138, %141 : vector<4x5x32xf32>
    %c1_109 = arith.constant 1 : index
    %c0_110 = arith.constant 0 : index
    %c0_111 = arith.constant 0 : index
    %c0_112 = arith.constant 0 : index
    %143 = vector.load %arg3[%c1_109, %c0_110, %c0_111, %c0_112] : memref<2x4x1x32xf32, #tpu.memory_space<vmem>>, vector<1x4x1x32xf32>
    %144 = vector.shape_cast %143 : vector<1x4x1x32xf32> to vector<4x1x32xf32>
    %c1_113 = arith.constant 1 : index
    %c0_114 = arith.constant 0 : index
    %c0_115 = arith.constant 0 : index
    %c0_116 = arith.constant 0 : index
    %145 = vector.load %arg4[%c1_113, %c0_114, %c0_115, %c0_116] : memref<2x4x1x32xf32, #tpu.memory_space<vmem>>, vector<1x4x1x32xf32>
    %146 = vector.shape_cast %145 : vector<1x4x1x32xf32> to vector<4x1x32xf32>
    %cst_117 = arith.constant dense<0.000000e+00> : vector<4x5xf32>
    %147 = vector.multi_reduction <add>, %142, %cst_117 [2] : vector<4x5x32xf32> to vector<4x5xf32>
    %148 = vector.shape_cast %147 : vector<4x5xf32> to vector<4x5x1xf32>
    %cst_118 = arith.constant 3.200000e+01 : f32
    %149 = vector.broadcast %cst_118 : f32 to vector<4x5x1xf32>
    %150 = arith.divf %148, %149 : vector<4x5x1xf32>
    %151 = vector.broadcast %150 : vector<4x5x1xf32> to vector<4x5x32xf32>
    %152 = arith.subf %142, %151 : vector<4x5x32xf32>
    %153 = arith.mulf %152, %152 : vector<4x5x32xf32>
    %cst_119 = arith.constant dense<0.000000e+00> : vector<4x5xf32>
    %154 = vector.multi_reduction <add>, %153, %cst_119 [2] : vector<4x5x32xf32> to vector<4x5xf32>
    %155 = vector.shape_cast %154 : vector<4x5xf32> to vector<4x5x1xf32>
    %cst_120 = arith.constant 3.200000e+01 : f32
    %156 = vector.broadcast %cst_120 : f32 to vector<4x5x1xf32>
    %157 = arith.divf %155, %156 : vector<4x5x1xf32>
    %158 = vector.broadcast %150 : vector<4x5x1xf32> to vector<4x5x32xf32>
    %159 = arith.subf %142, %158 : vector<4x5x32xf32>
    %cst_121 = arith.constant 9.99999974E-6 : f32
    %160 = vector.broadcast %cst_121 : f32 to vector<4x5x1xf32>
    %161 = arith.addf %157, %160 : vector<4x5x1xf32>
    %162 = math.rsqrt %161 : vector<4x5x1xf32>
    %163 = vector.broadcast %162 : vector<4x5x1xf32> to vector<4x5x32xf32>
    %164 = arith.mulf %159, %163 : vector<4x5x32xf32>
    %165 = vector.broadcast %144 : vector<4x1x32xf32> to vector<4x5x32xf32>
    %166 = arith.mulf %164, %165 : vector<4x5x32xf32>
    %167 = vector.broadcast %146 : vector<4x1x32xf32> to vector<4x5x32xf32>
    %168 = arith.addf %166, %167 : vector<4x5x32xf32>
    %c2 = arith.constant 2 : index
    %c0_122 = arith.constant 0 : index
    %c0_123 = arith.constant 0 : index
    %c0_124 = arith.constant 0 : index
    %169 = vector.load %arg5[%c2, %c0_122, %c0_123, %c0_124] : memref<4x4x32x16xf32, #tpu.memory_space<vmem>>, vector<1x4x32x16xf32>
    %170 = vector.shape_cast %169 : vector<1x4x32x16xf32> to vector<4x32x16xf32>
    "tpu.trace_start"() <{level = 10 : i32, message = "bnd,bde->bne"}> : () -> ()
    %cst_125 = arith.constant dense<0.000000e+00> : vector<4x5x16xf32>
    %171 = tpu.matmul %168, %170, %cst_125 {dimension_numbers = #tpu.dot_dimension_numbers<[2], [1], [1], [2], [0, 0, 0, 1, 1, 2], [0], [0]>} : vector<4x5x32xf32>, vector<4x32x16xf32>, vector<4x5x16xf32> -> vector<4x5x16xf32>
    "tpu.trace_stop"() : () -> ()
    %c2_126 = arith.constant 2 : index
    %c0_127 = arith.constant 0 : index
    %c0_128 = arith.constant 0 : index
    %c0_129 = arith.constant 0 : index
    %172 = vector.load %arg6[%c2_126, %c0_127, %c0_128, %c0_129] : memref<4x4x32x16xf32, #tpu.memory_space<vmem>>, vector<1x4x32x16xf32>
    %173 = vector.shape_cast %172 : vector<1x4x32x16xf32> to vector<4x32x16xf32>
    "tpu.trace_start"() <{level = 10 : i32, message = "bnd,bde->bne"}> : () -> ()
    %cst_130 = arith.constant dense<0.000000e+00> : vector<4x5x16xf32>
    %174 = tpu.matmul %168, %173, %cst_130 {dimension_numbers = #tpu.dot_dimension_numbers<[2], [1], [1], [2], [0, 0, 0, 1, 1, 2], [0], [0]>} : vector<4x5x32xf32>, vector<4x32x16xf32>, vector<4x5x16xf32> -> vector<4x5x16xf32>
    "tpu.trace_stop"() : () -> ()
    %c2_131 = arith.constant 2 : index
    %c0_132 = arith.constant 0 : index
    %c0_133 = arith.constant 0 : index
    %c0_134 = arith.constant 0 : index
    %175 = vector.load %arg7[%c2_131, %c0_132, %c0_133, %c0_134] : memref<4x4x32x16xf32, #tpu.memory_space<vmem>>, vector<1x4x32x16xf32>
    %176 = vector.shape_cast %175 : vector<1x4x32x16xf32> to vector<4x32x16xf32>
    "tpu.trace_start"() <{level = 10 : i32, message = "bnd,bde->bne"}> : () -> ()
    %cst_135 = arith.constant dense<0.000000e+00> : vector<4x5x16xf32>
    %177 = tpu.matmul %168, %176, %cst_135 {dimension_numbers = #tpu.dot_dimension_numbers<[2], [1], [1], [2], [0, 0, 0, 1, 1, 2], [0], [0]>} : vector<4x5x32xf32>, vector<4x32x16xf32>, vector<4x5x16xf32> -> vector<4x5x16xf32>
    "tpu.trace_stop"() : () -> ()
    "tpu.trace_start"() <{level = 10 : i32, message = "bqe,bke->bqk"}> : () -> ()
    %cst_136 = arith.constant dense<0.000000e+00> : vector<4x5x5xf32>
    %178 = tpu.matmul %171, %174, %cst_136 {dimension_numbers = #tpu.dot_dimension_numbers<[2], [2], [1], [1], [0, 0, 0, 1, 1, 1], [0], [0]>} : vector<4x5x16xf32>, vector<4x5x16xf32>, vector<4x5x5xf32> -> vector<4x5x5xf32>
    "tpu.trace_stop"() : () -> ()
    %cst_137 = arith.constant 2.500000e-01 : f32
    %179 = vector.broadcast %cst_137 : f32 to vector<4x5x5xf32>
    %180 = arith.mulf %178, %179 : vector<4x5x5xf32>
    %cst_138 = arith.constant dense<0xFF800000> : vector<4x5xf32>
    %181 = vector.multi_reduction <maximumf>, %180, %cst_138 [2] : vector<4x5x5xf32> to vector<4x5xf32>
    %182 = vector.shape_cast %181 : vector<4x5xf32> to vector<4x5x1xf32>
    %183 = vector.broadcast %182 : vector<4x5x1xf32> to vector<4x5x5xf32>
    %184 = arith.subf %180, %183 : vector<4x5x5xf32>
    %185 = math.exp %184 : vector<4x5x5xf32>
    %cst_139 = arith.constant dense<0.000000e+00> : vector<4x5xf32>
    %186 = vector.multi_reduction <add>, %185, %cst_139 [2] : vector<4x5x5xf32> to vector<4x5xf32>
    %187 = vector.shape_cast %186 : vector<4x5xf32> to vector<4x5x1xf32>
    %188 = tpu.reciprocal %187 {approx = true} : vector<4x5x1xf32> -> vector<4x5x1xf32>
    %189 = vector.broadcast %188 : vector<4x5x1xf32> to vector<4x5x5xf32>
    %190 = arith.mulf %185, %189 : vector<4x5x5xf32>
    "tpu.trace_start"() <{level = 10 : i32, message = "bqk,bke->bqe"}> : () -> ()
    %cst_140 = arith.constant dense<0.000000e+00> : vector<4x5x16xf32>
    %191 = tpu.matmul %190, %177, %cst_140 {dimension_numbers = #tpu.dot_dimension_numbers<[2], [1], [1], [2], [0, 0, 0, 1, 1, 2], [0], [0]>} : vector<4x5x5xf32>, vector<4x5x16xf32>, vector<4x5x16xf32> -> vector<4x5x16xf32>
    "tpu.trace_stop"() : () -> ()
    %c2_141 = arith.constant 2 : index
    %c0_142 = arith.constant 0 : index
    %c0_143 = arith.constant 0 : index
    %c0_144 = arith.constant 0 : index
    %192 = vector.load %arg8[%c2_141, %c0_142, %c0_143, %c0_144] : memref<4x4x16x32xf32, #tpu.memory_space<vmem>>, vector<1x4x16x32xf32>
    %193 = vector.shape_cast %192 : vector<1x4x16x32xf32> to vector<4x16x32xf32>
    "tpu.trace_start"() <{level = 10 : i32, message = "bne,bed->bnd"}> : () -> ()
    %cst_145 = arith.constant dense<0.000000e+00> : vector<4x5x32xf32>
    %194 = tpu.matmul %191, %193, %cst_145 {dimension_numbers = #tpu.dot_dimension_numbers<[2], [1], [1], [2], [0, 0, 0, 1, 1, 2], [0], [0]>} : vector<4x5x16xf32>, vector<4x16x32xf32>, vector<4x5x32xf32> -> vector<4x5x32xf32>
    "tpu.trace_stop"() : () -> ()
    %c3 = arith.constant 3 : index
    %c0_146 = arith.constant 0 : index
    %c0_147 = arith.constant 0 : index
    %c0_148 = arith.constant 0 : index
    %195 = vector.load %arg5[%c3, %c0_146, %c0_147, %c0_148] : memref<4x4x32x16xf32, #tpu.memory_space<vmem>>, vector<1x4x32x16xf32>
    %196 = vector.shape_cast %195 : vector<1x4x32x16xf32> to vector<4x32x16xf32>
    "tpu.trace_start"() <{level = 10 : i32, message = "bnd,bde->bne"}> : () -> ()
    %cst_149 = arith.constant dense<0.000000e+00> : vector<4x5x16xf32>
    %197 = tpu.matmul %168, %196, %cst_149 {dimension_numbers = #tpu.dot_dimension_numbers<[2], [1], [1], [2], [0, 0, 0, 1, 1, 2], [0], [0]>} : vector<4x5x32xf32>, vector<4x32x16xf32>, vector<4x5x16xf32> -> vector<4x5x16xf32>
    "tpu.trace_stop"() : () -> ()
    %c3_150 = arith.constant 3 : index
    %c0_151 = arith.constant 0 : index
    %c0_152 = arith.constant 0 : index
    %c0_153 = arith.constant 0 : index
    %198 = vector.load %arg6[%c3_150, %c0_151, %c0_152, %c0_153] : memref<4x4x32x16xf32, #tpu.memory_space<vmem>>, vector<1x4x32x16xf32>
    %199 = vector.shape_cast %198 : vector<1x4x32x16xf32> to vector<4x32x16xf32>
    "tpu.trace_start"() <{level = 10 : i32, message = "bnd,bde->bne"}> : () -> ()
    %cst_154 = arith.constant dense<0.000000e+00> : vector<4x5x16xf32>
    %200 = tpu.matmul %168, %199, %cst_154 {dimension_numbers = #tpu.dot_dimension_numbers<[2], [1], [1], [2], [0, 0, 0, 1, 1, 2], [0], [0]>} : vector<4x5x32xf32>, vector<4x32x16xf32>, vector<4x5x16xf32> -> vector<4x5x16xf32>
    "tpu.trace_stop"() : () -> ()
    %c3_155 = arith.constant 3 : index
    %c0_156 = arith.constant 0 : index
    %c0_157 = arith.constant 0 : index
    %c0_158 = arith.constant 0 : index
    %201 = vector.load %arg7[%c3_155, %c0_156, %c0_157, %c0_158] : memref<4x4x32x16xf32, #tpu.memory_space<vmem>>, vector<1x4x32x16xf32>
    %202 = vector.shape_cast %201 : vector<1x4x32x16xf32> to vector<4x32x16xf32>
    "tpu.trace_start"() <{level = 10 : i32, message = "bnd,bde->bne"}> : () -> ()
    %cst_159 = arith.constant dense<0.000000e+00> : vector<4x5x16xf32>
    %203 = tpu.matmul %168, %202, %cst_159 {dimension_numbers = #tpu.dot_dimension_numbers<[2], [1], [1], [2], [0, 0, 0, 1, 1, 2], [0], [0]>} : vector<4x5x32xf32>, vector<4x32x16xf32>, vector<4x5x16xf32> -> vector<4x5x16xf32>
    "tpu.trace_stop"() : () -> ()
    "tpu.trace_start"() <{level = 10 : i32, message = "bqe,bke->bqk"}> : () -> ()
    %cst_160 = arith.constant dense<0.000000e+00> : vector<4x5x5xf32>
    %204 = tpu.matmul %197, %200, %cst_160 {dimension_numbers = #tpu.dot_dimension_numbers<[2], [2], [1], [1], [0, 0, 0, 1, 1, 1], [0], [0]>} : vector<4x5x16xf32>, vector<4x5x16xf32>, vector<4x5x5xf32> -> vector<4x5x5xf32>
    "tpu.trace_stop"() : () -> ()
    %cst_161 = arith.constant 2.500000e-01 : f32
    %205 = vector.broadcast %cst_161 : f32 to vector<4x5x5xf32>
    %206 = arith.mulf %204, %205 : vector<4x5x5xf32>
    %cst_162 = arith.constant dense<0xFF800000> : vector<4x5xf32>
    %207 = vector.multi_reduction <maximumf>, %206, %cst_162 [2] : vector<4x5x5xf32> to vector<4x5xf32>
    %208 = vector.shape_cast %207 : vector<4x5xf32> to vector<4x5x1xf32>
    %209 = vector.broadcast %208 : vector<4x5x1xf32> to vector<4x5x5xf32>
    %210 = arith.subf %206, %209 : vector<4x5x5xf32>
    %211 = math.exp %210 : vector<4x5x5xf32>
    %cst_163 = arith.constant dense<0.000000e+00> : vector<4x5xf32>
    %212 = vector.multi_reduction <add>, %211, %cst_163 [2] : vector<4x5x5xf32> to vector<4x5xf32>
    %213 = vector.shape_cast %212 : vector<4x5xf32> to vector<4x5x1xf32>
    %214 = tpu.reciprocal %213 {approx = true} : vector<4x5x1xf32> -> vector<4x5x1xf32>
    %215 = vector.broadcast %214 : vector<4x5x1xf32> to vector<4x5x5xf32>
    %216 = arith.mulf %211, %215 : vector<4x5x5xf32>
    "tpu.trace_start"() <{level = 10 : i32, message = "bqk,bke->bqe"}> : () -> ()
    %cst_164 = arith.constant dense<0.000000e+00> : vector<4x5x16xf32>
    %217 = tpu.matmul %216, %203, %cst_164 {dimension_numbers = #tpu.dot_dimension_numbers<[2], [1], [1], [2], [0, 0, 0, 1, 1, 2], [0], [0]>} : vector<4x5x5xf32>, vector<4x5x16xf32>, vector<4x5x16xf32> -> vector<4x5x16xf32>
    "tpu.trace_stop"() : () -> ()
    %c3_165 = arith.constant 3 : index
    %c0_166 = arith.constant 0 : index
    %c0_167 = arith.constant 0 : index
    %c0_168 = arith.constant 0 : index
    %218 = vector.load %arg8[%c3_165, %c0_166, %c0_167, %c0_168] : memref<4x4x16x32xf32, #tpu.memory_space<vmem>>, vector<1x4x16x32xf32>
    %219 = vector.shape_cast %218 : vector<1x4x16x32xf32> to vector<4x16x32xf32>
    "tpu.trace_start"() <{level = 10 : i32, message = "bne,bed->bnd"}> : () -> ()
    %cst_169 = arith.constant dense<0.000000e+00> : vector<4x5x32xf32>
    %220 = tpu.matmul %217, %219, %cst_169 {dimension_numbers = #tpu.dot_dimension_numbers<[2], [1], [1], [2], [0, 0, 0, 1, 1, 2], [0], [0]>} : vector<4x5x16xf32>, vector<4x16x32xf32>, vector<4x5x32xf32> -> vector<4x5x32xf32>
    "tpu.trace_stop"() : () -> ()
    %221 = arith.addf %194, %220 : vector<4x5x32xf32>
    %222 = arith.addf %142, %221 : vector<4x5x32xf32>
    %c1_170 = arith.constant 1 : index
    %c0_171 = arith.constant 0 : index
    %c0_172 = arith.constant 0 : index
    %c0_173 = arith.constant 0 : index
    %223 = vector.load %arg9[%c1_170, %c0_171, %c0_172, %c0_173] : memref<2x4x1x32xf32, #tpu.memory_space<vmem>>, vector<1x4x1x32xf32>
    %224 = vector.shape_cast %223 : vector<1x4x1x32xf32> to vector<4x1x32xf32>
    %225 = vector.broadcast %224 : vector<4x1x32xf32> to vector<4x5x32xf32>
    %226 = arith.addf %222, %225 : vector<4x5x32xf32>
    %c1_174 = arith.constant 1 : index
    %c0_175 = arith.constant 0 : index
    %c0_176 = arith.constant 0 : index
    %c0_177 = arith.constant 0 : index
    %227 = vector.load %arg10[%c1_174, %c0_175, %c0_176, %c0_177] : memref<2x4x1x32xf32, #tpu.memory_space<vmem>>, vector<1x4x1x32xf32>
    %228 = vector.shape_cast %227 : vector<1x4x1x32xf32> to vector<4x1x32xf32>
    %c1_178 = arith.constant 1 : index
    %c0_179 = arith.constant 0 : index
    %c0_180 = arith.constant 0 : index
    %c0_181 = arith.constant 0 : index
    %229 = vector.load %arg11[%c1_178, %c0_179, %c0_180, %c0_181] : memref<2x4x1x32xf32, #tpu.memory_space<vmem>>, vector<1x4x1x32xf32>
    %230 = vector.shape_cast %229 : vector<1x4x1x32xf32> to vector<4x1x32xf32>
    %cst_182 = arith.constant dense<0.000000e+00> : vector<4x5xf32>
    %231 = vector.multi_reduction <add>, %226, %cst_182 [2] : vector<4x5x32xf32> to vector<4x5xf32>
    %232 = vector.shape_cast %231 : vector<4x5xf32> to vector<4x5x1xf32>
    %cst_183 = arith.constant 3.200000e+01 : f32
    %233 = vector.broadcast %cst_183 : f32 to vector<4x5x1xf32>
    %234 = arith.divf %232, %233 : vector<4x5x1xf32>
    %235 = vector.broadcast %234 : vector<4x5x1xf32> to vector<4x5x32xf32>
    %236 = arith.subf %226, %235 : vector<4x5x32xf32>
    %237 = arith.mulf %236, %236 : vector<4x5x32xf32>
    %cst_184 = arith.constant dense<0.000000e+00> : vector<4x5xf32>
    %238 = vector.multi_reduction <add>, %237, %cst_184 [2] : vector<4x5x32xf32> to vector<4x5xf32>
    %239 = vector.shape_cast %238 : vector<4x5xf32> to vector<4x5x1xf32>
    %cst_185 = arith.constant 3.200000e+01 : f32
    %240 = vector.broadcast %cst_185 : f32 to vector<4x5x1xf32>
    %241 = arith.divf %239, %240 : vector<4x5x1xf32>
    %242 = vector.broadcast %234 : vector<4x5x1xf32> to vector<4x5x32xf32>
    %243 = arith.subf %226, %242 : vector<4x5x32xf32>
    %cst_186 = arith.constant 9.99999974E-6 : f32
    %244 = vector.broadcast %cst_186 : f32 to vector<4x5x1xf32>
    %245 = arith.addf %241, %244 : vector<4x5x1xf32>
    %246 = math.rsqrt %245 : vector<4x5x1xf32>
    %247 = vector.broadcast %246 : vector<4x5x1xf32> to vector<4x5x32xf32>
    %248 = arith.mulf %243, %247 : vector<4x5x32xf32>
    %249 = vector.broadcast %228 : vector<4x1x32xf32> to vector<4x5x32xf32>
    %250 = arith.mulf %248, %249 : vector<4x5x32xf32>
    %251 = vector.broadcast %230 : vector<4x1x32xf32> to vector<4x5x32xf32>
    %252 = arith.addf %250, %251 : vector<4x5x32xf32>
    %c1_187 = arith.constant 1 : index
    %c0_188 = arith.constant 0 : index
    %c0_189 = arith.constant 0 : index
    %c0_190 = arith.constant 0 : index
    %253 = vector.load %arg12[%c1_187, %c0_188, %c0_189, %c0_190] : memref<2x4x32x64xf32, #tpu.memory_space<vmem>>, vector<1x4x32x64xf32>
    %254 = vector.shape_cast %253 : vector<1x4x32x64xf32> to vector<4x32x64xf32>
    "tpu.trace_start"() <{level = 10 : i32, message = "bnd,bde->bne"}> : () -> ()
    %cst_191 = arith.constant dense<0.000000e+00> : vector<4x5x64xf32>
    %255 = tpu.matmul %252, %254, %cst_191 {dimension_numbers = #tpu.dot_dimension_numbers<[2], [1], [1], [2], [0, 0, 0, 1, 1, 2], [0], [0]>} : vector<4x5x32xf32>, vector<4x32x64xf32>, vector<4x5x64xf32> -> vector<4x5x64xf32>
    "tpu.trace_stop"() : () -> ()
    %c1_192 = arith.constant 1 : index
    %c0_193 = arith.constant 0 : index
    %c0_194 = arith.constant 0 : index
    %c0_195 = arith.constant 0 : index
    %256 = vector.load %arg13[%c1_192, %c0_193, %c0_194, %c0_195] : memref<2x4x1x64xf32, #tpu.memory_space<vmem>>, vector<1x4x1x64xf32>
    %257 = vector.shape_cast %256 : vector<1x4x1x64xf32> to vector<4x1x64xf32>
    %258 = vector.broadcast %257 : vector<4x1x64xf32> to vector<4x5x64xf32>
    %259 = arith.addf %255, %258 : vector<4x5x64xf32>
    %cst_196 = arith.constant 5.000000e-01 : f32
    %260 = vector.broadcast %cst_196 : f32 to vector<4x5x64xf32>
    %261 = arith.mulf %260, %259 : vector<4x5x64xf32>
    %cst_197 = arith.constant 4.471500e-02 : f32
    %262 = vector.broadcast %cst_197 : f32 to vector<4x5x64xf32>
    %263 = arith.mulf %262, %259 : vector<4x5x64xf32>
    %264 = arith.mulf %263, %259 : vector<4x5x64xf32>
    %265 = arith.mulf %264, %259 : vector<4x5x64xf32>
    %266 = arith.addf %259, %265 : vector<4x5x64xf32>
    %cst_198 = arith.constant 0.797884583 : f32
    %267 = vector.broadcast %cst_198 : f32 to vector<4x5x64xf32>
    %268 = arith.mulf %267, %266 : vector<4x5x64xf32>
    %269 = math.tanh %268 : vector<4x5x64xf32>
    %cst_199 = arith.constant 1.000000e+00 : f32
    %270 = vector.broadcast %cst_199 : f32 to vector<4x5x64xf32>
    %271 = arith.addf %270, %269 : vector<4x5x64xf32>
    %272 = arith.mulf %261, %271 : vector<4x5x64xf32>
    %c1_200 = arith.constant 1 : index
    %c0_201 = arith.constant 0 : index
    %c0_202 = arith.constant 0 : index
    %c0_203 = arith.constant 0 : index
    %273 = vector.load %arg14[%c1_200, %c0_201, %c0_202, %c0_203] : memref<2x4x64x32xf32, #tpu.memory_space<vmem>>, vector<1x4x64x32xf32>
    %274 = vector.shape_cast %273 : vector<1x4x64x32xf32> to vector<4x64x32xf32>
    "tpu.trace_start"() <{level = 10 : i32, message = "bne,bed->bnd"}> : () -> ()
    %cst_204 = arith.constant dense<0.000000e+00> : vector<4x5x32xf32>
    %275 = tpu.matmul %272, %274, %cst_204 {dimension_numbers = #tpu.dot_dimension_numbers<[2], [1], [1], [2], [0, 0, 0, 1, 1, 2], [0], [0]>} : vector<4x5x64xf32>, vector<4x64x32xf32>, vector<4x5x32xf32> -> vector<4x5x32xf32>
    "tpu.trace_stop"() : () -> ()
    %276 = arith.addf %226, %275 : vector<4x5x32xf32>
    %c1_205 = arith.constant 1 : index
    %c0_206 = arith.constant 0 : index
    %c0_207 = arith.constant 0 : index
    %c0_208 = arith.constant 0 : index
    %277 = vector.load %arg15[%c1_205, %c0_206, %c0_207, %c0_208] : memref<2x4x1x32xf32, #tpu.memory_space<vmem>>, vector<1x4x1x32xf32>
    %278 = vector.shape_cast %277 : vector<1x4x1x32xf32> to vector<4x1x32xf32>
    %279 = vector.broadcast %278 : vector<4x1x32xf32> to vector<4x5x32xf32>
    %280 = arith.addf %276, %279 : vector<4x5x32xf32>
    %281 = vector.extract_strided_slice %280 {offsets = [0, 0, 0], sizes = [4, 1, 32], strides = [1, 1, 1]} : vector<4x5x32xf32> to vector<4x1x32xf32>
    %282 = vector.shape_cast %281 : vector<4x1x32xf32> to vector<4x32xf32>
    %283 = vector.extract_strided_slice %282 {offsets = [0, 0], sizes = [2, 32], strides = [1, 1]} : vector<4x32xf32> to vector<2x32xf32>
    %284 = vector.extract_strided_slice %282 {offsets = [2, 0], sizes = [2, 32], strides = [1, 1]} : vector<4x32xf32> to vector<2x32xf32>
    %285 = tpu.concatenate %283, %284 in 1 : vector<2x32xf32>, vector<2x32xf32> -> vector<2x64xf32>
    %c0_209 = arith.constant 0 : index
    %c0_210 = arith.constant 0 : index
    %286 = vector.load %arg20[%c0_209, %c0_210] : memref<2x64xf32, #tpu.memory_space<vmem>>, vector<2x64xf32>
    tpu.vector_store %arg20[%c0_209, %c0_210], %285 {strides = array<i32>} : memref<2x64xf32, #tpu.memory_space<vmem>>, vector<2x64xf32>,
    %cst_211 = arith.constant dense<0.000000e+00> : vector<2xf32>
    %287 = vector.multi_reduction <add>, %285, %cst_211 [1] : vector<2x64xf32> to vector<2xf32>
    %288 = vector.shape_cast %287 : vector<2xf32> to vector<2x1xf32>
    %cst_212 = arith.constant 6.400000e+01 : f32
    %289 = vector.broadcast %cst_212 : f32 to vector<2x1xf32>
    %290 = arith.divf %288, %289 : vector<2x1xf32>
    %291 = vector.broadcast %290 : vector<2x1xf32> to vector<2x64xf32>
    %292 = arith.subf %285, %291 : vector<2x64xf32>
    %293 = arith.mulf %292, %292 : vector<2x64xf32>
    %cst_213 = arith.constant dense<0.000000e+00> : vector<2xf32>
    %294 = vector.multi_reduction <add>, %293, %cst_213 [1] : vector<2x64xf32> to vector<2xf32>
    %295 = vector.shape_cast %294 : vector<2xf32> to vector<2x1xf32>
    %cst_214 = arith.constant 6.400000e+01 : f32
    %296 = vector.broadcast %cst_214 : f32 to vector<2x1xf32>
    %297 = arith.divf %295, %296 : vector<2x1xf32>
    %298 = vector.broadcast %290 : vector<2x1xf32> to vector<2x64xf32>
    %299 = arith.subf %285, %298 : vector<2x64xf32>
    %cst_215 = arith.constant 9.99999974E-6 : f32
    %300 = vector.broadcast %cst_215 : f32 to vector<2x1xf32>
    %301 = arith.addf %297, %300 : vector<2x1xf32>
    %302 = math.rsqrt %301 : vector<2x1xf32>
    %303 = vector.broadcast %302 : vector<2x1xf32> to vector<2x64xf32>
    %304 = arith.mulf %299, %303 : vector<2x64xf32>
    %c0_216 = arith.constant 0 : index
    %c0_217 = arith.constant 0 : index
    %305 = vector.load %arg16[%c0_216, %c0_217] : memref<1x64xf32, #tpu.memory_space<vmem>>, vector<1x64xf32>
    %306 = vector.broadcast %305 : vector<1x64xf32> to vector<2x64xf32>
    %307 = arith.mulf %304, %306 : vector<2x64xf32>
    %c0_218 = arith.constant 0 : index
    %c0_219 = arith.constant 0 : index
    %308 = vector.load %arg17[%c0_218, %c0_219] : memref<1x64xf32, #tpu.memory_space<vmem>>, vector<1x64xf32>
    %309 = vector.broadcast %308 : vector<1x64xf32> to vector<2x64xf32>
    %310 = arith.addf %307, %309 : vector<2x64xf32>
    %c0_220 = arith.constant 0 : index
    %c0_221 = arith.constant 0 : index
    %311 = vector.load %arg18[%c0_220, %c0_221] : memref<64x4xf32, #tpu.memory_space<vmem>>, vector<64x4xf32>
    %cst_222 = arith.constant dense<0.000000e+00> : vector<2x4xf32>
    %312 = tpu.matmul %310, %311, %cst_222 {dimension_numbers = #tpu.dot_dimension_numbers<[1], [0], [0], [1], [0, 0, 1, 1], [], []>} : vector<2x64xf32>, vector<64x4xf32>, vector<2x4xf32> -> vector<2x4xf32>
    %c0_223 = arith.constant 0 : index
    %c0_224 = arith.constant 0 : index
    %313 = vector.load %arg19[%c0_223, %c0_224] : memref<1x4xf32, #tpu.memory_space<vmem>>, vector<1x4xf32>
    %314 = vector.broadcast %313 : vector<1x4xf32> to vector<2x4xf32>
    %315 = arith.addf %312, %314 : vector<2x4xf32>
    %c0_225 = arith.constant 0 : index
    %c0_226 = arith.constant 0 : index
    %316 = vector.load %arg21[%c0_225, %c0_226] : memref<2x4xf32, #tpu.memory_space<vmem>>, vector<2x4xf32>
    tpu.vector_store %arg21[%c0_225, %c0_226], %315 {strides = array<i32>} : memref<2x4xf32, #tpu.memory_space<vmem>>, vector<2x4xf32>,
    return
  }
}

</mosaic_0001>

<llo_original>
// kernel: vit_forward.1
$region0: #{vit_forward.1}
  #allocation0 [shape = 'u32[]', space=smem, size = 0x4, offset = 0x4, fixed_abs, tag = 'smem constant byte address 0x4 - core index']
  #allocation1 [shape = 'u32[72,128]{1,0:T(1,128)}', space=vmem, size = 0x9000, scoped, tag = 'internal scratch']
  %s0 = inlined_call_operand.vmem [shape: f32[4,5,12], index: 0, kind: input, shape index: {}]
  %s1 = inlined_call_operand.vmem [shape: f32[4,12,32], index: 1, kind: input, shape index: {}]
  %s2 = inlined_call_operand.vmem [shape: f32[4,5,32], index: 2, kind: input, shape index: {}]
  %s3 = inlined_call_operand.vmem [shape: f32[2,4,1,32], index: 3, kind: input, shape index: {}]
  %s4 = inlined_call_operand.vmem [shape: f32[2,4,1,32], index: 4, kind: input, shape index: {}]
  %s5 = inlined_call_operand.vmem [shape: f32[4,4,32,16], index: 5, kind: input, shape index: {}]
  %s6 = inlined_call_operand.vmem [shape: f32[4,4,32,16], index: 6, kind: input, shape index: {}]
  %s7 = inlined_call_operand.vmem [shape: f32[4,4,32,16], index: 7, kind: input, shape index: {}]
  %s8 = inlined_call_operand.vmem [shape: f32[4,4,16,32], index: 8, kind: input, shape index: {}]
  %s9 = inlined_call_operand.vmem [shape: f32[2,4,1,32], index: 9, kind: input, shape index: {}]
  %s10 = inlined_call_operand.vmem [shape: f32[2,4,1,32], index: 10, kind: input, shape index: {}]
  %s11 = inlined_call_operand.vmem [shape: f32[2,4,1,32], index: 11, kind: input, shape index: {}]
  %s12 = inlined_call_operand.vmem [shape: f32[2,4,32,64], index: 12, kind: input, shape index: {}]
  %s13 = inlined_call_operand.vmem [shape: f32[2,4,1,64], index: 13, kind: input, shape index: {}]
  %s14 = inlined_call_operand.vmem [shape: f32[2,4,64,32], index: 14, kind: input, shape index: {}]
  %s15 = inlined_call_operand.vmem [shape: f32[2,4,1,32], index: 15, kind: input, shape index: {}]
  %s16 = inlined_call_operand.vmem [shape: f32[1,64], index: 16, kind: input, shape index: {}]
  %s17 = inlined_call_operand.vmem [shape: f32[1,64], index: 17, kind: input, shape index: {}]
  %s18 = inlined_call_operand.vmem [shape: f32[64,4], index: 18, kind: input, shape index: {}]
  %s19 = inlined_call_operand.vmem [shape: f32[1,4], index: 19, kind: input, shape index: {}]
  %s20 = inlined_call_operand.hbm [shape: f32[2,64], index: 20, kind: output, shape index: {0}]
  %s21 = inlined_call_operand.hbm [shape: f32[2,4], index: 21, kind: output, shape index: {1}]
  %22 = xla_tuple %s20, %s21
  %s23 = sld [smem:[#allocation0]]
  $region98: #{vit_forward.1} parent=0
    _
  %s25 = ssub.s32 1, %s23
  %s26 = scalar_select 0, %s25, %s23
  $region1: #{vit_forward.1} parent=0
    #allocation2 [shape = 'u8[1024]{0}', space=vmem, size = 0x400, scoped, tag = 'output window, operand 0, single buffered']
    #allocation3 [shape = 's32[1]{0}', space=sflag, size = 0x4, scoped, tag = 'scoped memory for vit_forward.1']
    #allocation4 [shape = 'u8[1024]{0}', space=vmem, size = 0x400, scoped, tag = 'output window, operand 1, single buffered']
    #allocation5 [shape = 's32[1]{0}', space=sflag, size = 0x4, scoped, tag = 'scoped memory for vit_forward.1']
    %27 = vsyncpa [#allocation3], 0
    %28 = vsyncpa [#allocation5], 0
    // Predicated region
    $region2: #{vit_forward.1} parent=1 // pred_check
      _
    $region3: #{vit_forward.1} parent=1 // pred_check_branch
      %30 = sbr.rel (0) target = $region5
    $region4: #{vit_forward.1} parent=1 // pred_region
      _
    $region5: #{vit_forward.1} parent=1 // pred_fallthru
      _
    // Predicated region
    $region6: #{vit_forward.1} parent=1 // pred_check
      _
    $region7: #{vit_forward.1} parent=1 // pred_check_branch
      %32 = sbr.rel (0) target = $region9
    $region8: #{vit_forward.1} parent=1 // pred_region
      _
    $region9: #{vit_forward.1} parent=1 // pred_fallthru
      _
    // Predicated region
    $region10: #{vit_forward.1} parent=1 // pred_check
      _
    $region11: #{vit_forward.1} parent=1 // pred_check_branch
      %34 = sbr.rel (0) target = $region13
    $region12: #{vit_forward.1} parent=1 // pred_region
      _
    $region13: #{vit_forward.1} parent=1 // pred_fallthru
      _
    // Predicated region
    $region14: #{vit_forward.1} parent=1 // pred_check
      _
    $region15: #{vit_forward.1} parent=1 // pred_check_branch
      %36 = sbr.rel (0) target = $region17
    $region16: #{vit_forward.1} parent=1 // pred_region
      _
    $region17: #{vit_forward.1} parent=1 // pred_fallthru
      _
    // Predicated region
    $region18: #{vit_forward.1} parent=1 // pred_check
      _
    $region19: #{vit_forward.1} parent=1 // pred_check_branch
      %38 = sbr.rel (0) target = $region21
    $region20: #{vit_forward.1} parent=1 // pred_region
      _
    $region21: #{vit_forward.1} parent=1 // pred_fallthru
      _
    // Predicated region
    $region22: #{vit_forward.1} parent=1 // pred_check
      _
    $region23: #{vit_forward.1} parent=1 // pred_check_branch
      %40 = sbr.rel (0) target = $region25
    $region24: #{vit_forward.1} parent=1 // pred_region
      _
    $region25: #{vit_forward.1} parent=1 // pred_fallthru
      _
    // Predicated region
    $region26: #{vit_forward.1} parent=1 // pred_check
      _
    $region27: #{vit_forward.1} parent=1 // pred_check_branch
      %42 = sbr.rel (0) target = $region29
    $region28: #{vit_forward.1} parent=1 // pred_region
      _
    $region29: #{vit_forward.1} parent=1 // pred_fallthru
      _
    // Predicated region
    $region30: #{vit_forward.1} parent=1 // pred_check
      _
    $region31: #{vit_forward.1} parent=1 // pred_check_branch
      %44 = sbr.rel (0) target = $region33
    $region32: #{vit_forward.1} parent=1 // pred_region
      _
    $region33: #{vit_forward.1} parent=1 // pred_fallthru
      _
    // Predicated region
    $region34: #{vit_forward.1} parent=1 // pred_check
      _
    $region35: #{vit_forward.1} parent=1 // pred_check_branch
      %46 = sbr.rel (0) target = $region37
    $region36: #{vit_forward.1} parent=1 // pred_region
      _
    $region37: #{vit_forward.1} parent=1 // pred_fallthru
      _
    // Predicated region
    $region38: #{vit_forward.1} parent=1 // pred_check
      _
    $region39: #{vit_forward.1} parent=1 // pred_check_branch
      %48 = sbr.rel (0) target = $region41
    $region40: #{vit_forward.1} parent=1 // pred_region
      _
    $region41: #{vit_forward.1} parent=1 // pred_fallthru
      _
    // Predicated region
    $region42: #{vit_forward.1} parent=1 // pred_check
      _
    $region43: #{vit_forward.1} parent=1 // pred_check_branch
      %50 = sbr.rel (0) target = $region45
    $region44: #{vit_forward.1} parent=1 // pred_region
      _
    $region45: #{vit_forward.1} parent=1 // pred_fallthru
      _
    // Predicated region
    $region46: #{vit_forward.1} parent=1 // pred_check
      _
    $region47: #{vit_forward.1} parent=1 // pred_check_branch
      %52 = sbr.rel (0) target = $region49
    $region48: #{vit_forward.1} parent=1 // pred_region
      _
    $region49: #{vit_forward.1} parent=1 // pred_fallthru
      _
    // Predicated region
    $region50: #{vit_forward.1} parent=1 // pred_check
      _
    $region51: #{vit_forward.1} parent=1 // pred_check_branch
      %54 = sbr.rel (0) target = $region53
    $region52: #{vit_forward.1} parent=1 // pred_region
      _
    $region53: #{vit_forward.1} parent=1 // pred_fallthru
      _
    // Predicated region
    $region54: #{vit_forward.1} parent=1 // pred_check
      _
    $region55: #{vit_forward.1} parent=1 // pred_check_branch
      %56 = sbr.rel (0) target = $region57
    $region56: #{vit_forward.1} parent=1 // pred_region
      _
    $region57: #{vit_forward.1} parent=1 // pred_fallthru
      _
    // Predicated region
    $region58: #{vit_forward.1} parent=1 // pred_check
      _
    $region59: #{vit_forward.1} parent=1 // pred_check_branch
      %58 = sbr.rel (0) target = $region61
    $region60: #{vit_forward.1} parent=1 // pred_region
      _
    $region61: #{vit_forward.1} parent=1 // pred_fallthru
      _
    // Predicated region
    $region62: #{vit_forward.1} parent=1 // pred_check
      _
    $region63: #{vit_forward.1} parent=1 // pred_check_branch
      %60 = sbr.rel (0) target = $region65
    $region64: #{vit_forward.1} parent=1 // pred_region
      _
    $region65: #{vit_forward.1} parent=1 // pred_fallthru
      _
    // Predicated region
    $region66: #{vit_forward.1} parent=1 // pred_check
      _
    $region67: #{vit_forward.1} parent=1 // pred_check_branch
      %62 = sbr.rel (0) target = $region69
    $region68: #{vit_forward.1} parent=1 // pred_region
      _
    $region69: #{vit_forward.1} parent=1 // pred_fallthru
      _
    // Predicated region
    $region70: #{vit_forward.1} parent=1 // pred_check
      _
    $region71: #{vit_forward.1} parent=1 // pred_check_branch
      %64 = sbr.rel (0) target = $region73
    $region72: #{vit_forward.1} parent=1 // pred_region
      _
    $region73: #{vit_forward.1} parent=1 // pred_fallthru
      _
    // Predicated region
    $region74: #{vit_forward.1} parent=1 // pred_check
      _
    $region75: #{vit_forward.1} parent=1 // pred_check_branch
      %66 = sbr.rel (0) target = $region77
    $region76: #{vit_forward.1} parent=1 // pred_region
      _
    $region77: #{vit_forward.1} parent=1 // pred_fallthru
      _
    // Predicated region
    $region78: #{vit_forward.1} parent=1 // pred_check
      _
    $region79: #{vit_forward.1} parent=1 // pred_check_branch
      %68 = sbr.rel (0) target = $region81
    $region80: #{vit_forward.1} parent=1 // pred_region
      _
    $region81: #{vit_forward.1} parent=1 // pred_fallthru
      _
    %v69 = vld [vmem:[%s0] sm:$0x1f]
    %v70 = vld [vmem:[%s0 + $0x8] sm:$0x1f]
    %v71 = vld [vmem:[%s0 + $0x10] sm:$0x1f]
    %v72 = vld [vmem:[%s0 + $0x18] sm:$0x1f]
    %v73 = vld [vmem:[%s1] sm:$0xff]
    %v74 = vld [vmem:[%s1 + $0x8] sm:$0xf]
    %v75 = vld [vmem:[%s1 + $0x10] sm:$0xff]
    %v76 = vld [vmem:[%s1 + $0x18] sm:$0xf]
    %v77 = vld [vmem:[%s1 + $0x20] sm:$0xff]
    %v78 = vld [vmem:[%s1 + $0x28] sm:$0xf]
    %v79 = vld [vmem:[%s1 + $0x30] sm:$0xff]
    %v80 = vld [vmem:[%s1 + $0x38] sm:$0xf]
    %v81 = vld [vmem:[%s2] sm:$0x1f]
    %v82 = vld [vmem:[%s2 + $0x8] sm:$0x1f]
    %v83 = vld [vmem:[%s2 + $0x10] sm:$0x1f]
    %v84 = vld [vmem:[%s2 + $0x18] sm:$0x1f]
    %vm85 = vcmask 97280
    %v87 = vsel %vm85, %v69, 0
    %vm89 = vcmask 1043456
    %v91 = vsel %vm89, %v74, 0
    %93 = vmatpush.msra.mxu0 0.0
    %94 = vmatpush.msra.mxu0 0.0
    %95 = vmatpush.msra.mxu0 0.0
    %96 = vmatpush.msra.mxu0 0.0
    %97 = vmatpush.msra.mxu0 0.0
    %98 = vmatpush.msra.mxu0 0.0
    %99 = vmatpush.msra.mxu0 0.0
    %100 = vmatpush.msra.mxu0 0.0
    %101 = vmatpush.msra.mxu0 0.0
    %102 = vmatpush.msra.mxu0 0.0
    %103 = vmatpush.msra.mxu0 0.0
    %104 = vmatpush.msra.mxu0 0.0
    %105 = vmatpush.msra.mxu0 0.0
    %106 = vmatpush.msra.mxu0 0.0
    %107 = vmatpush.msra.mxu0 %v91
    %108 = vmatpush.msra.mxu0 %v73
    %109 = vmatmul.f32.gmra.mxu0 %v87
    %v110 = vpop.f32.mrf.mxu0
    %v111 = vadd.f32 %v81, %v110
    %112 = vdwg.mxu0
    %v114 = vsel %vm85, %v70, 0
    %v117 = vsel %vm89, %v76, 0
    %119 = vmatpush.msra.mxu0 0.0
    %120 = vmatpush.msra.mxu0 0.0
    %121 = vmatpush.msra.mxu0 0.0
    %122 = vmatpush.msra.mxu0 0.0
    %123 = vmatpush.msra.mxu0 0.0
    %124 = vmatpush.msra.mxu0 0.0
    %125 = vmatpush.msra.mxu0 0.0
    %126 = vmatpush.msra.mxu0 0.0
    %127 = vmatpush.msra.mxu0 0.0
    %128 = vmatpush.msra.mxu0 0.0
    %129 = vmatpush.msra.mxu0 0.0
    %130 = vmatpush.msra.mxu0 0.0
    %131 = vmatpush.msra.mxu0 0.0
    %132 = vmatpush.msra.mxu0 0.0
    %133 = vmatpush.msra.mxu0 %v117
    %134 = vmatpush.msra.mxu0 %v75
    %135 = vmatmul.f32.gmra.mxu0 %v114
    %v136 = vpop.f32.mrf.mxu0
    %v137 = vadd.f32 %v82, %v136
    %138 = vdwg.mxu0
    %v140 = vsel %vm85, %v71, 0
    %v143 = vsel %vm89, %v78, 0
    %145 = vmatpush.msra.mxu0 0.0
    %146 = vmatpush.msra.mxu0 0.0
    %147 = vmatpush.msra.mxu0 0.0
    %148 = vmatpush.msra.mxu0 0.0
    %149 = vmatpush.msra.mxu0 0.0
    %150 = vmatpush.msra.mxu0 0.0
    %151 = vmatpush.msra.mxu0 0.0
    %152 = vmatpush.msra.mxu0 0.0
    %153 = vmatpush.msra.mxu0 0.0
    %154 = vmatpush.msra.mxu0 0.0
    %155 = vmatpush.msra.mxu0 0.0
    %156 = vmatpush.msra.mxu0 0.0
    %157 = vmatpush.msra.mxu0 0.0
    %158 = vmatpush.msra.mxu0 0.0
    %159 = vmatpush.msra.mxu0 %v143
    %160 = vmatpush.msra.mxu0 %v77
    %161 = vmatmul.f32.gmra.mxu0 %v140
    %v162 = vpop.f32.mrf.mxu0
    %v163 = vadd.f32 %v83, %v162
    %164 = vdwg.mxu0
    %v166 = vsel %vm85, %v72, 0
    %v169 = vsel %vm89, %v80, 0
    %171 = vmatpush.msra.mxu0 0.0
    %172 = vmatpush.msra.mxu0 0.0
    %173 = vmatpush.msra.mxu0 0.0
    %174 = vmatpush.msra.mxu0 0.0
    %175 = vmatpush.msra.mxu0 0.0
    %176 = vmatpush.msra.mxu0 0.0
    %177 = vmatpush.msra.mxu0 0.0
    %178 = vmatpush.msra.mxu0 0.0
    %179 = vmatpush.msra.mxu0 0.0
    %180 = vmatpush.msra.mxu0 0.0
    %181 = vmatpush.msra.mxu0 0.0
    %182 = vmatpush.msra.mxu0 0.0
    %183 = vmatpush.msra.mxu0 0.0
    %184 = vmatpush.msra.mxu0 0.0
    %185 = vmatpush.msra.mxu0 %v169
    %186 = vmatpush.msra.mxu0 %v79
    %187 = vmatmul.f32.gmra.mxu0 %v166
    %v188 = vpop.f32.mrf.mxu0
    %v189 = vadd.f32 %v84, %v188
    %190 = vdwg.mxu0
    %v191 = vld [vmem:[%s3] sm:$0x1]
    %v192 = vld [vmem:[%s3 + $0x1] sm:$0x1]
    %v193 = vld [vmem:[%s3 + $0x2] sm:$0x1]
    %v194 = vld [vmem:[%s3 + $0x3] sm:$0x1]
    %v195 = vld [vmem:[%s4] sm:$0x1]
    %v196 = vld [vmem:[%s4 + $0x1] sm:$0x1]
    %v197 = vld [vmem:[%s4 + $0x2] sm:$0x1]
    %v198 = vld [vmem:[%s4 + $0x3] sm:$0x1]
    %vm199 = vcmask 258048
    %v200 = vsel %vm199, %v111, 0.0
    %201 = vadd.xlane.f32.xlu0 %v200
    %v202 = vpop.xlane.xlu0 %201
    %v203 = vsel %vm199, %v137, 0.0
    %204 = vadd.xlane.f32.xlu0 %v203
    %v205 = vpop.xlane.xlu0 %204
    %v206 = vsel %vm199, %v163, 0.0
    %207 = vadd.xlane.f32.xlu0 %v206
    %v208 = vpop.xlane.xlu0 %207
    %v209 = vsel %vm199, %v189, 0.0
    %210 = vadd.xlane.f32.xlu0 %v209
    %v211 = vpop.xlane.xlu0 %210
    %v212 = vrcp.pop 32.0
    %v213 = vmul.f32 32.0, %v212
    %v214 = vsub.f32 1.0, %v213
    %v215 = vmul.f32 %v212, %v214
    %v216 = vadd.f32 %v212, %v215
    %vm217 = vweird.f32 %v212
    %v218 = vsel %vm217, %v212, %v216
    %v219 = vmul.f32 %v202, %v218
    %v220 = vmul.f32 %v205, %v218
    %v221 = vmul.f32 %v208, %v218
    %v222 = vmul.f32 %v211, %v218
    %v223 = vsub.f32 %v111, %v219
    %v224 = vsub.f32 %v137, %v220
    %v225 = vsub.f32 %v163, %v221
    %v226 = vsub.f32 %v189, %v222
    %v227 = vmul.f32 %v223, %v223
    %v228 = vmul.f32 %v224, %v224
    %v229 = vmul.f32 %v225, %v225
    %v230 = vmul.f32 %v226, %v226
    %v231 = vsel %vm199, %v227, 0.0
    %232 = vadd.xlane.f32.xlu0 %v231
    %v233 = vpop.xlane.xlu0 %232
    %v234 = vsel %vm199, %v228, 0.0
    %235 = vadd.xlane.f32.xlu0 %v234
    %v236 = vpop.xlane.xlu0 %235
    %v237 = vsel %vm199, %v229, 0.0
    %238 = vadd.xlane.f32.xlu0 %v237
    %v239 = vpop.xlane.xlu0 %238
    %v240 = vsel %vm199, %v230, 0.0
    %241 = vadd.xlane.f32.xlu0 %v240
    %v242 = vpop.xlane.xlu0 %241
    %v243 = vmul.f32 %v233, %v218
    %v244 = vmul.f32 %v236, %v218
    %v245 = vmul.f32 %v239, %v218
    %v246 = vmul.f32 %v242, %v218
    %v247 = vadd.f32 %v243, 1e-05
    %v248 = vadd.f32 %v244, 1e-05
    %v249 = vadd.f32 %v245, 1e-05
    %v250 = vadd.f32 %v246, 1e-05
    %v251 = vrsqrt.pop %v247
    %v252 = vmul.f32 %v251, %v247
    %v253 = vmul.f32 %v252, %v251
    %v254 = vmul.f32 0.5, %v253
    %v255 = vsub.f32 1.5, %v254
    %v256 = vmul.f32 %v251, %v255
    %vm257 = vweird.f32 %v247
    %vm258 = vweird.f32 %v251
    %vm259 = vmor %vm257, %vm258
    %v260 = vsel %vm259, %v251, %v256
    %v261 = vrsqrt.pop %v248
    %v262 = vmul.f32 %v261, %v248
    %v263 = vmul.f32 %v262, %v261
    %v264 = vmul.f32 0.5, %v263
    %v265 = vsub.f32 1.5, %v264
    %v266 = vmul.f32 %v261, %v265
    %vm267 = vweird.f32 %v248
    %vm268 = vweird.f32 %v261
    %vm269 = vmor %vm267, %vm268
    %v270 = vsel %vm269, %v261, %v266
    %v271 = vrsqrt.pop %v249
    %v272 = vmul.f32 %v271, %v249
    %v273 = vmul.f32 %v272, %v271
    %v274 = vmul.f32 0.5, %v273
    %v275 = vsub.f32 1.5, %v274
    %v276 = vmul.f32 %v271, %v275
    %vm277 = vweird.f32 %v249
    %vm278 = vweird.f32 %v271
    %vm279 = vmor %vm277, %vm278
    %v280 = vsel %vm279, %v271, %v276
    %v281 = vrsqrt.pop %v250
    %v282 = vmul.f32 %v281, %v250
    %v283 = vmul.f32 %v282, %v281
    %v284 = vmul.f32 0.5, %v283
    %v285 = vsub.f32 1.5, %v284
    %v286 = vmul.f32 %v281, %v285
    %vm287 = vweird.f32 %v250
    %vm288 = vweird.f32 %v281
    %vm289 = vmor %vm287, %vm288
    %v290 = vsel %vm289, %v281, %v286
    %v291 = vmul.f32 %v223, %v260
    %v292 = vmul.f32 %v224, %v270
    %v293 = vmul.f32 %v225, %v280
    %v294 = vmul.f32 %v226, %v290
    %v299 = vperm.slane %v191, 0
    %v300 = vperm.slane %v192, 0
    %v301 = vperm.slane %v193, 0
    %v302 = vperm.slane %v194, 0
    %v307 = vmul.f32 %v291, %v299
    %v308 = vmul.f32 %v292, %v300
    %v309 = vmul.f32 %v293, %v301
    %v310 = vmul.f32 %v294, %v302
    %v315 = vperm.slane %v195, 0
    %v316 = vperm.slane %v196, 0
    %v317 = vperm.slane %v197, 0
    %v318 = vperm.slane %v198, 0
    %v323 = vadd.f32 %v307, %v315
    %v324 = vadd.f32 %v308, %v316
    %v325 = vadd.f32 %v309, %v317
    %v326 = vadd.f32 %v310, %v318
    %v327 = vld [vmem:[%s5] sm:$0xff]
    %v328 = vld [vmem:[%s5 + $0x8] sm:$0xff]
    %v329 = vld [vmem:[%s5 + $0x10] sm:$0xff]
    %v330 = vld [vmem:[%s5 + $0x18] sm:$0xff]
    %v331 = vld [vmem:[%s5 + $0x20] sm:$0xff]
    %v332 = vld [vmem:[%s5 + $0x28] sm:$0xff]
    %v333 = vld [vmem:[%s5 + $0x30] sm:$0xff]
    %v334 = vld [vmem:[%s5 + $0x38] sm:$0xff]
    %v335 = vld [vmem:[%s5 + $0x40] sm:$0xff]
    %v336 = vld [vmem:[%s5 + $0x48] sm:$0xff]
    %v337 = vld [vmem:[%s5 + $0x50] sm:$0xff]
    %v338 = vld [vmem:[%s5 + $0x58] sm:$0xff]
    %v339 = vld [vmem:[%s5 + $0x60] sm:$0xff]
    %v340 = vld [vmem:[%s5 + $0x68] sm:$0xff]
    %v341 = vld [vmem:[%s5 + $0x70] sm:$0xff]
    %v342 = vld [vmem:[%s5 + $0x78] sm:$0xff]
    %vm343 = vcmask 261120
    %v345 = vsel %vm343, %v323, 0
    %347 = vmatpush.msra.mxu0 0.0
    %348 = vmatpush.msra.mxu0 0.0
    %349 = vmatpush.msra.mxu0 0.0
    %350 = vmatpush.msra.mxu0 0.0
    %351 = vmatpush.msra.mxu0 0.0
    %352 = vmatpush.msra.mxu0 0.0
    %353 = vmatpush.msra.mxu0 0.0
    %354 = vmatpush.msra.mxu0 0.0
    %355 = vmatpush.msra.mxu0 0.0
    %356 = vmatpush.msra.mxu0 0.0
    %357 = vmatpush.msra.mxu0 0.0
    %358 = vmatpush.msra.mxu0 0.0
    %359 = vmatpush.msra.mxu0 %v330
    %360 = vmatpush.msra.mxu0 %v329
    %361 = vmatpush.msra.mxu0 %v328
    %362 = vmatpush.msra.mxu0 %v327
    %363 = vmatmul.f32.gmra.mxu0 %v345
    %v364 = vpop.f32.mrf.mxu0
    %v365 = vadd.f32 0.0, %v364
    %366 = vdwg.mxu0
    %v368 = vsel %vm343, %v324, 0
    %370 = vmatpush.msra.mxu0 0.0
    %371 = vmatpush.msra.mxu0 0.0
    %372 = vmatpush.msra.mxu0 0.0
    %373 = vmatpush.msra.mxu0 0.0
    %374 = vmatpush.msra.mxu0 0.0
    %375 = vmatpush.msra.mxu0 0.0
    %376 = vmatpush.msra.mxu0 0.0
    %377 = vmatpush.msra.mxu0 0.0
    %378 = vmatpush.msra.mxu0 0.0
    %379 = vmatpush.msra.mxu0 0.0
    %380 = vmatpush.msra.mxu0 0.0
    %381 = vmatpush.msra.mxu0 0.0
    %382 = vmatpush.msra.mxu0 %v334
    %383 = vmatpush.msra.mxu0 %v333
    %384 = vmatpush.msra.mxu0 %v332
    %385 = vmatpush.msra.mxu0 %v331
    %386 = vmatmul.f32.gmra.mxu0 %v368
    %v387 = vpop.f32.mrf.mxu0
    %v388 = vadd.f32 0.0, %v387
    %389 = vdwg.mxu0
    %v391 = vsel %vm343, %v325, 0
    %393 = vmatpush.msra.mxu0 0.0
    %394 = vmatpush.msra.mxu0 0.0
    %395 = vmatpush.msra.mxu0 0.0
    %396 = vmatpush.msra.mxu0 0.0
    %397 = vmatpush.msra.mxu0 0.0
    %398 = vmatpush.msra.mxu0 0.0
    %399 = vmatpush.msra.mxu0 0.0
    %400 = vmatpush.msra.mxu0 0.0
    %401 = vmatpush.msra.mxu0 0.0
    %402 = vmatpush.msra.mxu0 0.0
    %403 = vmatpush.msra.mxu0 0.0
    %404 = vmatpush.msra.mxu0 0.0
    %405 = vmatpush.msra.mxu0 %v338
    %406 = vmatpush.msra.mxu0 %v337
    %407 = vmatpush.msra.mxu0 %v336
    %408 = vmatpush.msra.mxu0 %v335
    %409 = vmatmul.f32.gmra.mxu0 %v391
    %v410 = vpop.f32.mrf.mxu0
    %v411 = vadd.f32 0.0, %v410
    %412 = vdwg.mxu0
    %v414 = vsel %vm343, %v326, 0
    %416 = vmatpush.msra.mxu0 0.0
    %417 = vmatpush.msra.mxu0 0.0
    %418 = vmatpush.msra.mxu0 0.0
    %419 = vmatpush.msra.mxu0 0.0
    %420 = vmatpush.msra.mxu0 0.0
    %421 = vmatpush.msra.mxu0 0.0
    %422 = vmatpush.msra.mxu0 0.0
    %423 = vmatpush.msra.mxu0 0.0
    %424 = vmatpush.msra.mxu0 0.0
    %425 = vmatpush.msra.mxu0 0.0
    %426 = vmatpush.msra.mxu0 0.0
    %427 = vmatpush.msra.mxu0 0.0
    %428 = vmatpush.msra.mxu0 %v342
    %429 = vmatpush.msra.mxu0 %v341
    %430 = vmatpush.msra.mxu0 %v340
    %431 = vmatpush.msra.mxu0 %v339
    %432 = vmatmul.f32.gmra.mxu0 %v414
    %v433 = vpop.f32.mrf.mxu0
    %v434 = vadd.f32 0.0, %v433
    %435 = vdwg.mxu0
    %v436 = vld [vmem:[%s6] sm:$0xff]
    %v437 = vld [vmem:[%s6 + $0x8] sm:$0xff]
    %v438 = vld [vmem:[%s6 + $0x10] sm:$0xff]
    %v439 = vld [vmem:[%s6 + $0x18] sm:$0xff]
    %v440 = vld [vmem:[%s6 + $0x20] sm:$0xff]
    %v441 = vld [vmem:[%s6 + $0x28] sm:$0xff]
    %v442 = vld [vmem:[%s6 + $0x30] sm:$0xff]
    %v443 = vld [vmem:[%s6 + $0x38] sm:$0xff]
    %v444 = vld [vmem:[%s6 + $0x40] sm:$0xff]
    %v445 = vld [vmem:[%s6 + $0x48] sm:$0xff]
    %v446 = vld [vmem:[%s6 + $0x50] sm:$0xff]
    %v447 = vld [vmem:[%s6 + $0x58] sm:$0xff]
    %v448 = vld [vmem:[%s6 + $0x60] sm:$0xff]
    %v449 = vld [vmem:[%s6 + $0x68] sm:$0xff]
    %v450 = vld [vmem:[%s6 + $0x70] sm:$0xff]
    %v451 = vld [vmem:[%s6 + $0x78] sm:$0xff]
    %452 = vmatpush.msra.mxu0 0.0
    %453 = vmatpush.msra.mxu0 0.0
    %454 = vmatpush.msra.mxu0 0.0
    %455 = vmatpush.msra.mxu0 0.0
    %456 = vmatpush.msra.mxu0 0.0
    %457 = vmatpush.msra.mxu0 0.0
    %458 = vmatpush.msra.mxu0 0.0
    %459 = vmatpush.msra.mxu0 0.0
    %460 = vmatpush.msra.mxu0 0.0
    %461 = vmatpush.msra.mxu0 0.0
    %462 = vmatpush.msra.mxu0 0.0
    %463 = vmatpush.msra.mxu0 0.0
    %464 = vmatpush.msra.mxu0 %v439
    %465 = vmatpush.msra.mxu0 %v438
    %466 = vmatpush.msra.mxu0 %v437
    %467 = vmatpush.msra.mxu0 %v436
    %468 = vmatmul.f32.gmra.mxu0 %v345
    %v469 = vpop.f32.mrf.mxu0
    %v470 = vadd.f32 0.0, %v469
    %471 = vdwg.mxu0
    %472 = vmatpush.msra.mxu0 0.0
    %473 = vmatpush.msra.mxu0 0.0
    %474 = vmatpush.msra.mxu0 0.0
    %475 = vmatpush.msra.mxu0 0.0
    %476 = vmatpush.msra.mxu0 0.0
    %477 = vmatpush.msra.mxu0 0.0
    %478 = vmatpush.msra.mxu0 0.0
    %479 = vmatpush.msra.mxu0 0.0
    %480 = vmatpush.msra.mxu0 0.0
    %481 = vmatpush.msra.mxu0 0.0
    %482 = vmatpush.msra.mxu0 0.0
    %483 = vmatpush.msra.mxu0 0.0
    %484 = vmatpush.msra.mxu0 %v443
    %485 = vmatpush.msra.mxu0 %v442
    %486 = vmatpush.msra.mxu0 %v441
    %487 = vmatpush.msra.mxu0 %v440
    %488 = vmatmul.f32.gmra.mxu0 %v368
    %v489 = vpop.f32.mrf.mxu0
    %v490 = vadd.f32 0.0, %v489
    %491 = vdwg.mxu0
    %492 = vmatpush.msra.mxu0 0.0
    %493 = vmatpush.msra.mxu0 0.0
    %494 = vmatpush.msra.mxu0 0.0
    %495 = vmatpush.msra.mxu0 0.0
    %496 = vmatpush.msra.mxu0 0.0
    %497 = vmatpush.msra.mxu0 0.0
    %498 = vmatpush.msra.mxu0 0.0
    %499 = vmatpush.msra.mxu0 0.0
    %500 = vmatpush.msra.mxu0 0.0
    %501 = vmatpush.msra.mxu0 0.0
    %502 = vmatpush.msra.mxu0 0.0
    %503 = vmatpush.msra.mxu0 0.0
    %504 = vmatpush.msra.mxu0 %v447
    %505 = vmatpush.msra.mxu0 %v446
    %506 = vmatpush.msra.mxu0 %v445
    %507 = vmatpush.msra.mxu0 %v444
    %508 = vmatmul.f32.gmra.mxu0 %v391
    %v509 = vpop.f32.mrf.mxu0
    %v510 = vadd.f32 0.0, %v509
    %511 = vdwg.mxu0
    %512 = vmatpush.msra.mxu0 0.0
    %513 = vmatpush.msra.mxu0 0.0
    %514 = vmatpush.msra.mxu0 0.0
    %515 = vmatpush.msra.mxu0 0.0
    %516 = vmatpush.msra.mxu0 0.0
    %517 = vmatpush.msra.mxu0 0.0
    %518 = vmatpush.msra.mxu0 0.0
    %519 = vmatpush.msra.mxu0 0.0
    %520 = vmatpush.msra.mxu0 0.0
    %521 = vmatpush.msra.mxu0 0.0
    %522 = vmatpush.msra.mxu0 0.0
    %523 = vmatpush.msra.mxu0 0.0
    %524 = vmatpush.msra.mxu0 %v451
    %525 = vmatpush.msra.mxu0 %v450
    %526 = vmatpush.msra.mxu0 %v449
    %527 = vmatpush.msra.mxu0 %v448
    %528 = vmatmul.f32.gmra.mxu0 %v414
    %v529 = vpop.f32.mrf.mxu0
    %v530 = vadd.f32 0.0, %v529
    %531 = vdwg.mxu0
    %v532 = vld [vmem:[%s7] sm:$0xff]
    %v533 = vld [vmem:[%s7 + $0x8] sm:$0xff]
    %v534 = vld [vmem:[%s7 + $0x10] sm:$0xff]
    %v535 = vld [vmem:[%s7 + $0x18] sm:$0xff]
    %v536 = vld [vmem:[%s7 + $0x20] sm:$0xff]
    %v537 = vld [vmem:[%s7 + $0x28] sm:$0xff]
    %v538 = vld [vmem:[%s7 + $0x30] sm:$0xff]
    %v539 = vld [vmem:[%s7 + $0x38] sm:$0xff]
    %v540 = vld [vmem:[%s7 + $0x40] sm:$0xff]
    %v541 = vld [vmem:[%s7 + $0x48] sm:$0xff]
    %v542 = vld [vmem:[%s7 + $0x50] sm:$0xff]
    %v543 = vld [vmem:[%s7 + $0x58] sm:$0xff]
    %v544 = vld [vmem:[%s7 + $0x60] sm:$0xff]
    %v545 = vld [vmem:[%s7 + $0x68] sm:$0xff]
    %v546 = vld [vmem:[%s7 + $0x70] sm:$0xff]
    %v547 = vld [vmem:[%s7 + $0x78] sm:$0xff]
    %548 = vmatpush.msra.mxu0 0.0
    %549 = vmatpush.msra.mxu0 0.0
    %550 = vmatpush.msra.mxu0 0.0
    %551 = vmatpush.msra.mxu0 0.0
    %552 = vmatpush.msra.mxu0 0.0
    %553 = vmatpush.msra.mxu0 0.0
    %554 = vmatpush.msra.mxu0 0.0
    %555 = vmatpush.msra.mxu0 0.0
    %556 = vmatpush.msra.mxu0 0.0
    %557 = vmatpush.msra.mxu0 0.0
    %558 = vmatpush.msra.mxu0 0.0
    %559 = vmatpush.msra.mxu0 0.0
    %560 = vmatpush.msra.mxu0 %v535
    %561 = vmatpush.msra.mxu0 %v534
    %562 = vmatpush.msra.mxu0 %v533
    %563 = vmatpush.msra.mxu0 %v532
    %564 = vmatmul.f32.gmra.mxu0 %v345
    %v565 = vpop.f32.mrf.mxu0
    %v566 = vadd.f32 0.0, %v565
    %567 = vdwg.mxu0
    %568 = vmatpush.msra.mxu0 0.0
    %569 = vmatpush.msra.mxu0 0.0
    %570 = vmatpush.msra.mxu0 0.0
    %571 = vmatpush.msra.mxu0 0.0
    %572 = vmatpush.msra.mxu0 0.0
    %573 = vmatpush.msra.mxu0 0.0
    %574 = vmatpush.msra.mxu0 0.0
    %575 = vmatpush.msra.mxu0 0.0
    %576 = vmatpush.msra.mxu0 0.0
    %577 = vmatpush.msra.mxu0 0.0
    %578 = vmatpush.msra.mxu0 0.0
    %579 = vmatpush.msra.mxu0 0.0
    %580 = vmatpush.msra.mxu0 %v539
    %581 = vmatpush.msra.mxu0 %v538
    %582 = vmatpush.msra.mxu0 %v537
    %583 = vmatpush.msra.mxu0 %v536
    %584 = vmatmul.f32.gmra.mxu0 %v368
    %v585 = vpop.f32.mrf.mxu0
    %v586 = vadd.f32 0.0, %v585
    %587 = vdwg.mxu0
    %588 = vmatpush.msra.mxu0 0.0
    %589 = vmatpush.msra.mxu0 0.0
    %590 = vmatpush.msra.mxu0 0.0
    %591 = vmatpush.msra.mxu0 0.0
    %592 = vmatpush.msra.mxu0 0.0
    %593 = vmatpush.msra.mxu0 0.0
    %594 = vmatpush.msra.mxu0 0.0
    %595 = vmatpush.msra.mxu0 0.0
    %596 = vmatpush.msra.mxu0 0.0
    %597 = vmatpush.msra.mxu0 0.0
    %598 = vmatpush.msra.mxu0 0.0
    %599 = vmatpush.msra.mxu0 0.0
    %600 = vmatpush.msra.mxu0 %v543
    %601 = vmatpush.msra.mxu0 %v542
    %602 = vmatpush.msra.mxu0 %v541
    %603 = vmatpush.msra.mxu0 %v540
    %604 = vmatmul.f32.gmra.mxu0 %v391
    %v605 = vpop.f32.mrf.mxu0
    %v606 = vadd.f32 0.0, %v605
    %607 = vdwg.mxu0
    %608 = vmatpush.msra.mxu0 0.0
    %609 = vmatpush.msra.mxu0 0.0
    %610 = vmatpush.msra.mxu0 0.0
    %611 = vmatpush.msra.mxu0 0.0
    %612 = vmatpush.msra.mxu0 0.0
    %613 = vmatpush.msra.mxu0 0.0
    %614 = vmatpush.msra.mxu0 0.0
    %615 = vmatpush.msra.mxu0 0.0
    %616 = vmatpush.msra.mxu0 0.0
    %617 = vmatpush.msra.mxu0 0.0
    %618 = vmatpush.msra.mxu0 0.0
    %619 = vmatpush.msra.mxu0 0.0
    %620 = vmatpush.msra.mxu0 %v547
    %621 = vmatpush.msra.mxu0 %v546
    %622 = vmatpush.msra.mxu0 %v545
    %623 = vmatpush.msra.mxu0 %v544
    %624 = vmatmul.f32.gmra.mxu0 %v414
    %v625 = vpop.f32.mrf.mxu0
    %v626 = vadd.f32 0.0, %v625
    %627 = vdwg.mxu0
    %vm628 = vcmask 130048
    %v630 = vsel %vm628, %v365, 0
    %v633 = vsel %vm628, %v470, 0
    %635 = vmatpush.xpose.msra.mxu0 0.0
    %636 = vmatpush.xpose.msra.mxu0 0.0
    %637 = vmatpush.xpose.msra.mxu0 0.0
    %638 = vmatpush.xpose.msra.mxu0 0.0
    %639 = vmatpush.xpose.msra.mxu0 0.0
    %640 = vmatpush.xpose.msra.mxu0 0.0
    %641 = vmatpush.xpose.msra.mxu0 0.0
    %642 = vmatpush.xpose.msra.mxu0 0.0
    %643 = vmatpush.xpose.msra.mxu0 0.0
    %644 = vmatpush.xpose.msra.mxu0 0.0
    %645 = vmatpush.xpose.msra.mxu0 0.0
    %646 = vmatpush.xpose.msra.mxu0 0.0
    %647 = vmatpush.xpose.msra.mxu0 0.0
    %648 = vmatpush.xpose.msra.mxu0 0.0
    %649 = vmatpush.xpose.msra.mxu0 0.0
    %650 = vmatpush.xpose.msra.mxu0 %v633
    %651 = vmatmul.f32.gmra.mxu0 %v630
    %v652 = vpop.f32.mrf.mxu0
    %v653 = vadd.f32 0.0, %v652
    %654 = vdwg.mxu0
    %v656 = vsel %vm628, %v388, 0
    %v659 = vsel %vm628, %v490, 0
    %661 = vmatpush.xpose.msra.mxu0 0.0
    %662 = vmatpush.xpose.msra.mxu0 0.0
    %663 = vmatpush.xpose.msra.mxu0 0.0
    %664 = vmatpush.xpose.msra.mxu0 0.0
    %665 = vmatpush.xpose.msra.mxu0 0.0
    %666 = vmatpush.xpose.msra.mxu0 0.0
    %667 = vmatpush.xpose.msra.mxu0 0.0
    %668 = vmatpush.xpose.msra.mxu0 0.0
    %669 = vmatpush.xpose.msra.mxu0 0.0
    %670 = vmatpush.xpose.msra.mxu0 0.0
    %671 = vmatpush.xpose.msra.mxu0 0.0
    %672 = vmatpush.xpose.msra.mxu0 0.0
    %673 = vmatpush.xpose.msra.mxu0 0.0
    %674 = vmatpush.xpose.msra.mxu0 0.0
    %675 = vmatpush.xpose.msra.mxu0 0.0
    %676 = vmatpush.xpose.msra.mxu0 %v659
    %677 = vmatmul.f32.gmra.mxu0 %v656
    %v678 = vpop.f32.mrf.mxu0
    %v679 = vadd.f32 0.0, %v678
    %680 = vdwg.mxu0
    %v682 = vsel %vm628, %v411, 0
    %v685 = vsel %vm628, %v510, 0
    %687 = vmatpush.xpose.msra.mxu0 0.0
    %688 = vmatpush.xpose.msra.mxu0 0.0
    %689 = vmatpush.xpose.msra.mxu0 0.0
    %690 = vmatpush.xpose.msra.mxu0 0.0
    %691 = vmatpush.xpose.msra.mxu0 0.0
    %692 = vmatpush.xpose.msra.mxu0 0.0
    %693 = vmatpush.xpose.msra.mxu0 0.0
    %694 = vmatpush.xpose.msra.mxu0 0.0
    %695 = vmatpush.xpose.msra.mxu0 0.0
    %696 = vmatpush.xpose.msra.mxu0 0.0
    %697 = vmatpush.xpose.msra.mxu0 0.0
    %698 = vmatpush.xpose.msra.mxu0 0.0
    %699 = vmatpush.xpose.msra.mxu0 0.0
    %700 = vmatpush.xpose.msra.mxu0 0.0
    %701 = vmatpush.xpose.msra.mxu0 0.0
    %702 = vmatpush.xpose.msra.mxu0 %v685
    %703 = vmatmul.f32.gmra.mxu0 %v682
    %v704 = vpop.f32.mrf.mxu0
    %v705 = vadd.f32 0.0, %v704
    %706 = vdwg.mxu0
    %v708 = vsel %vm628, %v434, 0
    %v711 = vsel %vm628, %v530, 0
    %713 = vmatpush.xpose.msra.mxu0 0.0
    %714 = vmatpush.xpose.msra.mxu0 0.0
    %715 = vmatpush.xpose.msra.mxu0 0.0
    %716 = vmatpush.xpose.msra.mxu0 0.0
    %717 = vmatpush.xpose.msra.mxu0 0.0
    %718 = vmatpush.xpose.msra.mxu0 0.0
    %719 = vmatpush.xpose.msra.mxu0 0.0
    %720 = vmatpush.xpose.msra.mxu0 0.0
    %721 = vmatpush.xpose.msra.mxu0 0.0
    %722 = vmatpush.xpose.msra.mxu0 0.0
    %723 = vmatpush.xpose.msra.mxu0 0.0
    %724 = vmatpush.xpose.msra.mxu0 0.0
    %725 = vmatpush.xpose.msra.mxu0 0.0
    %726 = vmatpush.xpose.msra.mxu0 0.0
    %727 = vmatpush.xpose.msra.mxu0 0.0
    %728 = vmatpush.xpose.msra.mxu0 %v711
    %729 = vmatmul.f32.gmra.mxu0 %v708
    %v730 = vpop.f32.mrf.mxu0
    %v731 = vadd.f32 0.0, %v730
    %732 = vdwg.mxu0
    %v733 = vmul.f32 %v653, 0.25
    %v734 = vmul.f32 %v679, 0.25
    %v735 = vmul.f32 %v705, 0.25
    %v736 = vmul.f32 %v731, 0.25
    %vm737 = vcmask 36864
    %v738 = vsel %vm737, %v733, -inf
    %739 = vmax.xlane.f32.xlu0 %v738
    %v740 = vpop.xlane.xlu0 %739
    %v741 = vsel %vm737, %v734, -inf
    %742 = vmax.xlane.f32.xlu0 %v741
    %v743 = vpop.xlane.xlu0 %742
    %v744 = vsel %vm737, %v735, -inf
    %745 = vmax.xlane.f32.xlu0 %v744
    %v746 = vpop.xlane.xlu0 %745
    %v747 = vsel %vm737, %v736, -inf
    %748 = vmax.xlane.f32.xlu0 %v747
    %v749 = vpop.xlane.xlu0 %748
    %v750 = vsub.f32 %v733, %v740
    %v751 = vsub.f32 %v734, %v743
    %v752 = vsub.f32 %v735, %v746
    %v753 = vsub.f32 %v736, %v749
    %v754 = vmul.f32 %v750, 1.442695
    %v755 = vpow.pop %v754
    %v756 = vmul.f32 %v751, 1.442695
    %v757 = vpow.pop %v756
    %v758 = vmul.f32 %v752, 1.442695
    %v759 = vpow.pop %v758
    %v760 = vmul.f32 %v753, 1.442695
    %v761 = vpow.pop %v760
    %v762 = vsel %vm737, %v755, 0.0
    %763 = vadd.xlane.f32.xlu0 %v762
    %v764 = vpop.xlane.xlu0 %763
    %v765 = vsel %vm737, %v757, 0.0
    %766 = vadd.xlane.f32.xlu0 %v765
    %v767 = vpop.xlane.xlu0 %766
    %v768 = vsel %vm737, %v759, 0.0
    %769 = vadd.xlane.f32.xlu0 %v768
    %v770 = vpop.xlane.xlu0 %769
    %v771 = vsel %vm737, %v761, 0.0
    %772 = vadd.xlane.f32.xlu0 %v771
    %v773 = vpop.xlane.xlu0 %772
    %v774 = vrcp.pop %v764
    %v775 = vrcp.pop %v767
    %v776 = vrcp.pop %v770
    %v777 = vrcp.pop %v773
    %v778 = vmul.f32 %v755, %v774
    %v779 = vmul.f32 %v757, %v775
    %v780 = vmul.f32 %v759, %v776
    %v781 = vmul.f32 %v761, %v777
    %vm782 = vcmask 39936
    %v784 = vsel %vm782, %v778, 0
    %vm786 = vcmask 1044480
    %v788 = vsel %vm786, %v566, 0
    %790 = vmatpush.msra.mxu0 0.0
    %791 = vmatpush.msra.mxu0 0.0
    %792 = vmatpush.msra.mxu0 0.0
    %793 = vmatpush.msra.mxu0 0.0
    %794 = vmatpush.msra.mxu0 0.0
    %795 = vmatpush.msra.mxu0 0.0
    %796 = vmatpush.msra.mxu0 0.0
    %797 = vmatpush.msra.mxu0 0.0
    %798 = vmatpush.msra.mxu0 0.0
    %799 = vmatpush.msra.mxu0 0.0
    %800 = vmatpush.msra.mxu0 0.0
    %801 = vmatpush.msra.mxu0 0.0
    %802 = vmatpush.msra.mxu0 0.0
    %803 = vmatpush.msra.mxu0 0.0
    %804 = vmatpush.msra.mxu0 0.0
    %805 = vmatpush.msra.mxu0 %v788
    %806 = vmatmul.f32.gmra.mxu0 %v784
    %v807 = vpop.f32.mrf.mxu0
    %v808 = vadd.f32 0.0, %v807
    %809 = vdwg.mxu0
    %v811 = vsel %vm782, %v779, 0
    %v814 = vsel %vm786, %v586, 0
    %816 = vmatpush.msra.mxu0 0.0
    %817 = vmatpush.msra.mxu0 0.0
    %818 = vmatpush.msra.mxu0 0.0
    %819 = vmatpush.msra.mxu0 0.0
    %820 = vmatpush.msra.mxu0 0.0
    %821 = vmatpush.msra.mxu0 0.0
    %822 = vmatpush.msra.mxu0 0.0
    %823 = vmatpush.msra.mxu0 0.0
    %824 = vmatpush.msra.mxu0 0.0
    %825 = vmatpush.msra.mxu0 0.0
    %826 = vmatpush.msra.mxu0 0.0
    %827 = vmatpush.msra.mxu0 0.0
    %828 = vmatpush.msra.mxu0 0.0
    %829 = vmatpush.msra.mxu0 0.0
    %830 = vmatpush.msra.mxu0 0.0
    %831 = vmatpush.msra.mxu0 %v814
    %832 = vmatmul.f32.gmra.mxu0 %v811
    %v833 = vpop.f32.mrf.mxu0
    %v834 = vadd.f32 0.0, %v833
    %835 = vdwg.mxu0
    %v837 = vsel %vm782, %v780, 0
    %v840 = vsel %vm786, %v606, 0
    %842 = vmatpush.msra.mxu0 0.0
    %843 = vmatpush.msra.mxu0 0.0
    %844 = vmatpush.msra.mxu0 0.0
    %845 = vmatpush.msra.mxu0 0.0
    %846 = vmatpush.msra.mxu0 0.0
    %847 = vmatpush.msra.mxu0 0.0
    %848 = vmatpush.msra.mxu0 0.0
    %849 = vmatpush.msra.mxu0 0.0
    %850 = vmatpush.msra.mxu0 0.0
    %851 = vmatpush.msra.mxu0 0.0
    %852 = vmatpush.msra.mxu0 0.0
    %853 = vmatpush.msra.mxu0 0.0
    %854 = vmatpush.msra.mxu0 0.0
    %855 = vmatpush.msra.mxu0 0.0
    %856 = vmatpush.msra.mxu0 0.0
    %857 = vmatpush.msra.mxu0 %v840
    %858 = vmatmul.f32.gmra.mxu0 %v837
    %v859 = vpop.f32.mrf.mxu0
    %v860 = vadd.f32 0.0, %v859
    %861 = vdwg.mxu0
    %v863 = vsel %vm782, %v781, 0
    %v866 = vsel %vm786, %v626, 0
    %868 = vmatpush.msra.mxu0 0.0
    %869 = vmatpush.msra.mxu0 0.0
    %870 = vmatpush.msra.mxu0 0.0
    %871 = vmatpush.msra.mxu0 0.0
    %872 = vmatpush.msra.mxu0 0.0
    %873 = vmatpush.msra.mxu0 0.0
    %874 = vmatpush.msra.mxu0 0.0
    %875 = vmatpush.msra.mxu0 0.0
    %876 = vmatpush.msra.mxu0 0.0
    %877 = vmatpush.msra.mxu0 0.0
    %878 = vmatpush.msra.mxu0 0.0
    %879 = vmatpush.msra.mxu0 0.0
    %880 = vmatpush.msra.mxu0 0.0
    %881 = vmatpush.msra.mxu0 0.0
    %882 = vmatpush.msra.mxu0 0.0
    %883 = vmatpush.msra.mxu0 %v866
    %884 = vmatmul.f32.gmra.mxu0 %v863
    %v885 = vpop.f32.mrf.mxu0
    %v886 = vadd.f32 0.0, %v885
    %887 = vdwg.mxu0
    %v888 = vld [vmem:[%s8] sm:$0xff]
    %v889 = vld [vmem:[%s8 + $0x8] sm:$0xff]
    %v890 = vld [vmem:[%s8 + $0x10] sm:$0xff]
    %v891 = vld [vmem:[%s8 + $0x18] sm:$0xff]
    %v892 = vld [vmem:[%s8 + $0x20] sm:$0xff]
    %v893 = vld [vmem:[%s8 + $0x28] sm:$0xff]
    %v894 = vld [vmem:[%s8 + $0x30] sm:$0xff]
    %v895 = vld [vmem:[%s8 + $0x38] sm:$0xff]
    %s896 = scalar_lea.vmem %s5, 128
    %v897 = vld [vmem:[%s896] sm:$0xff]
    %v898 = vld [vmem:[%s896 + $0x8] sm:$0xff]
    %v899 = vld [vmem:[%s896 + $0x10] sm:$0xff]
    %v900 = vld [vmem:[%s896 + $0x18] sm:$0xff]
    %v901 = vld [vmem:[%s896 + $0x20] sm:$0xff]
    %v902 = vld [vmem:[%s896 + $0x28] sm:$0xff]
    %v903 = vld [vmem:[%s896 + $0x30] sm:$0xff]
    %v904 = vld [vmem:[%s896 + $0x38] sm:$0xff]
    %v905 = vld [vmem:[%s896 + $0x40] sm:$0xff]
    %v906 = vld [vmem:[%s896 + $0x48] sm:$0xff]
    %v907 = vld [vmem:[%s896 + $0x50] sm:$0xff]
    %v908 = vld [vmem:[%s896 + $0x58] sm:$0xff]
    %v909 = vld [vmem:[%s896 + $0x60] sm:$0xff]
    %v910 = vld [vmem:[%s896 + $0x68] sm:$0xff]
    %v911 = vld [vmem:[%s896 + $0x70] sm:$0xff]
    %v912 = vld [vmem:[%s896 + $0x78] sm:$0xff]
    %913 = vmatpush.msra.mxu0 0.0
    %914 = vmatpush.msra.mxu0 0.0
    %915 = vmatpush.msra.mxu0 0.0
    %916 = vmatpush.msra.mxu0 0.0
    %917 = vmatpush.msra.mxu0 0.0
    %918 = vmatpush.msra.mxu0 0.0
    %919 = vmatpush.msra.mxu0 0.0
    %920 = vmatpush.msra.mxu0 0.0
    %921 = vmatpush.msra.mxu0 0.0
    %922 = vmatpush.msra.mxu0 0.0
    %923 = vmatpush.msra.mxu0 0.0
    %924 = vmatpush.msra.mxu0 0.0
    %925 = vmatpush.msra.mxu0 %v900
    %926 = vmatpush.msra.mxu0 %v899
    %927 = vmatpush.msra.mxu0 %v898
    %928 = vmatpush.msra.mxu0 %v897
    %929 = vmatmul.f32.gmra.mxu0 %v345
    %v930 = vpop.f32.mrf.mxu0
    %v931 = vadd.f32 0.0, %v930
    %932 = vdwg.mxu0
    %933 = vmatpush.msra.mxu0 0.0
    %934 = vmatpush.msra.mxu0 0.0
    %935 = vmatpush.msra.mxu0 0.0
    %936 = vmatpush.msra.mxu0 0.0
    %937 = vmatpush.msra.mxu0 0.0
    %938 = vmatpush.msra.mxu0 0.0
    %939 = vmatpush.msra.mxu0 0.0
    %940 = vmatpush.msra.mxu0 0.0
    %941 = vmatpush.msra.mxu0 0.0
    %942 = vmatpush.msra.mxu0 0.0
    %943 = vmatpush.msra.mxu0 0.0
    %944 = vmatpush.msra.mxu0 0.0
    %945 = vmatpush.msra.mxu0 %v904
    %946 = vmatpush.msra.mxu0 %v903
    %947 = vmatpush.msra.mxu0 %v902
    %948 = vmatpush.msra.mxu0 %v901
    %949 = vmatmul.f32.gmra.mxu0 %v368
    %v950 = vpop.f32.mrf.mxu0
    %v951 = vadd.f32 0.0, %v950
    %952 = vdwg.mxu0
    %953 = vmatpush.msra.mxu0 0.0
    %954 = vmatpush.msra.mxu0 0.0
    %955 = vmatpush.msra.mxu0 0.0
    %956 = vmatpush.msra.mxu0 0.0
    %957 = vmatpush.msra.mxu0 0.0
    %958 = vmatpush.msra.mxu0 0.0
    %959 = vmatpush.msra.mxu0 0.0
    %960 = vmatpush.msra.mxu0 0.0
    %961 = vmatpush.msra.mxu0 0.0
    %962 = vmatpush.msra.mxu0 0.0
    %963 = vmatpush.msra.mxu0 0.0
    %964 = vmatpush.msra.mxu0 0.0
    %965 = vmatpush.msra.mxu0 %v908
    %966 = vmatpush.msra.mxu0 %v907
    %967 = vmatpush.msra.mxu0 %v906
    %968 = vmatpush.msra.mxu0 %v905
    %969 = vmatmul.f32.gmra.mxu0 %v391
    %v970 = vpop.f32.mrf.mxu0
    %v971 = vadd.f32 0.0, %v970
    %972 = vdwg.mxu0
    %973 = vmatpush.msra.mxu0 0.0
    %974 = vmatpush.msra.mxu0 0.0
    %975 = vmatpush.msra.mxu0 0.0
    %976 = vmatpush.msra.mxu0 0.0
    %977 = vmatpush.msra.mxu0 0.0
    %978 = vmatpush.msra.mxu0 0.0
    %979 = vmatpush.msra.mxu0 0.0
    %980 = vmatpush.msra.mxu0 0.0
    %981 = vmatpush.msra.mxu0 0.0
    %982 = vmatpush.msra.mxu0 0.0
    %983 = vmatpush.msra.mxu0 0.0
    %984 = vmatpush.msra.mxu0 0.0
    %985 = vmatpush.msra.mxu0 %v912
    %986 = vmatpush.msra.mxu0 %v911
    %987 = vmatpush.msra.mxu0 %v910
    %988 = vmatpush.msra.mxu0 %v909
    %989 = vmatmul.f32.gmra.mxu0 %v414
    %v990 = vpop.f32.mrf.mxu0
    %v991 = vadd.f32 0.0, %v990
    %992 = vdwg.mxu0
    %s993 = scalar_lea.vmem %s6, 128
    %v994 = vld [vmem:[%s993] sm:$0xff]
    %v995 = vld [vmem:[%s993 + $0x8] sm:$0xff]
    %v996 = vld [vmem:[%s993 + $0x10] sm:$0xff]
    %v997 = vld [vmem:[%s993 + $0x18] sm:$0xff]
    %v998 = vld [vmem:[%s993 + $0x20] sm:$0xff]
    %v999 = vld [vmem:[%s993 + $0x28] sm:$0xff]
    %v1000 = vld [vmem:[%s993 + $0x30] sm:$0xff]
    %v1001 = vld [vmem:[%s993 + $0x38] sm:$0xff]
    %v1002 = vld [vmem:[%s993 + $0x40] sm:$0xff]
    %v1003 = vld [vmem:[%s993 + $0x48] sm:$0xff]
    %v1004 = vld [vmem:[%s993 + $0x50] sm:$0xff]
    %v1005 = vld [vmem:[%s993 + $0x58] sm:$0xff]
    %v1006 = vld [vmem:[%s993 + $0x60] sm:$0xff]
    %v1007 = vld [vmem:[%s993 + $0x68] sm:$0xff]
    %v1008 = vld [vmem:[%s993 + $0x70] sm:$0xff]
    %v1009 = vld [vmem:[%s993 + $0x78] sm:$0xff]
    %1010 = vmatpush.msra.mxu0 0.0
    %1011 = vmatpush.msra.mxu0 0.0
    %1012 = vmatpush.msra.mxu0 0.0
    %1013 = vmatpush.msra.mxu0 0.0
    %1014 = vmatpush.msra.mxu0 0.0
    %1015 = vmatpush.msra.mxu0 0.0
    %1016 = vmatpush.msra.mxu0 0.0
    %1017 = vmatpush.msra.mxu0 0.0
    %1018 = vmatpush.msra.mxu0 0.0
    %1019 = vmatpush.msra.mxu0 0.0
    %1020 = vmatpush.msra.mxu0 0.0
    %1021 = vmatpush.msra.mxu0 0.0
    %1022 = vmatpush.msra.mxu0 %v997
    %1023 = vmatpush.msra.mxu0 %v996
    %1024 = vmatpush.msra.mxu0 %v995
    %1025 = vmatpush.msra.mxu0 %v994
    %1026 = vmatmul.f32.gmra.mxu0 %v345
    %v1027 = vpop.f32.mrf.mxu0
    %v1028 = vadd.f32 0.0, %v1027
    %1029 = vdwg.mxu0
    %1030 = vmatpush.msra.mxu0 0.0
    %1031 = vmatpush.msra.mxu0 0.0
    %1032 = vmatpush.msra.mxu0 0.0
    %1033 = vmatpush.msra.mxu0 0.0
    %1034 = vmatpush.msra.mxu0 0.0
    %1035 = vmatpush.msra.mxu0 0.0
    %1036 = vmatpush.msra.mxu0 0.0
    %1037 = vmatpush.msra.mxu0 0.0
    %1038 = vmatpush.msra.mxu0 0.0
    %1039 = vmatpush.msra.mxu0 0.0
    %1040 = vmatpush.msra.mxu0 0.0
    %1041 = vmatpush.msra.mxu0 0.0
    %1042 = vmatpush.msra.mxu0 %v1001
    %1043 = vmatpush.msra.mxu0 %v1000
    %1044 = vmatpush.msra.mxu0 %v999
    %1045 = vmatpush.msra.mxu0 %v998
    %1046 = vmatmul.f32.gmra.mxu0 %v368
    %v1047 = vpop.f32.mrf.mxu0
    %v1048 = vadd.f32 0.0, %v1047
    %1049 = vdwg.mxu0
    %1050 = vmatpush.msra.mxu0 0.0
    %1051 = vmatpush.msra.mxu0 0.0
    %1052 = vmatpush.msra.mxu0 0.0
    %1053 = vmatpush.msra.mxu0 0.0
    %1054 = vmatpush.msra.mxu0 0.0
    %1055 = vmatpush.msra.mxu0 0.0
    %1056 = vmatpush.msra.mxu0 0.0
    %1057 = vmatpush.msra.mxu0 0.0
    %1058 = vmatpush.msra.mxu0 0.0
    %1059 = vmatpush.msra.mxu0 0.0
    %1060 = vmatpush.msra.mxu0 0.0
    %1061 = vmatpush.msra.mxu0 0.0
    %1062 = vmatpush.msra.mxu0 %v1005
    %1063 = vmatpush.msra.mxu0 %v1004
    %1064 = vmatpush.msra.mxu0 %v1003
    %1065 = vmatpush.msra.mxu0 %v1002
    %1066 = vmatmul.f32.gmra.mxu0 %v391
    %v1067 = vpop.f32.mrf.mxu0
    %v1068 = vadd.f32 0.0, %v1067
    %1069 = vdwg.mxu0
    %1070 = vmatpush.msra.mxu0 0.0
    %1071 = vmatpush.msra.mxu0 0.0
    %1072 = vmatpush.msra.mxu0 0.0
    %1073 = vmatpush.msra.mxu0 0.0
    %1074 = vmatpush.msra.mxu0 0.0
    %1075 = vmatpush.msra.mxu0 0.0
    %1076 = vmatpush.msra.mxu0 0.0
    %1077 = vmatpush.msra.mxu0 0.0
    %1078 = vmatpush.msra.mxu0 0.0
    %1079 = vmatpush.msra.mxu0 0.0
    %1080 = vmatpush.msra.mxu0 0.0
    %1081 = vmatpush.msra.mxu0 0.0
    %1082 = vmatpush.msra.mxu0 %v1009
    %1083 = vmatpush.msra.mxu0 %v1008
    %1084 = vmatpush.msra.mxu0 %v1007
    %1085 = vmatpush.msra.mxu0 %v1006
    %1086 = vmatmul.f32.gmra.mxu0 %v414
    %v1087 = vpop.f32.mrf.mxu0
    %v1088 = vadd.f32 0.0, %v1087
    %1089 = vdwg.mxu0
    %s1090 = scalar_lea.vmem %s7, 128
    %v1091 = vld [vmem:[%s1090] sm:$0xff]
    %v1092 = vld [vmem:[%s1090 + $0x8] sm:$0xff]
    %v1093 = vld [vmem:[%s1090 + $0x10] sm:$0xff]
    %v1094 = vld [vmem:[%s1090 + $0x18] sm:$0xff]
    %v1095 = vld [vmem:[%s1090 + $0x20] sm:$0xff]
    %v1096 = vld [vmem:[%s1090 + $0x28] sm:$0xff]
    %v1097 = vld [vmem:[%s1090 + $0x30] sm:$0xff]
    %v1098 = vld [vmem:[%s1090 + $0x38] sm:$0xff]
    %v1099 = vld [vmem:[%s1090 + $0x40] sm:$0xff]
    %v1100 = vld [vmem:[%s1090 + $0x48] sm:$0xff]
    %v1101 = vld [vmem:[%s1090 + $0x50] sm:$0xff]
    %v1102 = vld [vmem:[%s1090 + $0x58] sm:$0xff]
    %v1103 = vld [vmem:[%s1090 + $0x60] sm:$0xff]
    %v1104 = vld [vmem:[%s1090 + $0x68] sm:$0xff]
    %v1105 = vld [vmem:[%s1090 + $0x70] sm:$0xff]
    %v1106 = vld [vmem:[%s1090 + $0x78] sm:$0xff]
    %1107 = vmatpush.msra.mxu0 0.0
    %1108 = vmatpush.msra.mxu0 0.0
    %1109 = vmatpush.msra.mxu0 0.0
    %1110 = vmatpush.msra.mxu0 0.0
    %1111 = vmatpush.msra.mxu0 0.0
    %1112 = vmatpush.msra.mxu0 0.0
    %1113 = vmatpush.msra.mxu0 0.0
    %1114 = vmatpush.msra.mxu0 0.0
    %1115 = vmatpush.msra.mxu0 0.0
    %1116 = vmatpush.msra.mxu0 0.0
    %1117 = vmatpush.msra.mxu0 0.0
    %1118 = vmatpush.msra.mxu0 0.0
    %1119 = vmatpush.msra.mxu0 %v1094
    %1120 = vmatpush.msra.mxu0 %v1093
    %1121 = vmatpush.msra.mxu0 %v1092
    %1122 = vmatpush.msra.mxu0 %v1091
    %1123 = vmatmul.f32.gmra.mxu0 %v345
    %v1124 = vpop.f32.mrf.mxu0
    %v1125 = vadd.f32 0.0, %v1124
    %1126 = vdwg.mxu0
    %1127 = vmatpush.msra.mxu0 0.0
    %1128 = vmatpush.msra.mxu0 0.0
    %1129 = vmatpush.msra.mxu0 0.0
    %1130 = vmatpush.msra.mxu0 0.0
    %1131 = vmatpush.msra.mxu0 0.0
    %1132 = vmatpush.msra.mxu0 0.0
    %1133 = vmatpush.msra.mxu0 0.0
    %1134 = vmatpush.msra.mxu0 0.0
    %1135 = vmatpush.msra.mxu0 0.0
    %1136 = vmatpush.msra.mxu0 0.0
    %1137 = vmatpush.msra.mxu0 0.0
    %1138 = vmatpush.msra.mxu0 0.0
    %1139 = vmatpush.msra.mxu0 %v1098
    %1140 = vmatpush.msra.mxu0 %v1097
    %1141 = vmatpush.msra.mxu0 %v1096
    %1142 = vmatpush.msra.mxu0 %v1095
    %1143 = vmatmul.f32.gmra.mxu0 %v368
    %v1144 = vpop.f32.mrf.mxu0
    %v1145 = vadd.f32 0.0, %v1144
    %1146 = vdwg.mxu0
    %1147 = vmatpush.msra.mxu0 0.0
    %1148 = vmatpush.msra.mxu0 0.0
    %1149 = vmatpush.msra.mxu0 0.0
    %1150 = vmatpush.msra.mxu0 0.0
    %1151 = vmatpush.msra.mxu0 0.0
    %1152 = vmatpush.msra.mxu0 0.0
    %1153 = vmatpush.msra.mxu0 0.0
    %1154 = vmatpush.msra.mxu0 0.0
    %1155 = vmatpush.msra.mxu0 0.0
    %1156 = vmatpush.msra.mxu0 0.0
    %1157 = vmatpush.msra.mxu0 0.0
    %1158 = vmatpush.msra.mxu0 0.0
    %1159 = vmatpush.msra.mxu0 %v1102
    %1160 = vmatpush.msra.mxu0 %v1101
    %1161 = vmatpush.msra.mxu0 %v1100
    %1162 = vmatpush.msra.mxu0 %v1099
    %1163 = vmatmul.f32.gmra.mxu0 %v391
    %v1164 = vpop.f32.mrf.mxu0
    %v1165 = vadd.f32 0.0, %v1164
    %1166 = vdwg.mxu0
    %1167 = vmatpush.msra.mxu0 0.0
    %1168 = vmatpush.msra.mxu0 0.0
    %1169 = vmatpush.msra.mxu0 0.0
    %1170 = vmatpush.msra.mxu0 0.0
    %1171 = vmatpush.msra.mxu0 0.0
    %1172 = vmatpush.msra.mxu0 0.0
    %1173 = vmatpush.msra.mxu0 0.0
    %1174 = vmatpush.msra.mxu0 0.0
    %1175 = vmatpush.msra.mxu0 0.0
    %1176 = vmatpush.msra.mxu0 0.0
    %1177 = vmatpush.msra.mxu0 0.0
    %1178 = vmatpush.msra.mxu0 0.0
    %1179 = vmatpush.msra.mxu0 %v1106
    %1180 = vmatpush.msra.mxu0 %v1105
    %1181 = vmatpush.msra.mxu0 %v1104
    %1182 = vmatpush.msra.mxu0 %v1103
    %1183 = vmatmul.f32.gmra.mxu0 %v414
    %v1184 = vpop.f32.mrf.mxu0
    %v1185 = vadd.f32 0.0, %v1184
    %1186 = vdwg.mxu0
    %v1188 = vsel %vm628, %v931, 0
    %v1191 = vsel %vm628, %v1028, 0
    %1193 = vmatpush.xpose.msra.mxu0 0.0
    %1194 = vmatpush.xpose.msra.mxu0 0.0
    %1195 = vmatpush.xpose.msra.mxu0 0.0
    %1196 = vmatpush.xpose.msra.mxu0 0.0
    %1197 = vmatpush.xpose.msra.mxu0 0.0
    %1198 = vmatpush.xpose.msra.mxu0 0.0
    %1199 = vmatpush.xpose.msra.mxu0 0.0
    %1200 = vmatpush.xpose.msra.mxu0 0.0
    %1201 = vmatpush.xpose.msra.mxu0 0.0
    %1202 = vmatpush.xpose.msra.mxu0 0.0
    %1203 = vmatpush.xpose.msra.mxu0 0.0
    %1204 = vmatpush.xpose.msra.mxu0 0.0
    %1205 = vmatpush.xpose.msra.mxu0 0.0
    %1206 = vmatpush.xpose.msra.mxu0 0.0
    %1207 = vmatpush.xpose.msra.mxu0 0.0
    %1208 = vmatpush.xpose.msra.mxu0 %v1191
    %1209 = vmatmul.f32.gmra.mxu0 %v1188
    %v1210 = vpop.f32.mrf.mxu0
    %v1211 = vadd.f32 0.0, %v1210
    %1212 = vdwg.mxu0
    %v1214 = vsel %vm628, %v951, 0
    %v1217 = vsel %vm628, %v1048, 0
    %1219 = vmatpush.xpose.msra.mxu0 0.0
    %1220 = vmatpush.xpose.msra.mxu0 0.0
    %1221 = vmatpush.xpose.msra.mxu0 0.0
    %1222 = vmatpush.xpose.msra.mxu0 0.0
    %1223 = vmatpush.xpose.msra.mxu0 0.0
    %1224 = vmatpush.xpose.msra.mxu0 0.0
    %1225 = vmatpush.xpose.msra.mxu0 0.0
    %1226 = vmatpush.xpose.msra.mxu0 0.0
    %1227 = vmatpush.xpose.msra.mxu0 0.0
    %1228 = vmatpush.xpose.msra.mxu0 0.0
    %1229 = vmatpush.xpose.msra.mxu0 0.0
    %1230 = vmatpush.xpose.msra.mxu0 0.0
    %1231 = vmatpush.xpose.msra.mxu0 0.0
    %1232 = vmatpush.xpose.msra.mxu0 0.0
    %1233 = vmatpush.xpose.msra.mxu0 0.0
    %1234 = vmatpush.xpose.msra.mxu0 %v1217
    %1235 = vmatmul.f32.gmra.mxu0 %v1214
    %v1236 = vpop.f32.mrf.mxu0
    %v1237 = vadd.f32 0.0, %v1236
    %1238 = vdwg.mxu0
    %v1240 = vsel %vm628, %v971, 0
    %v1243 = vsel %vm628, %v1068, 0
    %1245 = vmatpush.xpose.msra.mxu0 0.0
    %1246 = vmatpush.xpose.msra.mxu0 0.0
    %1247 = vmatpush.xpose.msra.mxu0 0.0
    %1248 = vmatpush.xpose.msra.mxu0 0.0
    %1249 = vmatpush.xpose.msra.mxu0 0.0
    %1250 = vmatpush.xpose.msra.mxu0 0.0
    %1251 = vmatpush.xpose.msra.mxu0 0.0
    %1252 = vmatpush.xpose.msra.mxu0 0.0
    %1253 = vmatpush.xpose.msra.mxu0 0.0
    %1254 = vmatpush.xpose.msra.mxu0 0.0
    %1255 = vmatpush.xpose.msra.mxu0 0.0
    %1256 = vmatpush.xpose.msra.mxu0 0.0
    %1257 = vmatpush.xpose.msra.mxu0 0.0
    %1258 = vmatpush.xpose.msra.mxu0 0.0
    %1259 = vmatpush.xpose.msra.mxu0 0.0
    %1260 = vmatpush.xpose.msra.mxu0 %v1243
    %1261 = vmatmul.f32.gmra.mxu0 %v1240
    %v1262 = vpop.f32.mrf.mxu0
    %v1263 = vadd.f32 0.0, %v1262
    %1264 = vdwg.mxu0
    %v1266 = vsel %vm628, %v991, 0
    %v1269 = vsel %vm628, %v1088, 0
    %1271 = vmatpush.xpose.msra.mxu0 0.0
    %1272 = vmatpush.xpose.msra.mxu0 0.0
    %1273 = vmatpush.xpose.msra.mxu0 0.0
    %1274 = vmatpush.xpose.msra.mxu0 0.0
    %1275 = vmatpush.xpose.msra.mxu0 0.0
    %1276 = vmatpush.xpose.msra.mxu0 0.0
    %1277 = vmatpush.xpose.msra.mxu0 0.0
    %1278 = vmatpush.xpose.msra.mxu0 0.0
    %1279 = vmatpush.xpose.msra.mxu0 0.0
    %1280 = vmatpush.xpose.msra.mxu0 0.0
    %1281 = vmatpush.xpose.msra.mxu0 0.0
    %1282 = vmatpush.xpose.msra.mxu0 0.0
    %1283 = vmatpush.xpose.msra.mxu0 0.0
    %1284 = vmatpush.xpose.msra.mxu0 0.0
    %1285 = vmatpush.xpose.msra.mxu0 0.0
    %1286 = vmatpush.xpose.msra.mxu0 %v1269
    %1287 = vmatmul.f32.gmra.mxu0 %v1266
    %v1288 = vpop.f32.mrf.mxu0
    %v1289 = vadd.f32 0.0, %v1288
    %1290 = vdwg.mxu0
    %v1291 = vmul.f32 %v1211, 0.25
    %v1292 = vmul.f32 %v1237, 0.25
    %v1293 = vmul.f32 %v1263, 0.25
    %v1294 = vmul.f32 %v1289, 0.25
    %v1295 = vsel %vm737, %v1291, -inf
    %1296 = vmax.xlane.f32.xlu0 %v1295
    %v1297 = vpop.xlane.xlu0 %1296
    %v1298 = vsel %vm737, %v1292, -inf
    %1299 = vmax.xlane.f32.xlu0 %v1298
    %v1300 = vpop.xlane.xlu0 %1299
    %v1301 = vsel %vm737, %v1293, -inf
    %1302 = vmax.xlane.f32.xlu0 %v1301
    %v1303 = vpop.xlane.xlu0 %1302
    %v1304 = vsel %vm737, %v1294, -inf
    %1305 = vmax.xlane.f32.xlu0 %v1304
    %v1306 = vpop.xlane.xlu0 %1305
    %v1307 = vsub.f32 %v1291, %v1297
    %v1308 = vsub.f32 %v1292, %v1300
    %v1309 = vsub.f32 %v1293, %v1303
    %v1310 = vsub.f32 %v1294, %v1306
    %v1311 = vmul.f32 %v1307, 1.442695
    %v1312 = vpow.pop %v1311
    %v1313 = vmul.f32 %v1308, 1.442695
    %v1314 = vpow.pop %v1313
    %v1315 = vmul.f32 %v1309, 1.442695
    %v1316 = vpow.pop %v1315
    %v1317 = vmul.f32 %v1310, 1.442695
    %v1318 = vpow.pop %v1317
    %v1319 = vsel %vm737, %v1312, 0.0
    %1320 = vadd.xlane.f32.xlu0 %v1319
    %v1321 = vpop.xlane.xlu0 %1320
    %v1322 = vsel %vm737, %v1314, 0.0
    %1323 = vadd.xlane.f32.xlu0 %v1322
    %v1324 = vpop.xlane.xlu0 %1323
    %v1325 = vsel %vm737, %v1316, 0.0
    %1326 = vadd.xlane.f32.xlu0 %v1325
    %v1327 = vpop.xlane.xlu0 %1326
    %v1328 = vsel %vm737, %v1318, 0.0
    %1329 = vadd.xlane.f32.xlu0 %v1328
    %v1330 = vpop.xlane.xlu0 %1329
    %v1331 = vrcp.pop %v1321
    %v1332 = vrcp.pop %v1324
    %v1333 = vrcp.pop %v1327
    %v1334 = vrcp.pop %v1330
    %v1335 = vmul.f32 %v1312, %v1331
    %v1336 = vmul.f32 %v1314, %v1332
    %v1337 = vmul.f32 %v1316, %v1333
    %v1338 = vmul.f32 %v1318, %v1334
    %v1340 = vsel %vm782, %v1335, 0
    %v1343 = vsel %vm786, %v1125, 0
    %1345 = vmatpush.msra.mxu0 0.0
    %1346 = vmatpush.msra.mxu0 0.0
    %1347 = vmatpush.msra.mxu0 0.0
    %1348 = vmatpush.msra.mxu0 0.0
    %1349 = vmatpush.msra.mxu0 0.0
    %1350 = vmatpush.msra.mxu0 0.0
    %1351 = vmatpush.msra.mxu0 0.0
    %1352 = vmatpush.msra.mxu0 0.0
    %1353 = vmatpush.msra.mxu0 0.0
    %1354 = vmatpush.msra.mxu0 0.0
    %1355 = vmatpush.msra.mxu0 0.0
    %1356 = vmatpush.msra.mxu0 0.0
    %1357 = vmatpush.msra.mxu0 0.0
    %1358 = vmatpush.msra.mxu0 0.0
    %1359 = vmatpush.msra.mxu0 0.0
    %1360 = vmatpush.msra.mxu0 %v1343
    %1361 = vmatmul.f32.gmra.mxu0 %v1340
    %v1362 = vpop.f32.mrf.mxu0
    %v1363 = vadd.f32 0.0, %v1362
    %1364 = vdwg.mxu0
    %v1366 = vsel %vm782, %v1336, 0
    %v1369 = vsel %vm786, %v1145, 0
    %1371 = vmatpush.msra.mxu0 0.0
    %1372 = vmatpush.msra.mxu0 0.0
    %1373 = vmatpush.msra.mxu0 0.0
    %1374 = vmatpush.msra.mxu0 0.0
    %1375 = vmatpush.msra.mxu0 0.0
    %1376 = vmatpush.msra.mxu0 0.0
    %1377 = vmatpush.msra.mxu0 0.0
    %1378 = vmatpush.msra.mxu0 0.0
    %1379 = vmatpush.msra.mxu0 0.0
    %1380 = vmatpush.msra.mxu0 0.0
    %1381 = vmatpush.msra.mxu0 0.0
    %1382 = vmatpush.msra.mxu0 0.0
    %1383 = vmatpush.msra.mxu0 0.0
    %1384 = vmatpush.msra.mxu0 0.0
    %1385 = vmatpush.msra.mxu0 0.0
    %1386 = vmatpush.msra.mxu0 %v1369
    %1387 = vmatmul.f32.gmra.mxu0 %v1366
    %v1388 = vpop.f32.mrf.mxu0
    %v1389 = vadd.f32 0.0, %v1388
    %1390 = vdwg.mxu0
    %v1392 = vsel %vm782, %v1337, 0
    %v1395 = vsel %vm786, %v1165, 0
    %1397 = vmatpush.msra.mxu0 0.0
    %1398 = vmatpush.msra.mxu0 0.0
    %1399 = vmatpush.msra.mxu0 0.0
    %1400 = vmatpush.msra.mxu0 0.0
    %1401 = vmatpush.msra.mxu0 0.0
    %1402 = vmatpush.msra.mxu0 0.0
    %1403 = vmatpush.msra.mxu0 0.0
    %1404 = vmatpush.msra.mxu0 0.0
    %1405 = vmatpush.msra.mxu0 0.0
    %1406 = vmatpush.msra.mxu0 0.0
    %1407 = vmatpush.msra.mxu0 0.0
    %1408 = vmatpush.msra.mxu0 0.0
    %1409 = vmatpush.msra.mxu0 0.0
    %1410 = vmatpush.msra.mxu0 0.0
    %1411 = vmatpush.msra.mxu0 0.0
    %1412 = vmatpush.msra.mxu0 %v1395
    %1413 = vmatmul.f32.gmra.mxu0 %v1392
    %v1414 = vpop.f32.mrf.mxu0
    %v1415 = vadd.f32 0.0, %v1414
    %1416 = vdwg.mxu0
    %v1418 = vsel %vm782, %v1338, 0
    %v1421 = vsel %vm786, %v1185, 0
    %1423 = vmatpush.msra.mxu0 0.0
    %1424 = vmatpush.msra.mxu0 0.0
    %1425 = vmatpush.msra.mxu0 0.0
    %1426 = vmatpush.msra.mxu0 0.0
    %1427 = vmatpush.msra.mxu0 0.0
    %1428 = vmatpush.msra.mxu0 0.0
    %1429 = vmatpush.msra.mxu0 0.0
    %1430 = vmatpush.msra.mxu0 0.0
    %1431 = vmatpush.msra.mxu0 0.0
    %1432 = vmatpush.msra.mxu0 0.0
    %1433 = vmatpush.msra.mxu0 0.0
    %1434 = vmatpush.msra.mxu0 0.0
    %1435 = vmatpush.msra.mxu0 0.0
    %1436 = vmatpush.msra.mxu0 0.0
    %1437 = vmatpush.msra.mxu0 0.0
    %1438 = vmatpush.msra.mxu0 %v1421
    %1439 = vmatmul.f32.gmra.mxu0 %v1418
    %v1440 = vpop.f32.mrf.mxu0
    %v1441 = vadd.f32 0.0, %v1440
    %1442 = vdwg.mxu0
    %s1443 = scalar_lea.vmem %s8, 64
    %v1444 = vld [vmem:[%s1443] sm:$0xff]
    %v1445 = vld [vmem:[%s1443 + $0x8] sm:$0xff]
    %v1446 = vld [vmem:[%s1443 + $0x10] sm:$0xff]
    %v1447 = vld [vmem:[%s1443 + $0x18] sm:$0xff]
    %v1448 = vld [vmem:[%s1443 + $0x20] sm:$0xff]
    %v1449 = vld [vmem:[%s1443 + $0x28] sm:$0xff]
    %v1450 = vld [vmem:[%s1443 + $0x30] sm:$0xff]
    %v1451 = vld [vmem:[%s1443 + $0x38] sm:$0xff]
    %v1453 = vsel %vm628, %v1363, 0
    %1455 = vmatpush.msra.mxu0 0.0
    %1456 = vmatpush.msra.mxu0 0.0
    %1457 = vmatpush.msra.mxu0 0.0
    %1458 = vmatpush.msra.mxu0 0.0
    %1459 = vmatpush.msra.mxu0 0.0
    %1460 = vmatpush.msra.mxu0 0.0
    %1461 = vmatpush.msra.mxu0 0.0
    %1462 = vmatpush.msra.mxu0 0.0
    %1463 = vmatpush.msra.mxu0 0.0
    %1464 = vmatpush.msra.mxu0 0.0
    %1465 = vmatpush.msra.mxu0 0.0
    %1466 = vmatpush.msra.mxu0 0.0
    %1467 = vmatpush.msra.mxu0 0.0
    %1468 = vmatpush.msra.mxu0 0.0
    %1469 = vmatpush.msra.mxu0 %v1445
    %1470 = vmatpush.msra.mxu0 %v1444
    %1471 = vmatmul.f32.gmra.mxu0 %v1453
    %v1472 = vpop.f32.mrf.mxu0
    %v1473 = vadd.f32 0.0, %v1472
    %1474 = vdwg.mxu0
    %v1476 = vsel %vm628, %v1389, 0
    %1478 = vmatpush.msra.mxu0 0.0
    %1479 = vmatpush.msra.mxu0 0.0
    %1480 = vmatpush.msra.mxu0 0.0
    %1481 = vmatpush.msra.mxu0 0.0
    %1482 = vmatpush.msra.mxu0 0.0
    %1483 = vmatpush.msra.mxu0 0.0
    %1484 = vmatpush.msra.mxu0 0.0
    %1485 = vmatpush.msra.mxu0 0.0
    %1486 = vmatpush.msra.mxu0 0.0
    %1487 = vmatpush.msra.mxu0 0.0
    %1488 = vmatpush.msra.mxu0 0.0
    %1489 = vmatpush.msra.mxu0 0.0
    %1490 = vmatpush.msra.mxu0 0.0
    %1491 = vmatpush.msra.mxu0 0.0
    %1492 = vmatpush.msra.mxu0 %v1447
    %1493 = vmatpush.msra.mxu0 %v1446
    %1494 = vmatmul.f32.gmra.mxu0 %v1476
    %v1495 = vpop.f32.mrf.mxu0
    %v1496 = vadd.f32 0.0, %v1495
    %1497 = vdwg.mxu0
    %v1499 = vsel %vm628, %v1415, 0
    %1501 = vmatpush.msra.mxu0 0.0
    %1502 = vmatpush.msra.mxu0 0.0
    %1503 = vmatpush.msra.mxu0 0.0
    %1504 = vmatpush.msra.mxu0 0.0
    %1505 = vmatpush.msra.mxu0 0.0
    %1506 = vmatpush.msra.mxu0 0.0
    %1507 = vmatpush.msra.mxu0 0.0
    %1508 = vmatpush.msra.mxu0 0.0
    %1509 = vmatpush.msra.mxu0 0.0
    %1510 = vmatpush.msra.mxu0 0.0
    %1511 = vmatpush.msra.mxu0 0.0
    %1512 = vmatpush.msra.mxu0 0.0
    %1513 = vmatpush.msra.mxu0 0.0
    %1514 = vmatpush.msra.mxu0 0.0
    %1515 = vmatpush.msra.mxu0 %v1449
    %1516 = vmatpush.msra.mxu0 %v1448
    %1517 = vmatmul.f32.gmra.mxu0 %v1499
    %v1518 = vpop.f32.mrf.mxu0
    %v1519 = vadd.f32 0.0, %v1518
    %1520 = vdwg.mxu0
    %v1522 = vsel %vm628, %v1441, 0
    %1524 = vmatpush.msra.mxu0 0.0
    %1525 = vmatpush.msra.mxu0 0.0
    %1526 = vmatpush.msra.mxu0 0.0
    %1527 = vmatpush.msra.mxu0 0.0
    %1528 = vmatpush.msra.mxu0 0.0
    %1529 = vmatpush.msra.mxu0 0.0
    %1530 = vmatpush.msra.mxu0 0.0
    %1531 = vmatpush.msra.mxu0 0.0
    %1532 = vmatpush.msra.mxu0 0.0
    %1533 = vmatpush.msra.mxu0 0.0
    %1534 = vmatpush.msra.mxu0 0.0
    %1535 = vmatpush.msra.mxu0 0.0
    %1536 = vmatpush.msra.mxu0 0.0
    %1537 = vmatpush.msra.mxu0 0.0
    %1538 = vmatpush.msra.mxu0 %v1451
    %1539 = vmatpush.msra.mxu0 %v1450
    %1540 = vmatmul.f32.gmra.mxu0 %v1522
    %v1541 = vpop.f32.mrf.mxu0
    %v1542 = vadd.f32 0.0, %v1541
    %1543 = vdwg.mxu0
    %v1545 = vsel %vm628, %v808, 0
    %1547 = vmatpush.msra.mxu0 0.0
    %1548 = vmatpush.msra.mxu0 0.0
    %1549 = vmatpush.msra.mxu0 0.0
    %1550 = vmatpush.msra.mxu0 0.0
    %1551 = vmatpush.msra.mxu0 0.0
    %1552 = vmatpush.msra.mxu0 0.0
    %1553 = vmatpush.msra.mxu0 0.0
    %1554 = vmatpush.msra.mxu0 0.0
    %1555 = vmatpush.msra.mxu0 0.0
    %1556 = vmatpush.msra.mxu0 0.0
    %1557 = vmatpush.msra.mxu0 0.0
    %1558 = vmatpush.msra.mxu0 0.0
    %1559 = vmatpush.msra.mxu0 0.0
    %1560 = vmatpush.msra.mxu0 0.0
    %1561 = vmatpush.msra.mxu0 %v889
    %1562 = vmatpush.msra.mxu0 %v888
    %1563 = vmatmul.f32.gmra.mxu0 %v1545
    %v1564 = vpop.f32.mrf.mxu0
    %v1565 = vadd.f32 %v1473, %v1564
    %1566 = vdwg.mxu0
    %v1568 = vsel %vm628, %v834, 0
    %1570 = vmatpush.msra.mxu0 0.0
    %1571 = vmatpush.msra.mxu0 0.0
    %1572 = vmatpush.msra.mxu0 0.0
    %1573 = vmatpush.msra.mxu0 0.0
    %1574 = vmatpush.msra.mxu0 0.0
    %1575 = vmatpush.msra.mxu0 0.0
    %1576 = vmatpush.msra.mxu0 0.0
    %1577 = vmatpush.msra.mxu0 0.0
    %1578 = vmatpush.msra.mxu0 0.0
    %1579 = vmatpush.msra.mxu0 0.0
    %1580 = vmatpush.msra.mxu0 0.0
    %1581 = vmatpush.msra.mxu0 0.0
    %1582 = vmatpush.msra.mxu0 0.0
    %1583 = vmatpush.msra.mxu0 0.0
    %1584 = vmatpush.msra.mxu0 %v891
    %1585 = vmatpush.msra.mxu0 %v890
    %1586 = vmatmul.f32.gmra.mxu0 %v1568
    %v1587 = vpop.f32.mrf.mxu0
    %v1588 = vadd.f32 %v1496, %v1587
    %1589 = vdwg.mxu0
    %v1591 = vsel %vm628, %v860, 0
    %1593 = vmatpush.msra.mxu0 0.0
    %1594 = vmatpush.msra.mxu0 0.0
    %1595 = vmatpush.msra.mxu0 0.0
    %1596 = vmatpush.msra.mxu0 0.0
    %1597 = vmatpush.msra.mxu0 0.0
    %1598 = vmatpush.msra.mxu0 0.0
    %1599 = vmatpush.msra.mxu0 0.0
    %1600 = vmatpush.msra.mxu0 0.0
    %1601 = vmatpush.msra.mxu0 0.0
    %1602 = vmatpush.msra.mxu0 0.0
    %1603 = vmatpush.msra.mxu0 0.0
    %1604 = vmatpush.msra.mxu0 0.0
    %1605 = vmatpush.msra.mxu0 0.0
    %1606 = vmatpush.msra.mxu0 0.0
    %1607 = vmatpush.msra.mxu0 %v893
    %1608 = vmatpush.msra.mxu0 %v892
    %1609 = vmatmul.f32.gmra.mxu0 %v1591
    %v1610 = vpop.f32.mrf.mxu0
    %v1611 = vadd.f32 %v1519, %v1610
    %1612 = vdwg.mxu0
    %v1614 = vsel %vm628, %v886, 0
    %1616 = vmatpush.msra.mxu0 0.0
    %1617 = vmatpush.msra.mxu0 0.0
    %1618 = vmatpush.msra.mxu0 0.0
    %1619 = vmatpush.msra.mxu0 0.0
    %1620 = vmatpush.msra.mxu0 0.0
    %1621 = vmatpush.msra.mxu0 0.0
    %1622 = vmatpush.msra.mxu0 0.0
    %1623 = vmatpush.msra.mxu0 0.0
    %1624 = vmatpush.msra.mxu0 0.0
    %1625 = vmatpush.msra.mxu0 0.0
    %1626 = vmatpush.msra.mxu0 0.0
    %1627 = vmatpush.msra.mxu0 0.0
    %1628 = vmatpush.msra.mxu0 0.0
    %1629 = vmatpush.msra.mxu0 0.0
    %1630 = vmatpush.msra.mxu0 %v895
    %1631 = vmatpush.msra.mxu0 %v894
    %1632 = vmatmul.f32.gmra.mxu0 %v1614
    %v1633 = vpop.f32.mrf.mxu0
    %v1634 = vadd.f32 %v1542, %v1633
    %1635 = vdwg.mxu0
    %v1636 = vadd.f32 %v111, %v1565
    %v1637 = vadd.f32 %v137, %v1588
    %v1638 = vadd.f32 %v163, %v1611
    %v1639 = vadd.f32 %v189, %v1634
    %v1640 = vld [vmem:[%s9] sm:$0x1]
    %v1641 = vld [vmem:[%s9 + $0x1] sm:$0x1]
    %v1642 = vld [vmem:[%s9 + $0x2] sm:$0x1]
    %v1643 = vld [vmem:[%s9 + $0x3] sm:$0x1]
    %v1648 = vperm.slane %v1640, 0
    %v1649 = vperm.slane %v1641, 0
    %v1650 = vperm.slane %v1642, 0
    %v1651 = vperm.slane %v1643, 0
    %v1656 = vadd.f32 %v1636, %v1648
    %v1657 = vadd.f32 %v1637, %v1649
    %v1658 = vadd.f32 %v1638, %v1650
    %v1659 = vadd.f32 %v1639, %v1651
    %v1660 = vld [vmem:[%s10] sm:$0x1]
    %v1661 = vld [vmem:[%s10 + $0x1] sm:$0x1]
    %v1662 = vld [vmem:[%s10 + $0x2] sm:$0x1]
    %v1663 = vld [vmem:[%s10 + $0x3] sm:$0x1]
    %v1664 = vld [vmem:[%s11] sm:$0x1]
    %v1665 = vld [vmem:[%s11 + $0x1] sm:$0x1]
    %v1666 = vld [vmem:[%s11 + $0x2] sm:$0x1]
    %v1667 = vld [vmem:[%s11 + $0x3] sm:$0x1]
    %v1668 = vsel %vm199, %v1656, 0.0
    %1669 = vadd.xlane.f32.xlu0 %v1668
    %v1670 = vpop.xlane.xlu0 %1669
    %v1671 = vsel %vm199, %v1657, 0.0
    %1672 = vadd.xlane.f32.xlu0 %v1671
    %v1673 = vpop.xlane.xlu0 %1672
    %v1674 = vsel %vm199, %v1658, 0.0
    %1675 = vadd.xlane.f32.xlu0 %v1674
    %v1676 = vpop.xlane.xlu0 %1675
    %v1677 = vsel %vm199, %v1659, 0.0
    %1678 = vadd.xlane.f32.xlu0 %v1677
    %v1679 = vpop.xlane.xlu0 %1678
    %v1680 = vmul.f32 %v1670, %v218
    %v1681 = vmul.f32 %v1673, %v218
    %v1682 = vmul.f32 %v1676, %v218
    %v1683 = vmul.f32 %v1679, %v218
    %v1684 = vsub.f32 %v1656, %v1680
    %v1685 = vsub.f32 %v1657, %v1681
    %v1686 = vsub.f32 %v1658, %v1682
    %v1687 = vsub.f32 %v1659, %v1683
    %v1688 = vmul.f32 %v1684, %v1684
    %v1689 = vmul.f32 %v1685, %v1685
    %v1690 = vmul.f32 %v1686, %v1686
    %v1691 = vmul.f32 %v1687, %v1687
    %v1692 = vsel %vm199, %v1688, 0.0
    %1693 = vadd.xlane.f32.xlu0 %v1692
    %v1694 = vpop.xlane.xlu0 %1693
    %v1695 = vsel %vm199, %v1689, 0.0
    %1696 = vadd.xlane.f32.xlu0 %v1695
    %v1697 = vpop.xlane.xlu0 %1696
    %v1698 = vsel %vm199, %v1690, 0.0
    %1699 = vadd.xlane.f32.xlu0 %v1698
    %v1700 = vpop.xlane.xlu0 %1699
    %v1701 = vsel %vm199, %v1691, 0.0
    %1702 = vadd.xlane.f32.xlu0 %v1701
    %v1703 = vpop.xlane.xlu0 %1702
    %v1704 = vmul.f32 %v1694, %v218
    %v1705 = vmul.f32 %v1697, %v218
    %v1706 = vmul.f32 %v1700, %v218
    %v1707 = vmul.f32 %v1703, %v218
    %v1708 = vadd.f32 %v1704, 1e-05
    %v1709 = vadd.f32 %v1705, 1e-05
    %v1710 = vadd.f32 %v1706, 1e-05
    %v1711 = vadd.f32 %v1707, 1e-05
    %v1712 = vrsqrt.pop %v1708
    %v1713 = vmul.f32 %v1712, %v1708
    %v1714 = vmul.f32 %v1713, %v1712
    %v1715 = vmul.f32 0.5, %v1714
    %v1716 = vsub.f32 1.5, %v1715
    %v1717 = vmul.f32 %v1712, %v1716
    %vm1718 = vweird.f32 %v1708
    %vm1719 = vweird.f32 %v1712
    %vm1720 = vmor %vm1718, %vm1719
    %v1721 = vsel %vm1720, %v1712, %v1717
    %v1722 = vrsqrt.pop %v1709
    %v1723 = vmul.f32 %v1722, %v1709
    %v1724 = vmul.f32 %v1723, %v1722
    %v1725 = vmul.f32 0.5, %v1724
    %v1726 = vsub.f32 1.5, %v1725
    %v1727 = vmul.f32 %v1722, %v1726
    %vm1728 = vweird.f32 %v1709
    %vm1729 = vweird.f32 %v1722
    %vm1730 = vmor %vm1728, %vm1729
    %v1731 = vsel %vm1730, %v1722, %v1727
    %v1732 = vrsqrt.pop %v1710
    %v1733 = vmul.f32 %v1732, %v1710
    %v1734 = vmul.f32 %v1733, %v1732
    %v1735 = vmul.f32 0.5, %v1734
    %v1736 = vsub.f32 1.5, %v1735
    %v1737 = vmul.f32 %v1732, %v1736
    %vm1738 = vweird.f32 %v1710
    %vm1739 = vweird.f32 %v1732
    %vm1740 = vmor %vm1738, %vm1739
    %v1741 = vsel %vm1740, %v1732, %v1737
    %v1742 = vrsqrt.pop %v1711
    %v1743 = vmul.f32 %v1742, %v1711
    %v1744 = vmul.f32 %v1743, %v1742
    %v1745 = vmul.f32 0.5, %v1744
    %v1746 = vsub.f32 1.5, %v1745
    %v1747 = vmul.f32 %v1742, %v1746
    %vm1748 = vweird.f32 %v1711
    %vm1749 = vweird.f32 %v1742
    %vm1750 = vmor %vm1748, %vm1749
    %v1751 = vsel %vm1750, %v1742, %v1747
    %v1752 = vmul.f32 %v1684, %v1721
    %v1753 = vmul.f32 %v1685, %v1731
    %v1754 = vmul.f32 %v1686, %v1741
    %v1755 = vmul.f32 %v1687, %v1751
    %v1760 = vperm.slane %v1660, 0
    %v1761 = vperm.slane %v1661, 0
    %v1762 = vperm.slane %v1662, 0
    %v1763 = vperm.slane %v1663, 0
    %v1768 = vmul.f32 %v1752, %v1760
    %v1769 = vmul.f32 %v1753, %v1761
    %v1770 = vmul.f32 %v1754, %v1762
    %v1771 = vmul.f32 %v1755, %v1763
    %v1776 = vperm.slane %v1664, 0
    %v1777 = vperm.slane %v1665, 0
    %v1778 = vperm.slane %v1666, 0
    %v1779 = vperm.slane %v1667, 0
    %v1784 = vadd.f32 %v1768, %v1776
    %v1785 = vadd.f32 %v1769, %v1777
    %v1786 = vadd.f32 %v1770, %v1778
    %v1787 = vadd.f32 %v1771, %v1779
    %v1788 = vld [vmem:[%s12] sm:$0xff]
    %v1789 = vld [vmem:[%s12 + $0x8] sm:$0xff]
    %v1790 = vld [vmem:[%s12 + $0x10] sm:$0xff]
    %v1791 = vld [vmem:[%s12 + $0x18] sm:$0xff]
    %v1792 = vld [vmem:[%s12 + $0x20] sm:$0xff]
    %v1793 = vld [vmem:[%s12 + $0x28] sm:$0xff]
    %v1794 = vld [vmem:[%s12 + $0x30] sm:$0xff]
    %v1795 = vld [vmem:[%s12 + $0x38] sm:$0xff]
    %v1796 = vld [vmem:[%s12 + $0x40] sm:$0xff]
    %v1797 = vld [vmem:[%s12 + $0x48] sm:$0xff]
    %v1798 = vld [vmem:[%s12 + $0x50] sm:$0xff]
    %v1799 = vld [vmem:[%s12 + $0x58] sm:$0xff]
    %v1800 = vld [vmem:[%s12 + $0x60] sm:$0xff]
    %v1801 = vld [vmem:[%s12 + $0x68] sm:$0xff]
    %v1802 = vld [vmem:[%s12 + $0x70] sm:$0xff]
    %v1803 = vld [vmem:[%s12 + $0x78] sm:$0xff]
    %v1804 = vld [vmem:[%s13] sm:$0x1]
    %v1805 = vld [vmem:[%s13 + $0x1] sm:$0x1]
    %v1806 = vld [vmem:[%s13 + $0x2] sm:$0x1]
    %v1807 = vld [vmem:[%s13 + $0x3] sm:$0x1]
    %v1812 = vperm.slane %v1804, 0
    %v1813 = vperm.slane %v1805, 0
    %v1814 = vperm.slane %v1806, 0
    %v1815 = vperm.slane %v1807, 0
    %v1821 = vsel %vm343, %v1784, 0
    %1823 = vmatpush.msra.mxu0 0.0
    %1824 = vmatpush.msra.mxu0 0.0
    %1825 = vmatpush.msra.mxu0 0.0
    %1826 = vmatpush.msra.mxu0 0.0
    %1827 = vmatpush.msra.mxu0 0.0
    %1828 = vmatpush.msra.mxu0 0.0
    %1829 = vmatpush.msra.mxu0 0.0
    %1830 = vmatpush.msra.mxu0 0.0
    %1831 = vmatpush.msra.mxu0 0.0
    %1832 = vmatpush.msra.mxu0 0.0
    %1833 = vmatpush.msra.mxu0 0.0
    %1834 = vmatpush.msra.mxu0 0.0
    %1835 = vmatpush.msra.mxu0 %v1791
    %1836 = vmatpush.msra.mxu0 %v1790
    %1837 = vmatpush.msra.mxu0 %v1789
    %1838 = vmatpush.msra.mxu0 %v1788
    %1839 = vmatmul.f32.gmra.mxu0 %v1821
    %v1840 = vpop.f32.mrf.mxu0
    %v1841 = vadd.f32 %v1812, %v1840
    %1842 = vdwg.mxu0
    %v1844 = vsel %vm343, %v1785, 0
    %1846 = vmatpush.msra.mxu0 0.0
    %1847 = vmatpush.msra.mxu0 0.0
    %1848 = vmatpush.msra.mxu0 0.0
    %1849 = vmatpush.msra.mxu0 0.0
    %1850 = vmatpush.msra.mxu0 0.0
    %1851 = vmatpush.msra.mxu0 0.0
    %1852 = vmatpush.msra.mxu0 0.0
    %1853 = vmatpush.msra.mxu0 0.0
    %1854 = vmatpush.msra.mxu0 0.0
    %1855 = vmatpush.msra.mxu0 0.0
    %1856 = vmatpush.msra.mxu0 0.0
    %1857 = vmatpush.msra.mxu0 0.0
    %1858 = vmatpush.msra.mxu0 %v1795
    %1859 = vmatpush.msra.mxu0 %v1794
    %1860 = vmatpush.msra.mxu0 %v1793
    %1861 = vmatpush.msra.mxu0 %v1792
    %1862 = vmatmul.f32.gmra.mxu0 %v1844
    %v1863 = vpop.f32.mrf.mxu0
    %v1864 = vadd.f32 %v1813, %v1863
    %1865 = vdwg.mxu0
    %v1867 = vsel %vm343, %v1786, 0
    %1869 = vmatpush.msra.mxu0 0.0
    %1870 = vmatpush.msra.mxu0 0.0
    %1871 = vmatpush.msra.mxu0 0.0
    %1872 = vmatpush.msra.mxu0 0.0
    %1873 = vmatpush.msra.mxu0 0.0
    %1874 = vmatpush.msra.mxu0 0.0
    %1875 = vmatpush.msra.mxu0 0.0
    %1876 = vmatpush.msra.mxu0 0.0
    %1877 = vmatpush.msra.mxu0 0.0
    %1878 = vmatpush.msra.mxu0 0.0
    %1879 = vmatpush.msra.mxu0 0.0
    %1880 = vmatpush.msra.mxu0 0.0
    %1881 = vmatpush.msra.mxu0 %v1799
    %1882 = vmatpush.msra.mxu0 %v1798
    %1883 = vmatpush.msra.mxu0 %v1797
    %1884 = vmatpush.msra.mxu0 %v1796
    %1885 = vmatmul.f32.gmra.mxu0 %v1867
    %v1886 = vpop.f32.mrf.mxu0
    %v1887 = vadd.f32 %v1814, %v1886
    %1888 = vdwg.mxu0
    %v1890 = vsel %vm343, %v1787, 0
    %1892 = vmatpush.msra.mxu0 0.0
    %1893 = vmatpush.msra.mxu0 0.0
    %1894 = vmatpush.msra.mxu0 0.0
    %1895 = vmatpush.msra.mxu0 0.0
    %1896 = vmatpush.msra.mxu0 0.0
    %1897 = vmatpush.msra.mxu0 0.0
    %1898 = vmatpush.msra.mxu0 0.0
    %1899 = vmatpush.msra.mxu0 0.0
    %1900 = vmatpush.msra.mxu0 0.0
    %1901 = vmatpush.msra.mxu0 0.0
    %1902 = vmatpush.msra.mxu0 0.0
    %1903 = vmatpush.msra.mxu0 0.0
    %1904 = vmatpush.msra.mxu0 %v1803
    %1905 = vmatpush.msra.mxu0 %v1802
    %1906 = vmatpush.msra.mxu0 %v1801
    %1907 = vmatpush.msra.mxu0 %v1800
    %1908 = vmatmul.f32.gmra.mxu0 %v1890
    %v1909 = vpop.f32.mrf.mxu0
    %v1910 = vadd.f32 %v1815, %v1909
    %1911 = vdwg.mxu0
    %v1912 = vmul.f32 %v1841, 0.5
    %v1913 = vmul.f32 %v1864, 0.5
    %v1914 = vmul.f32 %v1887, 0.5
    %v1915 = vmul.f32 %v1910, 0.5
    %v1916 = vmul.f32 %v1841, 0.044715
    %v1917 = vmul.f32 %v1864, 0.044715
    %v1918 = vmul.f32 %v1887, 0.044715
    %v1919 = vmul.f32 %v1910, 0.044715
    %v1920 = vmul.f32 %v1916, %v1841
    %v1921 = vmul.f32 %v1917, %v1864
    %v1922 = vmul.f32 %v1918, %v1887
    %v1923 = vmul.f32 %v1919, %v1910
    %v1924 = vmul.f32 %v1920, %v1841
    %v1925 = vmul.f32 %v1921, %v1864
    %v1926 = vmul.f32 %v1922, %v1887
    %v1927 = vmul.f32 %v1923, %v1910
    %v1928 = vadd.f32 %v1841, %v1924
    %v1929 = vadd.f32 %v1864, %v1925
    %v1930 = vadd.f32 %v1887, %v1926
    %v1931 = vadd.f32 %v1910, %v1927
    %v1932 = vmul.f32 %v1928, 0.7978846
    %v1933 = vmul.f32 %v1929, 0.7978846
    %v1934 = vmul.f32 %v1930, 0.7978846
    %v1935 = vmul.f32 %v1931, 0.7978846
    %v1936 = vtanh.pop %v1932
    %v1937 = vtanh.pop %v1933
    %v1938 = vtanh.pop %v1934
    %v1939 = vtanh.pop %v1935
    %v1940 = vadd.f32 %v1936, 1.0
    %v1941 = vadd.f32 %v1937, 1.0
    %v1942 = vadd.f32 %v1938, 1.0
    %v1943 = vadd.f32 %v1939, 1.0
    %v1944 = vmul.f32 %v1912, %v1940
    %v1945 = vmul.f32 %v1913, %v1941
    %v1946 = vmul.f32 %v1914, %v1942
    %v1947 = vmul.f32 %v1915, %v1943
    %v1948 = vld [vmem:[%s14] sm:$0xff]
    %v1949 = vld [vmem:[%s14 + $0x8] sm:$0xff]
    %v1950 = vld [vmem:[%s14 + $0x10] sm:$0xff]
    %v1951 = vld [vmem:[%s14 + $0x18] sm:$0xff]
    %v1952 = vld [vmem:[%s14 + $0x20] sm:$0xff]
    %v1953 = vld [vmem:[%s14 + $0x28] sm:$0xff]
    %v1954 = vld [vmem:[%s14 + $0x30] sm:$0xff]
    %v1955 = vld [vmem:[%s14 + $0x38] sm:$0xff]
    %v1956 = vld [vmem:[%s14 + $0x40] sm:$0xff]
    %v1957 = vld [vmem:[%s14 + $0x48] sm:$0xff]
    %v1958 = vld [vmem:[%s14 + $0x50] sm:$0xff]
    %v1959 = vld [vmem:[%s14 + $0x58] sm:$0xff]
    %v1960 = vld [vmem:[%s14 + $0x60] sm:$0xff]
    %v1961 = vld [vmem:[%s14 + $0x68] sm:$0xff]
    %v1962 = vld [vmem:[%s14 + $0x70] sm:$0xff]
    %v1963 = vld [vmem:[%s14 + $0x78] sm:$0xff]
    %v1964 = vld [vmem:[%s14 + $0x80] sm:$0xff]
    %v1965 = vld [vmem:[%s14 + $0x88] sm:$0xff]
    %v1966 = vld [vmem:[%s14 + $0x90] sm:$0xff]
    %v1967 = vld [vmem:[%s14 + $0x98] sm:$0xff]
    %v1968 = vld [vmem:[%s14 + $0xa0] sm:$0xff]
    %v1969 = vld [vmem:[%s14 + $0xa8] sm:$0xff]
    %v1970 = vld [vmem:[%s14 + $0xb0] sm:$0xff]
    %v1971 = vld [vmem:[%s14 + $0xb8] sm:$0xff]
    %v1972 = vld [vmem:[%s14 + $0xc0] sm:$0xff]
    %v1973 = vld [vmem:[%s14 + $0xc8] sm:$0xff]
    %v1974 = vld [vmem:[%s14 + $0xd0] sm:$0xff]
    %v1975 = vld [vmem:[%s14 + $0xd8] sm:$0xff]
    %v1976 = vld [vmem:[%s14 + $0xe0] sm:$0xff]
    %v1977 = vld [vmem:[%s14 + $0xe8] sm:$0xff]
    %v1978 = vld [vmem:[%s14 + $0xf0] sm:$0xff]
    %v1979 = vld [vmem:[%s14 + $0xf8] sm:$0xff]
    %vm1980 = vcmask 523264
    %v1982 = vsel %vm1980, %v1944, 0
    %1984 = vmatpush.msra.mxu0 0.0
    %1985 = vmatpush.msra.mxu0 0.0
    %1986 = vmatpush.msra.mxu0 0.0
    %1987 = vmatpush.msra.mxu0 0.0
    %1988 = vmatpush.msra.mxu0 0.0
    %1989 = vmatpush.msra.mxu0 0.0
    %1990 = vmatpush.msra.mxu0 0.0
    %1991 = vmatpush.msra.mxu0 0.0
    %1992 = vmatpush.msra.mxu0 %v1955
    %1993 = vmatpush.msra.mxu0 %v1954
    %1994 = vmatpush.msra.mxu0 %v1953
    %1995 = vmatpush.msra.mxu0 %v1952
    %1996 = vmatpush.msra.mxu0 %v1951
    %1997 = vmatpush.msra.mxu0 %v1950
    %1998 = vmatpush.msra.mxu0 %v1949
    %1999 = vmatpush.msra.mxu0 %v1948
    %2000 = vmatmul.f32.gmra.mxu0 %v1982
    %v2001 = vpop.f32.mrf.mxu0
    %v2002 = vadd.f32 0.0, %v2001
    %2003 = vdwg.mxu0
    %v2005 = vsel %vm1980, %v1945, 0
    %2007 = vmatpush.msra.mxu0 0.0
    %2008 = vmatpush.msra.mxu0 0.0
    %2009 = vmatpush.msra.mxu0 0.0
    %2010 = vmatpush.msra.mxu0 0.0
    %2011 = vmatpush.msra.mxu0 0.0
    %2012 = vmatpush.msra.mxu0 0.0
    %2013 = vmatpush.msra.mxu0 0.0
    %2014 = vmatpush.msra.mxu0 0.0
    %2015 = vmatpush.msra.mxu0 %v1963
    %2016 = vmatpush.msra.mxu0 %v1962
    %2017 = vmatpush.msra.mxu0 %v1961
    %2018 = vmatpush.msra.mxu0 %v1960
    %2019 = vmatpush.msra.mxu0 %v1959
    %2020 = vmatpush.msra.mxu0 %v1958
    %2021 = vmatpush.msra.mxu0 %v1957
    %2022 = vmatpush.msra.mxu0 %v1956
    %2023 = vmatmul.f32.gmra.mxu0 %v2005
    %v2024 = vpop.f32.mrf.mxu0
    %v2025 = vadd.f32 0.0, %v2024
    %2026 = vdwg.mxu0
    %v2028 = vsel %vm1980, %v1946, 0
    %2030 = vmatpush.msra.mxu0 0.0
    %2031 = vmatpush.msra.mxu0 0.0
    %2032 = vmatpush.msra.mxu0 0.0
    %2033 = vmatpush.msra.mxu0 0.0
    %2034 = vmatpush.msra.mxu0 0.0
    %2035 = vmatpush.msra.mxu0 0.0
    %2036 = vmatpush.msra.mxu0 0.0
    %2037 = vmatpush.msra.mxu0 0.0
    %2038 = vmatpush.msra.mxu0 %v1971
    %2039 = vmatpush.msra.mxu0 %v1970
    %2040 = vmatpush.msra.mxu0 %v1969
    %2041 = vmatpush.msra.mxu0 %v1968
    %2042 = vmatpush.msra.mxu0 %v1967
    %2043 = vmatpush.msra.mxu0 %v1966
    %2044 = vmatpush.msra.mxu0 %v1965
    %2045 = vmatpush.msra.mxu0 %v1964
    %2046 = vmatmul.f32.gmra.mxu0 %v2028
    %v2047 = vpop.f32.mrf.mxu0
    %v2048 = vadd.f32 0.0, %v2047
    %2049 = vdwg.mxu0
    %v2051 = vsel %vm1980, %v1947, 0
    %2053 = vmatpush.msra.mxu0 0.0
    %2054 = vmatpush.msra.mxu0 0.0
    %2055 = vmatpush.msra.mxu0 0.0
    %2056 = vmatpush.msra.mxu0 0.0
    %2057 = vmatpush.msra.mxu0 0.0
    %2058 = vmatpush.msra.mxu0 0.0
    %2059 = vmatpush.msra.mxu0 0.0
    %2060 = vmatpush.msra.mxu0 0.0
    %2061 = vmatpush.msra.mxu0 %v1979
    %2062 = vmatpush.msra.mxu0 %v1978
    %2063 = vmatpush.msra.mxu0 %v1977
    %2064 = vmatpush.msra.mxu0 %v1976
    %2065 = vmatpush.msra.mxu0 %v1975
    %2066 = vmatpush.msra.mxu0 %v1974
    %2067 = vmatpush.msra.mxu0 %v1973
    %2068 = vmatpush.msra.mxu0 %v1972
    %2069 = vmatmul.f32.gmra.mxu0 %v2051
    %v2070 = vpop.f32.mrf.mxu0
    %v2071 = vadd.f32 0.0, %v2070
    %2072 = vdwg.mxu0
    %v2073 = vadd.f32 %v1656, %v2002
    %v2074 = vadd.f32 %v1657, %v2025
    %v2075 = vadd.f32 %v1658, %v2048
    %v2076 = vadd.f32 %v1659, %v2071
    %v2077 = vld [vmem:[%s15] sm:$0x1]
    %v2078 = vld [vmem:[%s15 + $0x1] sm:$0x1]
    %v2079 = vld [vmem:[%s15 + $0x2] sm:$0x1]
    %v2080 = vld [vmem:[%s15 + $0x3] sm:$0x1]
    %v2085 = vperm.slane %v2077, 0
    %v2086 = vperm.slane %v2078, 0
    %v2087 = vperm.slane %v2079, 0
    %v2088 = vperm.slane %v2080, 0
    %v2093 = vadd.f32 %v2073, %v2085
    %v2094 = vadd.f32 %v2074, %v2086
    %v2095 = vadd.f32 %v2075, %v2087
    %v2096 = vadd.f32 %v2076, %v2088
    %s2097 = scalar_lea.vmem %s3, 4
    %v2098 = vld [vmem:[%s2097] sm:$0x1]
    %v2099 = vld [vmem:[%s2097 + $0x1] sm:$0x1]
    %v2100 = vld [vmem:[%s2097 + $0x2] sm:$0x1]
    %v2101 = vld [vmem:[%s2097 + $0x3] sm:$0x1]
    %s2102 = scalar_lea.vmem %s4, 4
    %v2103 = vld [vmem:[%s2102] sm:$0x1]
    %v2104 = vld [vmem:[%s2102 + $0x1] sm:$0x1]
    %v2105 = vld [vmem:[%s2102 + $0x2] sm:$0x1]
    %v2106 = vld [vmem:[%s2102 + $0x3] sm:$0x1]
    %v2107 = vsel %vm199, %v2093, 0.0
    %2108 = vadd.xlane.f32.xlu0 %v2107
    %v2109 = vpop.xlane.xlu0 %2108
    %v2110 = vsel %vm199, %v2094, 0.0
    %2111 = vadd.xlane.f32.xlu0 %v2110
    %v2112 = vpop.xlane.xlu0 %2111
    %v2113 = vsel %vm199, %v2095, 0.0
    %2114 = vadd.xlane.f32.xlu0 %v2113
    %v2115 = vpop.xlane.xlu0 %2114
    %v2116 = vsel %vm199, %v2096, 0.0
    %2117 = vadd.xlane.f32.xlu0 %v2116
    %v2118 = vpop.xlane.xlu0 %2117
    %v2119 = vmul.f32 %v2109, %v218
    %v2120 = vmul.f32 %v2112, %v218
    %v2121 = vmul.f32 %v2115, %v218
    %v2122 = vmul.f32 %v2118, %v218
    %v2123 = vsub.f32 %v2093, %v2119
    %v2124 = vsub.f32 %v2094, %v2120
    %v2125 = vsub.f32 %v2095, %v2121
    %v2126 = vsub.f32 %v2096, %v2122
    %v2127 = vmul.f32 %v2123, %v2123
    %v2128 = vmul.f32 %v2124, %v2124
    %v2129 = vmul.f32 %v2125, %v2125
    %v2130 = vmul.f32 %v2126, %v2126
    %v2131 = vsel %vm199, %v2127, 0.0
    %2132 = vadd.xlane.f32.xlu0 %v2131
    %v2133 = vpop.xlane.xlu0 %2132
    %v2134 = vsel %vm199, %v2128, 0.0
    %2135 = vadd.xlane.f32.xlu0 %v2134
    %v2136 = vpop.xlane.xlu0 %2135
    %v2137 = vsel %vm199, %v2129, 0.0
    %2138 = vadd.xlane.f32.xlu0 %v2137
    %v2139 = vpop.xlane.xlu0 %2138
    %v2140 = vsel %vm199, %v2130, 0.0
    %2141 = vadd.xlane.f32.xlu0 %v2140
    %v2142 = vpop.xlane.xlu0 %2141
    %v2143 = vmul.f32 %v2133, %v218
    %v2144 = vmul.f32 %v2136, %v218
    %v2145 = vmul.f32 %v2139, %v218
    %v2146 = vmul.f32 %v2142, %v218
    %v2147 = vadd.f32 %v2143, 1e-05
    %v2148 = vadd.f32 %v2144, 1e-05
    %v2149 = vadd.f32 %v2145, 1e-05
    %v2150 = vadd.f32 %v2146, 1e-05
    %v2151 = vrsqrt.pop %v2147
    %v2152 = vmul.f32 %v2151, %v2147
    %v2153 = vmul.f32 %v2152, %v2151
    %v2154 = vmul.f32 0.5, %v2153
    %v2155 = vsub.f32 1.5, %v2154
    %v2156 = vmul.f32 %v2151, %v2155
    %vm2157 = vweird.f32 %v2147
    %vm2158 = vweird.f32 %v2151
    %vm2159 = vmor %vm2157, %vm2158
    %v2160 = vsel %vm2159, %v2151, %v2156
    %v2161 = vrsqrt.pop %v2148
    %v2162 = vmul.f32 %v2161, %v2148
    %v2163 = vmul.f32 %v2162, %v2161
    %v2164 = vmul.f32 0.5, %v2163
    %v2165 = vsub.f32 1.5, %v2164
    %v2166 = vmul.f32 %v2161, %v2165
    %vm2167 = vweird.f32 %v2148
    %vm2168 = vweird.f32 %v2161
    %vm2169 = vmor %vm2167, %vm2168
    %v2170 = vsel %vm2169, %v2161, %v2166
    %v2171 = vrsqrt.pop %v2149
    %v2172 = vmul.f32 %v2171, %v2149
    %v2173 = vmul.f32 %v2172, %v2171
    %v2174 = vmul.f32 0.5, %v2173
    %v2175 = vsub.f32 1.5, %v2174
    %v2176 = vmul.f32 %v2171, %v2175
    %vm2177 = vweird.f32 %v2149
    %vm2178 = vweird.f32 %v2171
    %vm2179 = vmor %vm2177, %vm2178
    %v2180 = vsel %vm2179, %v2171, %v2176
    %v2181 = vrsqrt.pop %v2150
    %v2182 = vmul.f32 %v2181, %v2150
    %v2183 = vmul.f32 %v2182, %v2181
    %v2184 = vmul.f32 0.5, %v2183
    %v2185 = vsub.f32 1.5, %v2184
    %v2186 = vmul.f32 %v2181, %v2185
    %vm2187 = vweird.f32 %v2150
    %vm2188 = vweird.f32 %v2181
    %vm2189 = vmor %vm2187, %vm2188
    %v2190 = vsel %vm2189, %v2181, %v2186
    %v2191 = vmul.f32 %v2123, %v2160
    %v2192 = vmul.f32 %v2124, %v2170
    %v2193 = vmul.f32 %v2125, %v2180
    %v2194 = vmul.f32 %v2126, %v2190
    %v2199 = vperm.slane %v2098, 0
    %v2200 = vperm.slane %v2099, 0
    %v2201 = vperm.slane %v2100, 0
    %v2202 = vperm.slane %v2101, 0
    %v2207 = vmul.f32 %v2191, %v2199
    %v2208 = vmul.f32 %v2192, %v2200
    %v2209 = vmul.f32 %v2193, %v2201
    %v2210 = vmul.f32 %v2194, %v2202
    %v2215 = vperm.slane %v2103, 0
    %v2216 = vperm.slane %v2104, 0
    %v2217 = vperm.slane %v2105, 0
    %v2218 = vperm.slane %v2106, 0
    %v2223 = vadd.f32 %v2207, %v2215
    %v2224 = vadd.f32 %v2208, %v2216
    %v2225 = vadd.f32 %v2209, %v2217
    %v2226 = vadd.f32 %v2210, %v2218
    %s2227 = scalar_lea.vmem %s5, 256
    %v2228 = vld [vmem:[%s2227] sm:$0xff]
    %v2229 = vld [vmem:[%s2227 + $0x8] sm:$0xff]
    %v2230 = vld [vmem:[%s2227 + $0x10] sm:$0xff]
    %v2231 = vld [vmem:[%s2227 + $0x18] sm:$0xff]
    %v2232 = vld [vmem:[%s2227 + $0x20] sm:$0xff]
    %v2233 = vld [vmem:[%s2227 + $0x28] sm:$0xff]
    %v2234 = vld [vmem:[%s2227 + $0x30] sm:$0xff]
    %v2235 = vld [vmem:[%s2227 + $0x38] sm:$0xff]
    %v2236 = vld [vmem:[%s2227 + $0x40] sm:$0xff]
    %v2237 = vld [vmem:[%s2227 + $0x48] sm:$0xff]
    %v2238 = vld [vmem:[%s2227 + $0x50] sm:$0xff]
    %v2239 = vld [vmem:[%s2227 + $0x58] sm:$0xff]
    %v2240 = vld [vmem:[%s2227 + $0x60] sm:$0xff]
    %v2241 = vld [vmem:[%s2227 + $0x68] sm:$0xff]
    %v2242 = vld [vmem:[%s2227 + $0x70] sm:$0xff]
    %v2243 = vld [vmem:[%s2227 + $0x78] sm:$0xff]
    %v2245 = vsel %vm343, %v2223, 0
    %2247 = vmatpush.msra.mxu0 0.0
    %2248 = vmatpush.msra.mxu0 0.0
    %2249 = vmatpush.msra.mxu0 0.0
    %2250 = vmatpush.msra.mxu0 0.0
    %2251 = vmatpush.msra.mxu0 0.0
    %2252 = vmatpush.msra.mxu0 0.0
    %2253 = vmatpush.msra.mxu0 0.0
    %2254 = vmatpush.msra.mxu0 0.0
    %2255 = vmatpush.msra.mxu0 0.0
    %2256 = vmatpush.msra.mxu0 0.0
    %2257 = vmatpush.msra.mxu0 0.0
    %2258 = vmatpush.msra.mxu0 0.0
    %2259 = vmatpush.msra.mxu0 %v2231
    %2260 = vmatpush.msra.mxu0 %v2230
    %2261 = vmatpush.msra.mxu0 %v2229
    %2262 = vmatpush.msra.mxu0 %v2228
    %2263 = vmatmul.f32.gmra.mxu0 %v2245
    %v2264 = vpop.f32.mrf.mxu0
    %v2265 = vadd.f32 0.0, %v2264
    %2266 = vdwg.mxu0
    %v2268 = vsel %vm343, %v2224, 0
    %2270 = vmatpush.msra.mxu0 0.0
    %2271 = vmatpush.msra.mxu0 0.0
    %2272 = vmatpush.msra.mxu0 0.0
    %2273 = vmatpush.msra.mxu0 0.0
    %2274 = vmatpush.msra.mxu0 0.0
    %2275 = vmatpush.msra.mxu0 0.0
    %2276 = vmatpush.msra.mxu0 0.0
    %2277 = vmatpush.msra.mxu0 0.0
    %2278 = vmatpush.msra.mxu0 0.0
    %2279 = vmatpush.msra.mxu0 0.0
    %2280 = vmatpush.msra.mxu0 0.0
    %2281 = vmatpush.msra.mxu0 0.0
    %2282 = vmatpush.msra.mxu0 %v2235
    %2283 = vmatpush.msra.mxu0 %v2234
    %2284 = vmatpush.msra.mxu0 %v2233
    %2285 = vmatpush.msra.mxu0 %v2232
    %2286 = vmatmul.f32.gmra.mxu0 %v2268
    %v2287 = vpop.f32.mrf.mxu0
    %v2288 = vadd.f32 0.0, %v2287
    %2289 = vdwg.mxu0
    %v2291 = vsel %vm343, %v2225, 0
    %2293 = vmatpush.msra.mxu0 0.0
    %2294 = vmatpush.msra.mxu0 0.0
    %2295 = vmatpush.msra.mxu0 0.0
    %2296 = vmatpush.msra.mxu0 0.0
    %2297 = vmatpush.msra.mxu0 0.0
    %2298 = vmatpush.msra.mxu0 0.0
    %2299 = vmatpush.msra.mxu0 0.0
    %2300 = vmatpush.msra.mxu0 0.0
    %2301 = vmatpush.msra.mxu0 0.0
    %2302 = vmatpush.msra.mxu0 0.0
    %2303 = vmatpush.msra.mxu0 0.0
    %2304 = vmatpush.msra.mxu0 0.0
    %2305 = vmatpush.msra.mxu0 %v2239
    %2306 = vmatpush.msra.mxu0 %v2238
    %2307 = vmatpush.msra.mxu0 %v2237
    %2308 = vmatpush.msra.mxu0 %v2236
    %2309 = vmatmul.f32.gmra.mxu0 %v2291
    %v2310 = vpop.f32.mrf.mxu0
    %v2311 = vadd.f32 0.0, %v2310
    %2312 = vdwg.mxu0
    %v2314 = vsel %vm343, %v2226, 0
    %2316 = vmatpush.msra.mxu0 0.0
    %2317 = vmatpush.msra.mxu0 0.0
    %2318 = vmatpush.msra.mxu0 0.0
    %2319 = vmatpush.msra.mxu0 0.0
    %2320 = vmatpush.msra.mxu0 0.0
    %2321 = vmatpush.msra.mxu0 0.0
    %2322 = vmatpush.msra.mxu0 0.0
    %2323 = vmatpush.msra.mxu0 0.0
    %2324 = vmatpush.msra.mxu0 0.0
    %2325 = vmatpush.msra.mxu0 0.0
    %2326 = vmatpush.msra.mxu0 0.0
    %2327 = vmatpush.msra.mxu0 0.0
    %2328 = vmatpush.msra.mxu0 %v2243
    %2329 = vmatpush.msra.mxu0 %v2242
    %2330 = vmatpush.msra.mxu0 %v2241
    %2331 = vmatpush.msra.mxu0 %v2240
    %2332 = vmatmul.f32.gmra.mxu0 %v2314
    %v2333 = vpop.f32.mrf.mxu0
    %v2334 = vadd.f32 0.0, %v2333
    %2335 = vdwg.mxu0
    %s2336 = scalar_lea.vmem %s6, 256
    %v2337 = vld [vmem:[%s2336] sm:$0xff]
    %v2338 = vld [vmem:[%s2336 + $0x8] sm:$0xff]
    %v2339 = vld [vmem:[%s2336 + $0x10] sm:$0xff]
    %v2340 = vld [vmem:[%s2336 + $0x18] sm:$0xff]
    %v2341 = vld [vmem:[%s2336 + $0x20] sm:$0xff]
    %v2342 = vld [vmem:[%s2336 + $0x28] sm:$0xff]
    %v2343 = vld [vmem:[%s2336 + $0x30] sm:$0xff]
    %v2344 = vld [vmem:[%s2336 + $0x38] sm:$0xff]
    %v2345 = vld [vmem:[%s2336 + $0x40] sm:$0xff]
    %v2346 = vld [vmem:[%s2336 + $0x48] sm:$0xff]
    %v2347 = vld [vmem:[%s2336 + $0x50] sm:$0xff]
    %v2348 = vld [vmem:[%s2336 + $0x58] sm:$0xff]
    %v2349 = vld [vmem:[%s2336 + $0x60] sm:$0xff]
    %v2350 = vld [vmem:[%s2336 + $0x68] sm:$0xff]
    %v2351 = vld [vmem:[%s2336 + $0x70] sm:$0xff]
    %v2352 = vld [vmem:[%s2336 + $0x78] sm:$0xff]
    %2353 = vmatpush.msra.mxu0 0.0
    %2354 = vmatpush.msra.mxu0 0.0
    %2355 = vmatpush.msra.mxu0 0.0
    %2356 = vmatpush.msra.mxu0 0.0
    %2357 = vmatpush.msra.mxu0 0.0
    %2358 = vmatpush.msra.mxu0 0.0
    %2359 = vmatpush.msra.mxu0 0.0
    %2360 = vmatpush.msra.mxu0 0.0
    %2361 = vmatpush.msra.mxu0 0.0
    %2362 = vmatpush.msra.mxu0 0.0
    %2363 = vmatpush.msra.mxu0 0.0
    %2364 = vmatpush.msra.mxu0 0.0
    %2365 = vmatpush.msra.mxu0 %v2340
    %2366 = vmatpush.msra.mxu0 %v2339
    %2367 = vmatpush.msra.mxu0 %v2338
    %2368 = vmatpush.msra.mxu0 %v2337
    %2369 = vmatmul.f32.gmra.mxu0 %v2245
    %v2370 = vpop.f32.mrf.mxu0
    %v2371 = vadd.f32 0.0, %v2370
    %2372 = vdwg.mxu0
    %2373 = vmatpush.msra.mxu0 0.0
    %2374 = vmatpush.msra.mxu0 0.0
    %2375 = vmatpush.msra.mxu0 0.0
    %2376 = vmatpush.msra.mxu0 0.0
    %2377 = vmatpush.msra.mxu0 0.0
    %2378 = vmatpush.msra.mxu0 0.0
    %2379 = vmatpush.msra.mxu0 0.0
    %2380 = vmatpush.msra.mxu0 0.0
    %2381 = vmatpush.msra.mxu0 0.0
    %2382 = vmatpush.msra.mxu0 0.0
    %2383 = vmatpush.msra.mxu0 0.0
    %2384 = vmatpush.msra.mxu0 0.0
    %2385 = vmatpush.msra.mxu0 %v2344
    %2386 = vmatpush.msra.mxu0 %v2343
    %2387 = vmatpush.msra.mxu0 %v2342
    %2388 = vmatpush.msra.mxu0 %v2341
    %2389 = vmatmul.f32.gmra.mxu0 %v2268
    %v2390 = vpop.f32.mrf.mxu0
    %v2391 = vadd.f32 0.0, %v2390
    %2392 = vdwg.mxu0
    %2393 = vmatpush.msra.mxu0 0.0
    %2394 = vmatpush.msra.mxu0 0.0
    %2395 = vmatpush.msra.mxu0 0.0
    %2396 = vmatpush.msra.mxu0 0.0
    %2397 = vmatpush.msra.mxu0 0.0
    %2398 = vmatpush.msra.mxu0 0.0
    %2399 = vmatpush.msra.mxu0 0.0
    %2400 = vmatpush.msra.mxu0 0.0
    %2401 = vmatpush.msra.mxu0 0.0
    %2402 = vmatpush.msra.mxu0 0.0
    %2403 = vmatpush.msra.mxu0 0.0
    %2404 = vmatpush.msra.mxu0 0.0
    %2405 = vmatpush.msra.mxu0 %v2348
    %2406 = vmatpush.msra.mxu0 %v2347
    %2407 = vmatpush.msra.mxu0 %v2346
    %2408 = vmatpush.msra.mxu0 %v2345
    %2409 = vmatmul.f32.gmra.mxu0 %v2291
    %v2410 = vpop.f32.mrf.mxu0
    %v2411 = vadd.f32 0.0, %v2410
    %2412 = vdwg.mxu0
    %2413 = vmatpush.msra.mxu0 0.0
    %2414 = vmatpush.msra.mxu0 0.0
    %2415 = vmatpush.msra.mxu0 0.0
    %2416 = vmatpush.msra.mxu0 0.0
    %2417 = vmatpush.msra.mxu0 0.0
    %2418 = vmatpush.msra.mxu0 0.0
    %2419 = vmatpush.msra.mxu0 0.0
    %2420 = vmatpush.msra.mxu0 0.0
    %2421 = vmatpush.msra.mxu0 0.0
    %2422 = vmatpush.msra.mxu0 0.0
    %2423 = vmatpush.msra.mxu0 0.0
    %2424 = vmatpush.msra.mxu0 0.0
    %2425 = vmatpush.msra.mxu0 %v2352
    %2426 = vmatpush.msra.mxu0 %v2351
    %2427 = vmatpush.msra.mxu0 %v2350
    %2428 = vmatpush.msra.mxu0 %v2349
    %2429 = vmatmul.f32.gmra.mxu0 %v2314
    %v2430 = vpop.f32.mrf.mxu0
    %v2431 = vadd.f32 0.0, %v2430
    %2432 = vdwg.mxu0
    %s2433 = scalar_lea.vmem %s7, 256
    %v2434 = vld [vmem:[%s2433] sm:$0xff]
    %v2435 = vld [vmem:[%s2433 + $0x8] sm:$0xff]
    %v2436 = vld [vmem:[%s2433 + $0x10] sm:$0xff]
    %v2437 = vld [vmem:[%s2433 + $0x18] sm:$0xff]
    %v2438 = vld [vmem:[%s2433 + $0x20] sm:$0xff]
    %v2439 = vld [vmem:[%s2433 + $0x28] sm:$0xff]
    %v2440 = vld [vmem:[%s2433 + $0x30] sm:$0xff]
    %v2441 = vld [vmem:[%s2433 + $0x38] sm:$0xff]
    %v2442 = vld [vmem:[%s2433 + $0x40] sm:$0xff]
    %v2443 = vld [vmem:[%s2433 + $0x48] sm:$0xff]
    %v2444 = vld [vmem:[%s2433 + $0x50] sm:$0xff]
    %v2445 = vld [vmem:[%s2433 + $0x58] sm:$0xff]
    %v2446 = vld [vmem:[%s2433 + $0x60] sm:$0xff]
    %v2447 = vld [vmem:[%s2433 + $0x68] sm:$0xff]
    %v2448 = vld [vmem:[%s2433 + $0x70] sm:$0xff]
    %v2449 = vld [vmem:[%s2433 + $0x78] sm:$0xff]
    %2450 = vmatpush.msra.mxu0 0.0
    %2451 = vmatpush.msra.mxu0 0.0
    %2452 = vmatpush.msra.mxu0 0.0
    %2453 = vmatpush.msra.mxu0 0.0
    %2454 = vmatpush.msra.mxu0 0.0
    %2455 = vmatpush.msra.mxu0 0.0
    %2456 = vmatpush.msra.mxu0 0.0
    %2457 = vmatpush.msra.mxu0 0.0
    %2458 = vmatpush.msra.mxu0 0.0
    %2459 = vmatpush.msra.mxu0 0.0
    %2460 = vmatpush.msra.mxu0 0.0
    %2461 = vmatpush.msra.mxu0 0.0
    %2462 = vmatpush.msra.mxu0 %v2437
    %2463 = vmatpush.msra.mxu0 %v2436
    %2464 = vmatpush.msra.mxu0 %v2435
    %2465 = vmatpush.msra.mxu0 %v2434
    %2466 = vmatmul.f32.gmra.mxu0 %v2245
    %v2467 = vpop.f32.mrf.mxu0
    %v2468 = vadd.f32 0.0, %v2467
    %2469 = vdwg.mxu0
    %2470 = vmatpush.msra.mxu0 0.0
    %2471 = vmatpush.msra.mxu0 0.0
    %2472 = vmatpush.msra.mxu0 0.0
    %2473 = vmatpush.msra.mxu0 0.0
    %2474 = vmatpush.msra.mxu0 0.0
    %2475 = vmatpush.msra.mxu0 0.0
    %2476 = vmatpush.msra.mxu0 0.0
    %2477 = vmatpush.msra.mxu0 0.0
    %2478 = vmatpush.msra.mxu0 0.0
    %2479 = vmatpush.msra.mxu0 0.0
    %2480 = vmatpush.msra.mxu0 0.0
    %2481 = vmatpush.msra.mxu0 0.0
    %2482 = vmatpush.msra.mxu0 %v2441
    %2483 = vmatpush.msra.mxu0 %v2440
    %2484 = vmatpush.msra.mxu0 %v2439
    %2485 = vmatpush.msra.mxu0 %v2438
    %2486 = vmatmul.f32.gmra.mxu0 %v2268
    %v2487 = vpop.f32.mrf.mxu0
    %v2488 = vadd.f32 0.0, %v2487
    %2489 = vdwg.mxu0
    %2490 = vmatpush.msra.mxu0 0.0
    %2491 = vmatpush.msra.mxu0 0.0
    %2492 = vmatpush.msra.mxu0 0.0
    %2493 = vmatpush.msra.mxu0 0.0
    %2494 = vmatpush.msra.mxu0 0.0
    %2495 = vmatpush.msra.mxu0 0.0
    %2496 = vmatpush.msra.mxu0 0.0
    %2497 = vmatpush.msra.mxu0 0.0
    %2498 = vmatpush.msra.mxu0 0.0
    %2499 = vmatpush.msra.mxu0 0.0
    %2500 = vmatpush.msra.mxu0 0.0
    %2501 = vmatpush.msra.mxu0 0.0
    %2502 = vmatpush.msra.mxu0 %v2445
    %2503 = vmatpush.msra.mxu0 %v2444
    %2504 = vmatpush.msra.mxu0 %v2443
    %2505 = vmatpush.msra.mxu0 %v2442
    %2506 = vmatmul.f32.gmra.mxu0 %v2291
    %v2507 = vpop.f32.mrf.mxu0
    %v2508 = vadd.f32 0.0, %v2507
    %2509 = vdwg.mxu0
    %2510 = vmatpush.msra.mxu0 0.0
    %2511 = vmatpush.msra.mxu0 0.0
    %2512 = vmatpush.msra.mxu0 0.0
    %2513 = vmatpush.msra.mxu0 0.0
    %2514 = vmatpush.msra.mxu0 0.0
    %2515 = vmatpush.msra.mxu0 0.0
    %2516 = vmatpush.msra.mxu0 0.0
    %2517 = vmatpush.msra.mxu0 0.0
    %2518 = vmatpush.msra.mxu0 0.0
    %2519 = vmatpush.msra.mxu0 0.0
    %2520 = vmatpush.msra.mxu0 0.0
    %2521 = vmatpush.msra.mxu0 0.0
    %2522 = vmatpush.msra.mxu0 %v2449
    %2523 = vmatpush.msra.mxu0 %v2448
    %2524 = vmatpush.msra.mxu0 %v2447
    %2525 = vmatpush.msra.mxu0 %v2446
    %2526 = vmatmul.f32.gmra.mxu0 %v2314
    %v2527 = vpop.f32.mrf.mxu0
    %v2528 = vadd.f32 0.0, %v2527
    %2529 = vdwg.mxu0
    %v2531 = vsel %vm628, %v2265, 0
    %v2534 = vsel %vm628, %v2371, 0
    %2536 = vmatpush.xpose.msra.mxu0 0.0
    %2537 = vmatpush.xpose.msra.mxu0 0.0
    %2538 = vmatpush.xpose.msra.mxu0 0.0
    %2539 = vmatpush.xpose.msra.mxu0 0.0
    %2540 = vmatpush.xpose.msra.mxu0 0.0
    %2541 = vmatpush.xpose.msra.mxu0 0.0
    %2542 = vmatpush.xpose.msra.mxu0 0.0
    %2543 = vmatpush.xpose.msra.mxu0 0.0
    %2544 = vmatpush.xpose.msra.mxu0 0.0
    %2545 = vmatpush.xpose.msra.mxu0 0.0
    %2546 = vmatpush.xpose.msra.mxu0 0.0
    %2547 = vmatpush.xpose.msra.mxu0 0.0
    %2548 = vmatpush.xpose.msra.mxu0 0.0
    %2549 = vmatpush.xpose.msra.mxu0 0.0
    %2550 = vmatpush.xpose.msra.mxu0 0.0
    %2551 = vmatpush.xpose.msra.mxu0 %v2534
    %2552 = vmatmul.f32.gmra.mxu0 %v2531
    %v2553 = vpop.f32.mrf.mxu0
    %v2554 = vadd.f32 0.0, %v2553
    %2555 = vdwg.mxu0
    %v2557 = vsel %vm628, %v2288, 0
    %v2560 = vsel %vm628, %v2391, 0
    %2562 = vmatpush.xpose.msra.mxu0 0.0
    %2563 = vmatpush.xpose.msra.mxu0 0.0
    %2564 = vmatpush.xpose.msra.mxu0 0.0
    %2565 = vmatpush.xpose.msra.mxu0 0.0
    %2566 = vmatpush.xpose.msra.mxu0 0.0
    %2567 = vmatpush.xpose.msra.mxu0 0.0
    %2568 = vmatpush.xpose.msra.mxu0 0.0
    %2569 = vmatpush.xpose.msra.mxu0 0.0
    %2570 = vmatpush.xpose.msra.mxu0 0.0
    %2571 = vmatpush.xpose.msra.mxu0 0.0
    %2572 = vmatpush.xpose.msra.mxu0 0.0
    %2573 = vmatpush.xpose.msra.mxu0 0.0
    %2574 = vmatpush.xpose.msra.mxu0 0.0
    %2575 = vmatpush.xpose.msra.mxu0 0.0
    %2576 = vmatpush.xpose.msra.mxu0 0.0
    %2577 = vmatpush.xpose.msra.mxu0 %v2560
    %2578 = vmatmul.f32.gmra.mxu0 %v2557
    %v2579 = vpop.f32.mrf.mxu0
    %v2580 = vadd.f32 0.0, %v2579
    %2581 = vdwg.mxu0
    %v2583 = vsel %vm628, %v2311, 0
    %v2586 = vsel %vm628, %v2411, 0
    %2588 = vmatpush.xpose.msra.mxu0 0.0
    %2589 = vmatpush.xpose.msra.mxu0 0.0
    %2590 = vmatpush.xpose.msra.mxu0 0.0
    %2591 = vmatpush.xpose.msra.mxu0 0.0
    %2592 = vmatpush.xpose.msra.mxu0 0.0
    %2593 = vmatpush.xpose.msra.mxu0 0.0
    %2594 = vmatpush.xpose.msra.mxu0 0.0
    %2595 = vmatpush.xpose.msra.mxu0 0.0
    %2596 = vmatpush.xpose.msra.mxu0 0.0
    %2597 = vmatpush.xpose.msra.mxu0 0.0
    %2598 = vmatpush.xpose.msra.mxu0 0.0
    %2599 = vmatpush.xpose.msra.mxu0 0.0
    %2600 = vmatpush.xpose.msra.mxu0 0.0
    %2601 = vmatpush.xpose.msra.mxu0 0.0
    %2602 = vmatpush.xpose.msra.mxu0 0.0
    %2603 = vmatpush.xpose.msra.mxu0 %v2586
    %2604 = vmatmul.f32.gmra.mxu0 %v2583
    %v2605 = vpop.f32.mrf.mxu0
    %v2606 = vadd.f32 0.0, %v2605
    %2607 = vdwg.mxu0
    %v2609 = vsel %vm628, %v2334, 0
    %v2612 = vsel %vm628, %v2431, 0
    %2614 = vmatpush.xpose.msra.mxu0 0.0
    %2615 = vmatpush.xpose.msra.mxu0 0.0
    %2616 = vmatpush.xpose.msra.mxu0 0.0
    %2617 = vmatpush.xpose.msra.mxu0 0.0
    %2618 = vmatpush.xpose.msra.mxu0 0.0
    %2619 = vmatpush.xpose.msra.mxu0 0.0
    %2620 = vmatpush.xpose.msra.mxu0 0.0
    %2621 = vmatpush.xpose.msra.mxu0 0.0
    %2622 = vmatpush.xpose.msra.mxu0 0.0
    %2623 = vmatpush.xpose.msra.mxu0 0.0
    %2624 = vmatpush.xpose.msra.mxu0 0.0
    %2625 = vmatpush.xpose.msra.mxu0 0.0
    %2626 = vmatpush.xpose.msra.mxu0 0.0
    %2627 = vmatpush.xpose.msra.mxu0 0.0
    %2628 = vmatpush.xpose.msra.mxu0 0.0
    %2629 = vmatpush.xpose.msra.mxu0 %v2612
    %2630 = vmatmul.f32.gmra.mxu0 %v2609
    %v2631 = vpop.f32.mrf.mxu0
    %v2632 = vadd.f32 0.0, %v2631
    %2633 = vdwg.mxu0
    %v2634 = vmul.f32 %v2554, 0.25
    %v2635 = vmul.f32 %v2580, 0.25
    %v2636 = vmul.f32 %v2606, 0.25
    %v2637 = vmul.f32 %v2632, 0.25
    %v2638 = vsel %vm737, %v2634, -inf
    %2639 = vmax.xlane.f32.xlu0 %v2638
    %v2640 = vpop.xlane.xlu0 %2639
    %v2641 = vsel %vm737, %v2635, -inf
    %2642 = vmax.xlane.f32.xlu0 %v2641
    %v2643 = vpop.xlane.xlu0 %2642
    %v2644 = vsel %vm737, %v2636, -inf
    %2645 = vmax.xlane.f32.xlu0 %v2644
    %v2646 = vpop.xlane.xlu0 %2645
    %v2647 = vsel %vm737, %v2637, -inf
    %2648 = vmax.xlane.f32.xlu0 %v2647
    %v2649 = vpop.xlane.xlu0 %2648
    %v2650 = vsub.f32 %v2634, %v2640
    %v2651 = vsub.f32 %v2635, %v2643
    %v2652 = vsub.f32 %v2636, %v2646
    %v2653 = vsub.f32 %v2637, %v2649
    %v2654 = vmul.f32 %v2650, 1.442695
    %v2655 = vpow.pop %v2654
    %v2656 = vmul.f32 %v2651, 1.442695
    %v2657 = vpow.pop %v2656
    %v2658 = vmul.f32 %v2652, 1.442695
    %v2659 = vpow.pop %v2658
    %v2660 = vmul.f32 %v2653, 1.442695
    %v2661 = vpow.pop %v2660
    %v2662 = vsel %vm737, %v2655, 0.0
    %2663 = vadd.xlane.f32.xlu0 %v2662
    %v2664 = vpop.xlane.xlu0 %2663
    %v2665 = vsel %vm737, %v2657, 0.0
    %2666 = vadd.xlane.f32.xlu0 %v2665
    %v2667 = vpop.xlane.xlu0 %2666
    %v2668 = vsel %vm737, %v2659, 0.0
    %2669 = vadd.xlane.f32.xlu0 %v2668
    %v2670 = vpop.xlane.xlu0 %2669
    %v2671 = vsel %vm737, %v2661, 0.0
    %2672 = vadd.xlane.f32.xlu0 %v2671
    %v2673 = vpop.xlane.xlu0 %2672
    %v2674 = vrcp.pop %v2664
    %v2675 = vrcp.pop %v2667
    %v2676 = vrcp.pop %v2670
    %v2677 = vrcp.pop %v2673
    %v2678 = vmul.f32 %v2655, %v2674
    %v2679 = vmul.f32 %v2657, %v2675
    %v2680 = vmul.f32 %v2659, %v2676
    %v2681 = vmul.f32 %v2661, %v2677
    %v2683 = vsel %vm782, %v2678, 0
    %v2686 = vsel %vm786, %v2468, 0
    %2688 = vmatpush.msra.mxu0 0.0
    %2689 = vmatpush.msra.mxu0 0.0
    %2690 = vmatpush.msra.mxu0 0.0
    %2691 = vmatpush.msra.mxu0 0.0
    %2692 = vmatpush.msra.mxu0 0.0
    %2693 = vmatpush.msra.mxu0 0.0
    %2694 = vmatpush.msra.mxu0 0.0
    %2695 = vmatpush.msra.mxu0 0.0
    %2696 = vmatpush.msra.mxu0 0.0
    %2697 = vmatpush.msra.mxu0 0.0
    %2698 = vmatpush.msra.mxu0 0.0
    %2699 = vmatpush.msra.mxu0 0.0
    %2700 = vmatpush.msra.mxu0 0.0
    %2701 = vmatpush.msra.mxu0 0.0
    %2702 = vmatpush.msra.mxu0 0.0
    %2703 = vmatpush.msra.mxu0 %v2686
    %2704 = vmatmul.f32.gmra.mxu0 %v2683
    %v2705 = vpop.f32.mrf.mxu0
    %v2706 = vadd.f32 0.0, %v2705
    %2707 = vdwg.mxu0
    %v2709 = vsel %vm782, %v2679, 0
    %v2712 = vsel %vm786, %v2488, 0
    %2714 = vmatpush.msra.mxu0 0.0
    %2715 = vmatpush.msra.mxu0 0.0
    %2716 = vmatpush.msra.mxu0 0.0
    %2717 = vmatpush.msra.mxu0 0.0
    %2718 = vmatpush.msra.mxu0 0.0
    %2719 = vmatpush.msra.mxu0 0.0
    %2720 = vmatpush.msra.mxu0 0.0
    %2721 = vmatpush.msra.mxu0 0.0
    %2722 = vmatpush.msra.mxu0 0.0
    %2723 = vmatpush.msra.mxu0 0.0
    %2724 = vmatpush.msra.mxu0 0.0
    %2725 = vmatpush.msra.mxu0 0.0
    %2726 = vmatpush.msra.mxu0 0.0
    %2727 = vmatpush.msra.mxu0 0.0
    %2728 = vmatpush.msra.mxu0 0.0
    %2729 = vmatpush.msra.mxu0 %v2712
    %2730 = vmatmul.f32.gmra.mxu0 %v2709
    %v2731 = vpop.f32.mrf.mxu0
    %v2732 = vadd.f32 0.0, %v2731
    %2733 = vdwg.mxu0
    %v2735 = vsel %vm782, %v2680, 0
    %v2738 = vsel %vm786, %v2508, 0
    %2740 = vmatpush.msra.mxu0 0.0
    %2741 = vmatpush.msra.mxu0 0.0
    %2742 = vmatpush.msra.mxu0 0.0
    %2743 = vmatpush.msra.mxu0 0.0
    %2744 = vmatpush.msra.mxu0 0.0
    %2745 = vmatpush.msra.mxu0 0.0
    %2746 = vmatpush.msra.mxu0 0.0
    %2747 = vmatpush.msra.mxu0 0.0
    %2748 = vmatpush.msra.mxu0 0.0
    %2749 = vmatpush.msra.mxu0 0.0
    %2750 = vmatpush.msra.mxu0 0.0
    %2751 = vmatpush.msra.mxu0 0.0
    %2752 = vmatpush.msra.mxu0 0.0
    %2753 = vmatpush.msra.mxu0 0.0
    %2754 = vmatpush.msra.mxu0 0.0
    %2755 = vmatpush.msra.mxu0 %v2738
    %2756 = vmatmul.f32.gmra.mxu0 %v2735
    %v2757 = vpop.f32.mrf.mxu0
    %v2758 = vadd.f32 0.0, %v2757
    %2759 = vdwg.mxu0
    %v2761 = vsel %vm782, %v2681, 0
    %v2764 = vsel %vm786, %v2528, 0
    %2766 = vmatpush.msra.mxu0 0.0
    %2767 = vmatpush.msra.mxu0 0.0
    %2768 = vmatpush.msra.mxu0 0.0
    %2769 = vmatpush.msra.mxu0 0.0
    %2770 = vmatpush.msra.mxu0 0.0
    %2771 = vmatpush.msra.mxu0 0.0
    %2772 = vmatpush.msra.mxu0 0.0
    %2773 = vmatpush.msra.mxu0 0.0
    %2774 = vmatpush.msra.mxu0 0.0
    %2775 = vmatpush.msra.mxu0 0.0
    %2776 = vmatpush.msra.mxu0 0.0
    %2777 = vmatpush.msra.mxu0 0.0
    %2778 = vmatpush.msra.mxu0 0.0
    %2779 = vmatpush.msra.mxu0 0.0
    %2780 = vmatpush.msra.mxu0 0.0
    %2781 = vmatpush.msra.mxu0 %v2764
    %2782 = vmatmul.f32.gmra.mxu0 %v2761
    %v2783 = vpop.f32.mrf.mxu0
    %v2784 = vadd.f32 0.0, %v2783
    %2785 = vdwg.mxu0
    %s2786 = scalar_lea.vmem %s8, 128
    %v2787 = vld [vmem:[%s2786] sm:$0xff]
    %v2788 = vld [vmem:[%s2786 + $0x8] sm:$0xff]
    %v2789 = vld [vmem:[%s2786 + $0x10] sm:$0xff]
    %v2790 = vld [vmem:[%s2786 + $0x18] sm:$0xff]
    %v2791 = vld [vmem:[%s2786 + $0x20] sm:$0xff]
    %v2792 = vld [vmem:[%s2786 + $0x28] sm:$0xff]
    %v2793 = vld [vmem:[%s2786 + $0x30] sm:$0xff]
    %v2794 = vld [vmem:[%s2786 + $0x38] sm:$0xff]
    %s2795 = scalar_lea.vmem %s5, 384
    %v2796 = vld [vmem:[%s2795] sm:$0xff]
    %v2797 = vld [vmem:[%s2795 + $0x8] sm:$0xff]
    %v2798 = vld [vmem:[%s2795 + $0x10] sm:$0xff]
    %v2799 = vld [vmem:[%s2795 + $0x18] sm:$0xff]
    %v2800 = vld [vmem:[%s2795 + $0x20] sm:$0xff]
    %v2801 = vld [vmem:[%s2795 + $0x28] sm:$0xff]
    %v2802 = vld [vmem:[%s2795 + $0x30] sm:$0xff]
    %v2803 = vld [vmem:[%s2795 + $0x38] sm:$0xff]
    %v2804 = vld [vmem:[%s2795 + $0x40] sm:$0xff]
    %v2805 = vld [vmem:[%s2795 + $0x48] sm:$0xff]
    %v2806 = vld [vmem:[%s2795 + $0x50] sm:$0xff]
    %v2807 = vld [vmem:[%s2795 + $0x58] sm:$0xff]
    %v2808 = vld [vmem:[%s2795 + $0x60] sm:$0xff]
    %v2809 = vld [vmem:[%s2795 + $0x68] sm:$0xff]
    %v2810 = vld [vmem:[%s2795 + $0x70] sm:$0xff]
    %v2811 = vld [vmem:[%s2795 + $0x78] sm:$0xff]
    %2812 = vmatpush.msra.mxu0 0.0
    %2813 = vmatpush.msra.mxu0 0.0
    %2814 = vmatpush.msra.mxu0 0.0
    %2815 = vmatpush.msra.mxu0 0.0
    %2816 = vmatpush.msra.mxu0 0.0
    %2817 = vmatpush.msra.mxu0 0.0
    %2818 = vmatpush.msra.mxu0 0.0
    %2819 = vmatpush.msra.mxu0 0.0
    %2820 = vmatpush.msra.mxu0 0.0
    %2821 = vmatpush.msra.mxu0 0.0
    %2822 = vmatpush.msra.mxu0 0.0
    %2823 = vmatpush.msra.mxu0 0.0
    %2824 = vmatpush.msra.mxu0 %v2799
    %2825 = vmatpush.msra.mxu0 %v2798
    %2826 = vmatpush.msra.mxu0 %v2797
    %2827 = vmatpush.msra.mxu0 %v2796
    %2828 = vmatmul.f32.gmra.mxu0 %v2245
    %v2829 = vpop.f32.mrf.mxu0
    %v2830 = vadd.f32 0.0, %v2829
    %2831 = vdwg.mxu0
    %2832 = vmatpush.msra.mxu0 0.0
    %2833 = vmatpush.msra.mxu0 0.0
    %2834 = vmatpush.msra.mxu0 0.0
    %2835 = vmatpush.msra.mxu0 0.0
    %2836 = vmatpush.msra.mxu0 0.0
    %2837 = vmatpush.msra.mxu0 0.0
    %2838 = vmatpush.msra.mxu0 0.0
    %2839 = vmatpush.msra.mxu0 0.0
    %2840 = vmatpush.msra.mxu0 0.0
    %2841 = vmatpush.msra.mxu0 0.0
    %2842 = vmatpush.msra.mxu0 0.0
    %2843 = vmatpush.msra.mxu0 0.0
    %2844 = vmatpush.msra.mxu0 %v2803
    %2845 = vmatpush.msra.mxu0 %v2802
    %2846 = vmatpush.msra.mxu0 %v2801
    %2847 = vmatpush.msra.mxu0 %v2800
    %2848 = vmatmul.f32.gmra.mxu0 %v2268
    %v2849 = vpop.f32.mrf.mxu0
    %v2850 = vadd.f32 0.0, %v2849
    %2851 = vdwg.mxu0
    %2852 = vmatpush.msra.mxu0 0.0
    %2853 = vmatpush.msra.mxu0 0.0
    %2854 = vmatpush.msra.mxu0 0.0
    %2855 = vmatpush.msra.mxu0 0.0
    %2856 = vmatpush.msra.mxu0 0.0
    %2857 = vmatpush.msra.mxu0 0.0
    %2858 = vmatpush.msra.mxu0 0.0
    %2859 = vmatpush.msra.mxu0 0.0
    %2860 = vmatpush.msra.mxu0 0.0
    %2861 = vmatpush.msra.mxu0 0.0
    %2862 = vmatpush.msra.mxu0 0.0
    %2863 = vmatpush.msra.mxu0 0.0
    %2864 = vmatpush.msra.mxu0 %v2807
    %2865 = vmatpush.msra.mxu0 %v2806
    %2866 = vmatpush.msra.mxu0 %v2805
    %2867 = vmatpush.msra.mxu0 %v2804
    %2868 = vmatmul.f32.gmra.mxu0 %v2291
    %v2869 = vpop.f32.mrf.mxu0
    %v2870 = vadd.f32 0.0, %v2869
    %2871 = vdwg.mxu0
    %2872 = vmatpush.msra.mxu0 0.0
    %2873 = vmatpush.msra.mxu0 0.0
    %2874 = vmatpush.msra.mxu0 0.0
    %2875 = vmatpush.msra.mxu0 0.0
    %2876 = vmatpush.msra.mxu0 0.0
    %2877 = vmatpush.msra.mxu0 0.0
    %2878 = vmatpush.msra.mxu0 0.0
    %2879 = vmatpush.msra.mxu0 0.0
    %2880 = vmatpush.msra.mxu0 0.0
    %2881 = vmatpush.msra.mxu0 0.0
    %2882 = vmatpush.msra.mxu0 0.0
    %2883 = vmatpush.msra.mxu0 0.0
    %2884 = vmatpush.msra.mxu0 %v2811
    %2885 = vmatpush.msra.mxu0 %v2810
    %2886 = vmatpush.msra.mxu0 %v2809
    %2887 = vmatpush.msra.mxu0 %v2808
    %2888 = vmatmul.f32.gmra.mxu0 %v2314
    %v2889 = vpop.f32.mrf.mxu0
    %v2890 = vadd.f32 0.0, %v2889
    %2891 = vdwg.mxu0
    %s2892 = scalar_lea.vmem %s6, 384
    %v2893 = vld [vmem:[%s2892] sm:$0xff]
    %v2894 = vld [vmem:[%s2892 + $0x8] sm:$0xff]
    %v2895 = vld [vmem:[%s2892 + $0x10] sm:$0xff]
    %v2896 = vld [vmem:[%s2892 + $0x18] sm:$0xff]
    %v2897 = vld [vmem:[%s2892 + $0x20] sm:$0xff]
    %v2898 = vld [vmem:[%s2892 + $0x28] sm:$0xff]
    %v2899 = vld [vmem:[%s2892 + $0x30] sm:$0xff]
    %v2900 = vld [vmem:[%s2892 + $0x38] sm:$0xff]
    %v2901 = vld [vmem:[%s2892 + $0x40] sm:$0xff]
    %v2902 = vld [vmem:[%s2892 + $0x48] sm:$0xff]
    %v2903 = vld [vmem:[%s2892 + $0x50] sm:$0xff]
    %v2904 = vld [vmem:[%s2892 + $0x58] sm:$0xff]
    %v2905 = vld [vmem:[%s2892 + $0x60] sm:$0xff]
    %v2906 = vld [vmem:[%s2892 + $0x68] sm:$0xff]
    %v2907 = vld [vmem:[%s2892 + $0x70] sm:$0xff]
    %v2908 = vld [vmem:[%s2892 + $0x78] sm:$0xff]
    %2909 = vmatpush.msra.mxu0 0.0
    %2910 = vmatpush.msra.mxu0 0.0
    %2911 = vmatpush.msra.mxu0 0.0
    %2912 = vmatpush.msra.mxu0 0.0
    %2913 = vmatpush.msra.mxu0 0.0
    %2914 = vmatpush.msra.mxu0 0.0
    %2915 = vmatpush.msra.mxu0 0.0
    %2916 = vmatpush.msra.mxu0 0.0
    %2917 = vmatpush.msra.mxu0 0.0
    %2918 = vmatpush.msra.mxu0 0.0
    %2919 = vmatpush.msra.mxu0 0.0
    %2920 = vmatpush.msra.mxu0 0.0
    %2921 = vmatpush.msra.mxu0 %v2896
    %2922 = vmatpush.msra.mxu0 %v2895
    %2923 = vmatpush.msra.mxu0 %v2894
    %2924 = vmatpush.msra.mxu0 %v2893
    %2925 = vmatmul.f32.gmra.mxu0 %v2245
    %v2926 = vpop.f32.mrf.mxu0
    %v2927 = vadd.f32 0.0, %v2926
    %2928 = vdwg.mxu0
    %2929 = vmatpush.msra.mxu0 0.0
    %2930 = vmatpush.msra.mxu0 0.0
    %2931 = vmatpush.msra.mxu0 0.0
    %2932 = vmatpush.msra.mxu0 0.0
    %2933 = vmatpush.msra.mxu0 0.0
    %2934 = vmatpush.msra.mxu0 0.0
    %2935 = vmatpush.msra.mxu0 0.0
    %2936 = vmatpush.msra.mxu0 0.0
    %2937 = vmatpush.msra.mxu0 0.0
    %2938 = vmatpush.msra.mxu0 0.0
    %2939 = vmatpush.msra.mxu0 0.0
    %2940 = vmatpush.msra.mxu0 0.0
    %2941 = vmatpush.msra.mxu0 %v2900
    %2942 = vmatpush.msra.mxu0 %v2899
    %2943 = vmatpush.msra.mxu0 %v2898
    %2944 = vmatpush.msra.mxu0 %v2897
    %2945 = vmatmul.f32.gmra.mxu0 %v2268
    %v2946 = vpop.f32.mrf.mxu0
    %v2947 = vadd.f32 0.0, %v2946
    %2948 = vdwg.mxu0
    %2949 = vmatpush.msra.mxu0 0.0
    %2950 = vmatpush.msra.mxu0 0.0
    %2951 = vmatpush.msra.mxu0 0.0
    %2952 = vmatpush.msra.mxu0 0.0
    %2953 = vmatpush.msra.mxu0 0.0
    %2954 = vmatpush.msra.mxu0 0.0
    %2955 = vmatpush.msra.mxu0 0.0
    %2956 = vmatpush.msra.mxu0 0.0
    %2957 = vmatpush.msra.mxu0 0.0
    %2958 = vmatpush.msra.mxu0 0.0
    %2959 = vmatpush.msra.mxu0 0.0
    %2960 = vmatpush.msra.mxu0 0.0
    %2961 = vmatpush.msra.mxu0 %v2904
    %2962 = vmatpush.msra.mxu0 %v2903
    %2963 = vmatpush.msra.mxu0 %v2902
    %2964 = vmatpush.msra.mxu0 %v2901
    %2965 = vmatmul.f32.gmra.mxu0 %v2291
    %v2966 = vpop.f32.mrf.mxu0
    %v2967 = vadd.f32 0.0, %v2966
    %2968 = vdwg.mxu0
    %2969 = vmatpush.msra.mxu0 0.0
    %2970 = vmatpush.msra.mxu0 0.0
    %2971 = vmatpush.msra.mxu0 0.0
    %2972 = vmatpush.msra.mxu0 0.0
    %2973 = vmatpush.msra.mxu0 0.0
    %2974 = vmatpush.msra.mxu0 0.0
    %2975 = vmatpush.msra.mxu0 0.0
    %2976 = vmatpush.msra.mxu0 0.0
    %2977 = vmatpush.msra.mxu0 0.0
    %2978 = vmatpush.msra.mxu0 0.0
    %2979 = vmatpush.msra.mxu0 0.0
    %2980 = vmatpush.msra.mxu0 0.0
    %2981 = vmatpush.msra.mxu0 %v2908
    %2982 = vmatpush.msra.mxu0 %v2907
    %2983 = vmatpush.msra.mxu0 %v2906
    %2984 = vmatpush.msra.mxu0 %v2905
    %2985 = vmatmul.f32.gmra.mxu0 %v2314
    %v2986 = vpop.f32.mrf.mxu0
    %v2987 = vadd.f32 0.0, %v2986
    %2988 = vdwg.mxu0
    %s2989 = scalar_lea.vmem %s7, 384
    %v2990 = vld [vmem:[%s2989] sm:$0xff]
    %v2991 = vld [vmem:[%s2989 + $0x8] sm:$0xff]
    %v2992 = vld [vmem:[%s2989 + $0x10] sm:$0xff]
    %v2993 = vld [vmem:[%s2989 + $0x18] sm:$0xff]
    %v2994 = vld [vmem:[%s2989 + $0x20] sm:$0xff]
    %v2995 = vld [vmem:[%s2989 + $0x28] sm:$0xff]
    %v2996 = vld [vmem:[%s2989 + $0x30] sm:$0xff]
    %v2997 = vld [vmem:[%s2989 + $0x38] sm:$0xff]
    %v2998 = vld [vmem:[%s2989 + $0x40] sm:$0xff]
    %v2999 = vld [vmem:[%s2989 + $0x48] sm:$0xff]
    %v3000 = vld [vmem:[%s2989 + $0x50] sm:$0xff]
    %v3001 = vld [vmem:[%s2989 + $0x58] sm:$0xff]
    %v3002 = vld [vmem:[%s2989 + $0x60] sm:$0xff]
    %v3003 = vld [vmem:[%s2989 + $0x68] sm:$0xff]
    %v3004 = vld [vmem:[%s2989 + $0x70] sm:$0xff]
    %v3005 = vld [vmem:[%s2989 + $0x78] sm:$0xff]
    %3006 = vmatpush.msra.mxu0 0.0
    %3007 = vmatpush.msra.mxu0 0.0
    %3008 = vmatpush.msra.mxu0 0.0
    %3009 = vmatpush.msra.mxu0 0.0
    %3010 = vmatpush.msra.mxu0 0.0
    %3011 = vmatpush.msra.mxu0 0.0
    %3012 = vmatpush.msra.mxu0 0.0
    %3013 = vmatpush.msra.mxu0 0.0
    %3014 = vmatpush.msra.mxu0 0.0
    %3015 = vmatpush.msra.mxu0 0.0
    %3016 = vmatpush.msra.mxu0 0.0
    %3017 = vmatpush.msra.mxu0 0.0
    %3018 = vmatpush.msra.mxu0 %v2993
    %3019 = vmatpush.msra.mxu0 %v2992
    %3020 = vmatpush.msra.mxu0 %v2991
    %3021 = vmatpush.msra.mxu0 %v2990
    %3022 = vmatmul.f32.gmra.mxu0 %v2245
    %v3023 = vpop.f32.mrf.mxu0
    %v3024 = vadd.f32 0.0, %v3023
    %3025 = vdwg.mxu0
    %3026 = vmatpush.msra.mxu0 0.0
    %3027 = vmatpush.msra.mxu0 0.0
    %3028 = vmatpush.msra.mxu0 0.0
    %3029 = vmatpush.msra.mxu0 0.0
    %3030 = vmatpush.msra.mxu0 0.0
    %3031 = vmatpush.msra.mxu0 0.0
    %3032 = vmatpush.msra.mxu0 0.0
    %3033 = vmatpush.msra.mxu0 0.0
    %3034 = vmatpush.msra.mxu0 0.0
    %3035 = vmatpush.msra.mxu0 0.0
    %3036 = vmatpush.msra.mxu0 0.0
    %3037 = vmatpush.msra.mxu0 0.0
    %3038 = vmatpush.msra.mxu0 %v2997
    %3039 = vmatpush.msra.mxu0 %v2996
    %3040 = vmatpush.msra.mxu0 %v2995
    %3041 = vmatpush.msra.mxu0 %v2994
    %3042 = vmatmul.f32.gmra.mxu0 %v2268
    %v3043 = vpop.f32.mrf.mxu0
    %v3044 = vadd.f32 0.0, %v3043
    %3045 = vdwg.mxu0
    %3046 = vmatpush.msra.mxu0 0.0
    %3047 = vmatpush.msra.mxu0 0.0
    %3048 = vmatpush.msra.mxu0 0.0
    %3049 = vmatpush.msra.mxu0 0.0
    %3050 = vmatpush.msra.mxu0 0.0
    %3051 = vmatpush.msra.mxu0 0.0
    %3052 = vmatpush.msra.mxu0 0.0
    %3053 = vmatpush.msra.mxu0 0.0
    %3054 = vmatpush.msra.mxu0 0.0
    %3055 = vmatpush.msra.mxu0 0.0
    %3056 = vmatpush.msra.mxu0 0.0
    %3057 = vmatpush.msra.mxu0 0.0
    %3058 = vmatpush.msra.mxu0 %v3001
    %3059 = vmatpush.msra.mxu0 %v3000
    %3060 = vmatpush.msra.mxu0 %v2999
    %3061 = vmatpush.msra.mxu0 %v2998
    %3062 = vmatmul.f32.gmra.mxu0 %v2291
    %v3063 = vpop.f32.mrf.mxu0
    %v3064 = vadd.f32 0.0, %v3063
    %3065 = vdwg.mxu0
    %3066 = vmatpush.msra.mxu0 0.0
    %3067 = vmatpush.msra.mxu0 0.0
    %3068 = vmatpush.msra.mxu0 0.0
    %3069 = vmatpush.msra.mxu0 0.0
    %3070 = vmatpush.msra.mxu0 0.0
    %3071 = vmatpush.msra.mxu0 0.0
    %3072 = vmatpush.msra.mxu0 0.0
    %3073 = vmatpush.msra.mxu0 0.0
    %3074 = vmatpush.msra.mxu0 0.0
    %3075 = vmatpush.msra.mxu0 0.0
    %3076 = vmatpush.msra.mxu0 0.0
    %3077 = vmatpush.msra.mxu0 0.0
    %3078 = vmatpush.msra.mxu0 %v3005
    %3079 = vmatpush.msra.mxu0 %v3004
    %3080 = vmatpush.msra.mxu0 %v3003
    %3081 = vmatpush.msra.mxu0 %v3002
    %3082 = vmatmul.f32.gmra.mxu0 %v2314
    %v3083 = vpop.f32.mrf.mxu0
    %v3084 = vadd.f32 0.0, %v3083
    %3085 = vdwg.mxu0
    %v3087 = vsel %vm628, %v2830, 0
    %v3090 = vsel %vm628, %v2927, 0
    %3092 = vmatpush.xpose.msra.mxu0 0.0
    %3093 = vmatpush.xpose.msra.mxu0 0.0
    %3094 = vmatpush.xpose.msra.mxu0 0.0
    %3095 = vmatpush.xpose.msra.mxu0 0.0
    %3096 = vmatpush.xpose.msra.mxu0 0.0
    %3097 = vmatpush.xpose.msra.mxu0 0.0
    %3098 = vmatpush.xpose.msra.mxu0 0.0
    %3099 = vmatpush.xpose.msra.mxu0 0.0
    %3100 = vmatpush.xpose.msra.mxu0 0.0
    %3101 = vmatpush.xpose.msra.mxu0 0.0
    %3102 = vmatpush.xpose.msra.mxu0 0.0
    %3103 = vmatpush.xpose.msra.mxu0 0.0
    %3104 = vmatpush.xpose.msra.mxu0 0.0
    %3105 = vmatpush.xpose.msra.mxu0 0.0
    %3106 = vmatpush.xpose.msra.mxu0 0.0
    %3107 = vmatpush.xpose.msra.mxu0 %v3090
    %3108 = vmatmul.f32.gmra.mxu0 %v3087
    %v3109 = vpop.f32.mrf.mxu0
    %v3110 = vadd.f32 0.0, %v3109
    %3111 = vdwg.mxu0
    %v3113 = vsel %vm628, %v2850, 0
    %v3116 = vsel %vm628, %v2947, 0
    %3118 = vmatpush.xpose.msra.mxu0 0.0
    %3119 = vmatpush.xpose.msra.mxu0 0.0
    %3120 = vmatpush.xpose.msra.mxu0 0.0
    %3121 = vmatpush.xpose.msra.mxu0 0.0
    %3122 = vmatpush.xpose.msra.mxu0 0.0
    %3123 = vmatpush.xpose.msra.mxu0 0.0
    %3124 = vmatpush.xpose.msra.mxu0 0.0
    %3125 = vmatpush.xpose.msra.mxu0 0.0
    %3126 = vmatpush.xpose.msra.mxu0 0.0
    %3127 = vmatpush.xpose.msra.mxu0 0.0
    %3128 = vmatpush.xpose.msra.mxu0 0.0
    %3129 = vmatpush.xpose.msra.mxu0 0.0
    %3130 = vmatpush.xpose.msra.mxu0 0.0
    %3131 = vmatpush.xpose.msra.mxu0 0.0
    %3132 = vmatpush.xpose.msra.mxu0 0.0
    %3133 = vmatpush.xpose.msra.mxu0 %v3116
    %3134 = vmatmul.f32.gmra.mxu0 %v3113
    %v3135 = vpop.f32.mrf.mxu0
    %v3136 = vadd.f32 0.0, %v3135
    %3137 = vdwg.mxu0
    %v3139 = vsel %vm628, %v2870, 0
    %v3142 = vsel %vm628, %v2967, 0
    %3144 = vmatpush.xpose.msra.mxu0 0.0
    %3145 = vmatpush.xpose.msra.mxu0 0.0
    %3146 = vmatpush.xpose.msra.mxu0 0.0
    %3147 = vmatpush.xpose.msra.mxu0 0.0
    %3148 = vmatpush.xpose.msra.mxu0 0.0
    %3149 = vmatpush.xpose.msra.mxu0 0.0
    %3150 = vmatpush.xpose.msra.mxu0 0.0
    %3151 = vmatpush.xpose.msra.mxu0 0.0
    %3152 = vmatpush.xpose.msra.mxu0 0.0
    %3153 = vmatpush.xpose.msra.mxu0 0.0
    %3154 = vmatpush.xpose.msra.mxu0 0.0
    %3155 = vmatpush.xpose.msra.mxu0 0.0
    %3156 = vmatpush.xpose.msra.mxu0 0.0
    %3157 = vmatpush.xpose.msra.mxu0 0.0
    %3158 = vmatpush.xpose.msra.mxu0 0.0
    %3159 = vmatpush.xpose.msra.mxu0 %v3142
    %3160 = vmatmul.f32.gmra.mxu0 %v3139
    %v3161 = vpop.f32.mrf.mxu0
    %v3162 = vadd.f32 0.0, %v3161
    %3163 = vdwg.mxu0
    %v3165 = vsel %vm628, %v2890, 0
    %v3168 = vsel %vm628, %v2987, 0
    %3170 = vmatpush.xpose.msra.mxu0 0.0
    %3171 = vmatpush.xpose.msra.mxu0 0.0
    %3172 = vmatpush.xpose.msra.mxu0 0.0
    %3173 = vmatpush.xpose.msra.mxu0 0.0
    %3174 = vmatpush.xpose.msra.mxu0 0.0
    %3175 = vmatpush.xpose.msra.mxu0 0.0
    %3176 = vmatpush.xpose.msra.mxu0 0.0
    %3177 = vmatpush.xpose.msra.mxu0 0.0
    %3178 = vmatpush.xpose.msra.mxu0 0.0
    %3179 = vmatpush.xpose.msra.mxu0 0.0
    %3180 = vmatpush.xpose.msra.mxu0 0.0
    %3181 = vmatpush.xpose.msra.mxu0 0.0
    %3182 = vmatpush.xpose.msra.mxu0 0.0
    %3183 = vmatpush.xpose.msra.mxu0 0.0
    %3184 = vmatpush.xpose.msra.mxu0 0.0
    %3185 = vmatpush.xpose.msra.mxu0 %v3168
    %3186 = vmatmul.f32.gmra.mxu0 %v3165
    %v3187 = vpop.f32.mrf.mxu0
    %v3188 = vadd.f32 0.0, %v3187
    %3189 = vdwg.mxu0
    %v3190 = vmul.f32 %v3110, 0.25
    %v3191 = vmul.f32 %v3136, 0.25
    %v3192 = vmul.f32 %v3162, 0.25
    %v3193 = vmul.f32 %v3188, 0.25
    %v3194 = vsel %vm737, %v3190, -inf
    %3195 = vmax.xlane.f32.xlu0 %v3194
    %v3196 = vpop.xlane.xlu0 %3195
    %v3197 = vsel %vm737, %v3191, -inf
    %3198 = vmax.xlane.f32.xlu0 %v3197
    %v3199 = vpop.xlane.xlu0 %3198
    %v3200 = vsel %vm737, %v3192, -inf
    %3201 = vmax.xlane.f32.xlu0 %v3200
    %v3202 = vpop.xlane.xlu0 %3201
    %v3203 = vsel %vm737, %v3193, -inf
    %3204 = vmax.xlane.f32.xlu0 %v3203
    %v3205 = vpop.xlane.xlu0 %3204
    %v3206 = vsub.f32 %v3190, %v3196
    %v3207 = vsub.f32 %v3191, %v3199
    %v3208 = vsub.f32 %v3192, %v3202
    %v3209 = vsub.f32 %v3193, %v3205
    %v3210 = vmul.f32 %v3206, 1.442695
    %v3211 = vpow.pop %v3210
    %v3212 = vmul.f32 %v3207, 1.442695
    %v3213 = vpow.pop %v3212
    %v3214 = vmul.f32 %v3208, 1.442695
    %v3215 = vpow.pop %v3214
    %v3216 = vmul.f32 %v3209, 1.442695
    %v3217 = vpow.pop %v3216
    %v3218 = vsel %vm737, %v3211, 0.0
    %3219 = vadd.xlane.f32.xlu0 %v3218
    %v3220 = vpop.xlane.xlu0 %3219
    %v3221 = vsel %vm737, %v3213, 0.0
    %3222 = vadd.xlane.f32.xlu0 %v3221
    %v3223 = vpop.xlane.xlu0 %3222
    %v3224 = vsel %vm737, %v3215, 0.0
    %3225 = vadd.xlane.f32.xlu0 %v3224
    %v3226 = vpop.xlane.xlu0 %3225
    %v3227 = vsel %vm737, %v3217, 0.0
    %3228 = vadd.xlane.f32.xlu0 %v3227
    %v3229 = vpop.xlane.xlu0 %3228
    %v3230 = vrcp.pop %v3220
    %v3231 = vrcp.pop %v3223
    %v3232 = vrcp.pop %v3226
    %v3233 = vrcp.pop %v3229
    %v3234 = vmul.f32 %v3211, %v3230
    %v3235 = vmul.f32 %v3213, %v3231
    %v3236 = vmul.f32 %v3215, %v3232
    %v3237 = vmul.f32 %v3217, %v3233
    %v3239 = vsel %vm782, %v3234, 0
    %v3242 = vsel %vm786, %v3024, 0
    %3244 = vmatpush.msra.mxu0 0.0
    %3245 = vmatpush.msra.mxu0 0.0
    %3246 = vmatpush.msra.mxu0 0.0
    %3247 = vmatpush.msra.mxu0 0.0
    %3248 = vmatpush.msra.mxu0 0.0
    %3249 = vmatpush.msra.mxu0 0.0
    %3250 = vmatpush.msra.mxu0 0.0
    %3251 = vmatpush.msra.mxu0 0.0
    %3252 = vmatpush.msra.mxu0 0.0
    %3253 = vmatpush.msra.mxu0 0.0
    %3254 = vmatpush.msra.mxu0 0.0
    %3255 = vmatpush.msra.mxu0 0.0
    %3256 = vmatpush.msra.mxu0 0.0
    %3257 = vmatpush.msra.mxu0 0.0
    %3258 = vmatpush.msra.mxu0 0.0
    %3259 = vmatpush.msra.mxu0 %v3242
    %3260 = vmatmul.f32.gmra.mxu0 %v3239
    %v3261 = vpop.f32.mrf.mxu0
    %v3262 = vadd.f32 0.0, %v3261
    %3263 = vdwg.mxu0
    %v3265 = vsel %vm782, %v3235, 0
    %v3268 = vsel %vm786, %v3044, 0
    %3270 = vmatpush.msra.mxu0 0.0
    %3271 = vmatpush.msra.mxu0 0.0
    %3272 = vmatpush.msra.mxu0 0.0
    %3273 = vmatpush.msra.mxu0 0.0
    %3274 = vmatpush.msra.mxu0 0.0
    %3275 = vmatpush.msra.mxu0 0.0
    %3276 = vmatpush.msra.mxu0 0.0
    %3277 = vmatpush.msra.mxu0 0.0
    %3278 = vmatpush.msra.mxu0 0.0
    %3279 = vmatpush.msra.mxu0 0.0
    %3280 = vmatpush.msra.mxu0 0.0
    %3281 = vmatpush.msra.mxu0 0.0
    %3282 = vmatpush.msra.mxu0 0.0
    %3283 = vmatpush.msra.mxu0 0.0
    %3284 = vmatpush.msra.mxu0 0.0
    %3285 = vmatpush.msra.mxu0 %v3268
    %3286 = vmatmul.f32.gmra.mxu0 %v3265
    %v3287 = vpop.f32.mrf.mxu0
    %v3288 = vadd.f32 0.0, %v3287
    %3289 = vdwg.mxu0
    %v3291 = vsel %vm782, %v3236, 0
    %v3294 = vsel %vm786, %v3064, 0
    %3296 = vmatpush.msra.mxu0 0.0
    %3297 = vmatpush.msra.mxu0 0.0
    %3298 = vmatpush.msra.mxu0 0.0
    %3299 = vmatpush.msra.mxu0 0.0
    %3300 = vmatpush.msra.mxu0 0.0
    %3301 = vmatpush.msra.mxu0 0.0
    %3302 = vmatpush.msra.mxu0 0.0
    %3303 = vmatpush.msra.mxu0 0.0
    %3304 = vmatpush.msra.mxu0 0.0
    %3305 = vmatpush.msra.mxu0 0.0
    %3306 = vmatpush.msra.mxu0 0.0
    %3307 = vmatpush.msra.mxu0 0.0
    %3308 = vmatpush.msra.mxu0 0.0
    %3309 = vmatpush.msra.mxu0 0.0
    %3310 = vmatpush.msra.mxu0 0.0
    %3311 = vmatpush.msra.mxu0 %v3294
    %3312 = vmatmul.f32.gmra.mxu0 %v3291
    %v3313 = vpop.f32.mrf.mxu0
    %v3314 = vadd.f32 0.0, %v3313
    %3315 = vdwg.mxu0
    %v3317 = vsel %vm782, %v3237, 0
    %v3320 = vsel %vm786, %v3084, 0
    %3322 = vmatpush.msra.mxu0 0.0
    %3323 = vmatpush.msra.mxu0 0.0
    %3324 = vmatpush.msra.mxu0 0.0
    %3325 = vmatpush.msra.mxu0 0.0
    %3326 = vmatpush.msra.mxu0 0.0
    %3327 = vmatpush.msra.mxu0 0.0
    %3328 = vmatpush.msra.mxu0 0.0
    %3329 = vmatpush.msra.mxu0 0.0
    %3330 = vmatpush.msra.mxu0 0.0
    %3331 = vmatpush.msra.mxu0 0.0
    %3332 = vmatpush.msra.mxu0 0.0
    %3333 = vmatpush.msra.mxu0 0.0
    %3334 = vmatpush.msra.mxu0 0.0
    %3335 = vmatpush.msra.mxu0 0.0
    %3336 = vmatpush.msra.mxu0 0.0
    %3337 = vmatpush.msra.mxu0 %v3320
    %3338 = vmatmul.f32.gmra.mxu0 %v3317
    %v3339 = vpop.f32.mrf.mxu0
    %v3340 = vadd.f32 0.0, %v3339
    %3341 = vdwg.mxu0
    %s3342 = scalar_lea.vmem %s8, 192
    %v3343 = vld [vmem:[%s3342] sm:$0xff]
    %v3344 = vld [vmem:[%s3342 + $0x8] sm:$0xff]
    %v3345 = vld [vmem:[%s3342 + $0x10] sm:$0xff]
    %v3346 = vld [vmem:[%s3342 + $0x18] sm:$0xff]
    %v3347 = vld [vmem:[%s3342 + $0x20] sm:$0xff]
    %v3348 = vld [vmem:[%s3342 + $0x28] sm:$0xff]
    %v3349 = vld [vmem:[%s3342 + $0x30] sm:$0xff]
    %v3350 = vld [vmem:[%s3342 + $0x38] sm:$0xff]
    %v3352 = vsel %vm628, %v3262, 0
    %3354 = vmatpush.msra.mxu0 0.0
    %3355 = vmatpush.msra.mxu0 0.0
    %3356 = vmatpush.msra.mxu0 0.0
    %3357 = vmatpush.msra.mxu0 0.0
    %3358 = vmatpush.msra.mxu0 0.0
    %3359 = vmatpush.msra.mxu0 0.0
    %3360 = vmatpush.msra.mxu0 0.0
    %3361 = vmatpush.msra.mxu0 0.0
    %3362 = vmatpush.msra.mxu0 0.0
    %3363 = vmatpush.msra.mxu0 0.0
    %3364 = vmatpush.msra.mxu0 0.0
    %3365 = vmatpush.msra.mxu0 0.0
    %3366 = vmatpush.msra.mxu0 0.0
    %3367 = vmatpush.msra.mxu0 0.0
    %3368 = vmatpush.msra.mxu0 %v3344
    %3369 = vmatpush.msra.mxu0 %v3343
    %3370 = vmatmul.f32.gmra.mxu0 %v3352
    %v3371 = vpop.f32.mrf.mxu0
    %v3372 = vadd.f32 0.0, %v3371
    %3373 = vdwg.mxu0
    %v3375 = vsel %vm628, %v3288, 0
    %3377 = vmatpush.msra.mxu0 0.0
    %3378 = vmatpush.msra.mxu0 0.0
    %3379 = vmatpush.msra.mxu0 0.0
    %3380 = vmatpush.msra.mxu0 0.0
    %3381 = vmatpush.msra.mxu0 0.0
    %3382 = vmatpush.msra.mxu0 0.0
    %3383 = vmatpush.msra.mxu0 0.0
    %3384 = vmatpush.msra.mxu0 0.0
    %3385 = vmatpush.msra.mxu0 0.0
    %3386 = vmatpush.msra.mxu0 0.0
    %3387 = vmatpush.msra.mxu0 0.0
    %3388 = vmatpush.msra.mxu0 0.0
    %3389 = vmatpush.msra.mxu0 0.0
    %3390 = vmatpush.msra.mxu0 0.0
    %3391 = vmatpush.msra.mxu0 %v3346
    %3392 = vmatpush.msra.mxu0 %v3345
    %3393 = vmatmul.f32.gmra.mxu0 %v3375
    %v3394 = vpop.f32.mrf.mxu0
    %v3395 = vadd.f32 0.0, %v3394
    %3396 = vdwg.mxu0
    %v3398 = vsel %vm628, %v3314, 0
    %3400 = vmatpush.msra.mxu0 0.0
    %3401 = vmatpush.msra.mxu0 0.0
    %3402 = vmatpush.msra.mxu0 0.0
    %3403 = vmatpush.msra.mxu0 0.0
    %3404 = vmatpush.msra.mxu0 0.0
    %3405 = vmatpush.msra.mxu0 0.0
    %3406 = vmatpush.msra.mxu0 0.0
    %3407 = vmatpush.msra.mxu0 0.0
    %3408 = vmatpush.msra.mxu0 0.0
    %3409 = vmatpush.msra.mxu0 0.0
    %3410 = vmatpush.msra.mxu0 0.0
    %3411 = vmatpush.msra.mxu0 0.0
    %3412 = vmatpush.msra.mxu0 0.0
    %3413 = vmatpush.msra.mxu0 0.0
    %3414 = vmatpush.msra.mxu0 %v3348
    %3415 = vmatpush.msra.mxu0 %v3347
    %3416 = vmatmul.f32.gmra.mxu0 %v3398
    %v3417 = vpop.f32.mrf.mxu0
    %v3418 = vadd.f32 0.0, %v3417
    %3419 = vdwg.mxu0
    %v3421 = vsel %vm628, %v3340, 0
    %3423 = vmatpush.msra.mxu0 0.0
    %3424 = vmatpush.msra.mxu0 0.0
    %3425 = vmatpush.msra.mxu0 0.0
    %3426 = vmatpush.msra.mxu0 0.0
    %3427 = vmatpush.msra.mxu0 0.0
    %3428 = vmatpush.msra.mxu0 0.0
    %3429 = vmatpush.msra.mxu0 0.0
    %3430 = vmatpush.msra.mxu0 0.0
    %3431 = vmatpush.msra.mxu0 0.0
    %3432 = vmatpush.msra.mxu0 0.0
    %3433 = vmatpush.msra.mxu0 0.0
    %3434 = vmatpush.msra.mxu0 0.0
    %3435 = vmatpush.msra.mxu0 0.0
    %3436 = vmatpush.msra.mxu0 0.0
    %3437 = vmatpush.msra.mxu0 %v3350
    %3438 = vmatpush.msra.mxu0 %v3349
    %3439 = vmatmul.f32.gmra.mxu0 %v3421
    %v3440 = vpop.f32.mrf.mxu0
    %v3441 = vadd.f32 0.0, %v3440
    %3442 = vdwg.mxu0
    %v3444 = vsel %vm628, %v2706, 0
    %3446 = vmatpush.msra.mxu0 0.0
    %3447 = vmatpush.msra.mxu0 0.0
    %3448 = vmatpush.msra.mxu0 0.0
    %3449 = vmatpush.msra.mxu0 0.0
    %3450 = vmatpush.msra.mxu0 0.0
    %3451 = vmatpush.msra.mxu0 0.0
    %3452 = vmatpush.msra.mxu0 0.0
    %3453 = vmatpush.msra.mxu0 0.0
    %3454 = vmatpush.msra.mxu0 0.0
    %3455 = vmatpush.msra.mxu0 0.0
    %3456 = vmatpush.msra.mxu0 0.0
    %3457 = vmatpush.msra.mxu0 0.0
    %3458 = vmatpush.msra.mxu0 0.0
    %3459 = vmatpush.msra.mxu0 0.0
    %3460 = vmatpush.msra.mxu0 %v2788
    %3461 = vmatpush.msra.mxu0 %v2787
    %3462 = vmatmul.f32.gmra.mxu0 %v3444
    %v3463 = vpop.f32.mrf.mxu0
    %v3464 = vadd.f32 %v3372, %v3463
    %3465 = vdwg.mxu0
    %v3467 = vsel %vm628, %v2732, 0
    %3469 = vmatpush.msra.mxu0 0.0
    %3470 = vmatpush.msra.mxu0 0.0
    %3471 = vmatpush.msra.mxu0 0.0
    %3472 = vmatpush.msra.mxu0 0.0
    %3473 = vmatpush.msra.mxu0 0.0
    %3474 = vmatpush.msra.mxu0 0.0
    %3475 = vmatpush.msra.mxu0 0.0
    %3476 = vmatpush.msra.mxu0 0.0
    %3477 = vmatpush.msra.mxu0 0.0
    %3478 = vmatpush.msra.mxu0 0.0
    %3479 = vmatpush.msra.mxu0 0.0
    %3480 = vmatpush.msra.mxu0 0.0
    %3481 = vmatpush.msra.mxu0 0.0
    %3482 = vmatpush.msra.mxu0 0.0
    %3483 = vmatpush.msra.mxu0 %v2790
    %3484 = vmatpush.msra.mxu0 %v2789
    %3485 = vmatmul.f32.gmra.mxu0 %v3467
    %v3486 = vpop.f32.mrf.mxu0
    %v3487 = vadd.f32 %v3395, %v3486
    %3488 = vdwg.mxu0
    %v3490 = vsel %vm628, %v2758, 0
    %3492 = vmatpush.msra.mxu0 0.0
    %3493 = vmatpush.msra.mxu0 0.0
    %3494 = vmatpush.msra.mxu0 0.0
    %3495 = vmatpush.msra.mxu0 0.0
    %3496 = vmatpush.msra.mxu0 0.0
    %3497 = vmatpush.msra.mxu0 0.0
    %3498 = vmatpush.msra.mxu0 0.0
    %3499 = vmatpush.msra.mxu0 0.0
    %3500 = vmatpush.msra.mxu0 0.0
    %3501 = vmatpush.msra.mxu0 0.0
    %3502 = vmatpush.msra.mxu0 0.0
    %3503 = vmatpush.msra.mxu0 0.0
    %3504 = vmatpush.msra.mxu0 0.0
    %3505 = vmatpush.msra.mxu0 0.0
    %3506 = vmatpush.msra.mxu0 %v2792
    %3507 = vmatpush.msra.mxu0 %v2791
    %3508 = vmatmul.f32.gmra.mxu0 %v3490
    %v3509 = vpop.f32.mrf.mxu0
    %v3510 = vadd.f32 %v3418, %v3509
    %3511 = vdwg.mxu0
    %v3513 = vsel %vm628, %v2784, 0
    %3515 = vmatpush.msra.mxu0 0.0
    %3516 = vmatpush.msra.mxu0 0.0
    %3517 = vmatpush.msra.mxu0 0.0
    %3518 = vmatpush.msra.mxu0 0.0
    %3519 = vmatpush.msra.mxu0 0.0
    %3520 = vmatpush.msra.mxu0 0.0
    %3521 = vmatpush.msra.mxu0 0.0
    %3522 = vmatpush.msra.mxu0 0.0
    %3523 = vmatpush.msra.mxu0 0.0
    %3524 = vmatpush.msra.mxu0 0.0
    %3525 = vmatpush.msra.mxu0 0.0
    %3526 = vmatpush.msra.mxu0 0.0
    %3527 = vmatpush.msra.mxu0 0.0
    %3528 = vmatpush.msra.mxu0 0.0
    %3529 = vmatpush.msra.mxu0 %v2794
    %3530 = vmatpush.msra.mxu0 %v2793
    %3531 = vmatmul.f32.gmra.mxu0 %v3513
    %v3532 = vpop.f32.mrf.mxu0
    %v3533 = vadd.f32 %v3441, %v3532
    %3534 = vdwg.mxu0
    %v3535 = vadd.f32 %v2093, %v3464
    %v3536 = vadd.f32 %v2094, %v3487
    %v3537 = vadd.f32 %v2095, %v3510
    %v3538 = vadd.f32 %v2096, %v3533
    %s3539 = scalar_lea.vmem %s9, 4
    %v3540 = vld [vmem:[%s3539] sm:$0x1]
    %v3541 = vld [vmem:[%s3539 + $0x1] sm:$0x1]
    %v3542 = vld [vmem:[%s3539 + $0x2] sm:$0x1]
    %v3543 = vld [vmem:[%s3539 + $0x3] sm:$0x1]
    %v3548 = vperm.slane %v3540, 0
    %v3549 = vperm.slane %v3541, 0
    %v3550 = vperm.slane %v3542, 0
    %v3551 = vperm.slane %v3543, 0
    %v3556 = vadd.f32 %v3535, %v3548
    %v3557 = vadd.f32 %v3536, %v3549
    %v3558 = vadd.f32 %v3537, %v3550
    %v3559 = vadd.f32 %v3538, %v3551
    %s3560 = scalar_lea.vmem %s10, 4
    %v3561 = vld [vmem:[%s3560] sm:$0x1]
    %v3562 = vld [vmem:[%s3560 + $0x1] sm:$0x1]
    %v3563 = vld [vmem:[%s3560 + $0x2] sm:$0x1]
    %v3564 = vld [vmem:[%s3560 + $0x3] sm:$0x1]
    %s3565 = scalar_lea.vmem %s11, 4
    %v3566 = vld [vmem:[%s3565] sm:$0x1]
    %v3567 = vld [vmem:[%s3565 + $0x1] sm:$0x1]
    %v3568 = vld [vmem:[%s3565 + $0x2] sm:$0x1]
    %v3569 = vld [vmem:[%s3565 + $0x3] sm:$0x1]
    %v3570 = vsel %vm199, %v3556, 0.0
    %3571 = vadd.xlane.f32.xlu0 %v3570
    %v3572 = vpop.xlane.xlu0 %3571
    %v3573 = vsel %vm199, %v3557, 0.0
    %3574 = vadd.xlane.f32.xlu0 %v3573
    %v3575 = vpop.xlane.xlu0 %3574
    %v3576 = vsel %vm199, %v3558, 0.0
    %3577 = vadd.xlane.f32.xlu0 %v3576
    %v3578 = vpop.xlane.xlu0 %3577
    %v3579 = vsel %vm199, %v3559, 0.0
    %3580 = vadd.xlane.f32.xlu0 %v3579
    %v3581 = vpop.xlane.xlu0 %3580
    %v3582 = vmul.f32 %v3572, %v218
    %v3583 = vmul.f32 %v3575, %v218
    %v3584 = vmul.f32 %v3578, %v218
    %v3585 = vmul.f32 %v3581, %v218
    %v3586 = vsub.f32 %v3556, %v3582
    %v3587 = vsub.f32 %v3557, %v3583
    %v3588 = vsub.f32 %v3558, %v3584
    %v3589 = vsub.f32 %v3559, %v3585
    %v3590 = vmul.f32 %v3586, %v3586
    %v3591 = vmul.f32 %v3587, %v3587
    %v3592 = vmul.f32 %v3588, %v3588
    %v3593 = vmul.f32 %v3589, %v3589
    %v3594 = vsel %vm199, %v3590, 0.0
    %3595 = vadd.xlane.f32.xlu0 %v3594
    %v3596 = vpop.xlane.xlu0 %3595
    %v3597 = vsel %vm199, %v3591, 0.0
    %3598 = vadd.xlane.f32.xlu0 %v3597
    %v3599 = vpop.xlane.xlu0 %3598
    %v3600 = vsel %vm199, %v3592, 0.0
    %3601 = vadd.xlane.f32.xlu0 %v3600
    %v3602 = vpop.xlane.xlu0 %3601
    %v3603 = vsel %vm199, %v3593, 0.0
    %3604 = vadd.xlane.f32.xlu0 %v3603
    %v3605 = vpop.xlane.xlu0 %3604
    %v3606 = vmul.f32 %v3596, %v218
    %v3607 = vmul.f32 %v3599, %v218
    %v3608 = vmul.f32 %v3602, %v218
    %v3609 = vmul.f32 %v3605, %v218
    %v3610 = vadd.f32 %v3606, 1e-05
    %v3611 = vadd.f32 %v3607, 1e-05
    %v3612 = vadd.f32 %v3608, 1e-05
    %v3613 = vadd.f32 %v3609, 1e-05
    %v3614 = vrsqrt.pop %v3610
    %v3615 = vmul.f32 %v3614, %v3610
    %v3616 = vmul.f32 %v3615, %v3614
    %v3617 = vmul.f32 0.5, %v3616
    %v3618 = vsub.f32 1.5, %v3617
    %v3619 = vmul.f32 %v3614, %v3618
    %vm3620 = vweird.f32 %v3610
    %vm3621 = vweird.f32 %v3614
    %vm3622 = vmor %vm3620, %vm3621
    %v3623 = vsel %vm3622, %v3614, %v3619
    %v3624 = vrsqrt.pop %v3611
    %v3625 = vmul.f32 %v3624, %v3611
    %v3626 = vmul.f32 %v3625, %v3624
    %v3627 = vmul.f32 0.5, %v3626
    %v3628 = vsub.f32 1.5, %v3627
    %v3629 = vmul.f32 %v3624, %v3628
    %vm3630 = vweird.f32 %v3611
    %vm3631 = vweird.f32 %v3624
    %vm3632 = vmor %vm3630, %vm3631
    %v3633 = vsel %vm3632, %v3624, %v3629
    %v3634 = vrsqrt.pop %v3612
    %v3635 = vmul.f32 %v3634, %v3612
    %v3636 = vmul.f32 %v3635, %v3634
    %v3637 = vmul.f32 0.5, %v3636
    %v3638 = vsub.f32 1.5, %v3637
    %v3639 = vmul.f32 %v3634, %v3638
    %vm3640 = vweird.f32 %v3612
    %vm3641 = vweird.f32 %v3634
    %vm3642 = vmor %vm3640, %vm3641
    %v3643 = vsel %vm3642, %v3634, %v3639
    %v3644 = vrsqrt.pop %v3613
    %v3645 = vmul.f32 %v3644, %v3613
    %v3646 = vmul.f32 %v3645, %v3644
    %v3647 = vmul.f32 0.5, %v3646
    %v3648 = vsub.f32 1.5, %v3647
    %v3649 = vmul.f32 %v3644, %v3648
    %vm3650 = vweird.f32 %v3613
    %vm3651 = vweird.f32 %v3644
    %vm3652 = vmor %vm3650, %vm3651
    %v3653 = vsel %vm3652, %v3644, %v3649
    %v3654 = vmul.f32 %v3586, %v3623
    %v3655 = vmul.f32 %v3587, %v3633
    %v3656 = vmul.f32 %v3588, %v3643
    %v3657 = vmul.f32 %v3589, %v3653
    %v3662 = vperm.slane %v3561, 0
    %v3663 = vperm.slane %v3562, 0
    %v3664 = vperm.slane %v3563, 0
    %v3665 = vperm.slane %v3564, 0
    %v3670 = vmul.f32 %v3654, %v3662
    %v3671 = vmul.f32 %v3655, %v3663
    %v3672 = vmul.f32 %v3656, %v3664
    %v3673 = vmul.f32 %v3657, %v3665
    %v3678 = vperm.slane %v3566, 0
    %v3679 = vperm.slane %v3567, 0
    %v3680 = vperm.slane %v3568, 0
    %v3681 = vperm.slane %v3569, 0
    %v3686 = vadd.f32 %v3670, %v3678
    %v3687 = vadd.f32 %v3671, %v3679
    %v3688 = vadd.f32 %v3672, %v3680
    %v3689 = vadd.f32 %v3673, %v3681
    %s3690 = scalar_lea.vmem %s12, 128
    %v3691 = vld [vmem:[%s3690] sm:$0xff]
    %v3692 = vld [vmem:[%s3690 + $0x8] sm:$0xff]
    %v3693 = vld [vmem:[%s3690 + $0x10] sm:$0xff]
    %v3694 = vld [vmem:[%s3690 + $0x18] sm:$0xff]
    %v3695 = vld [vmem:[%s3690 + $0x20] sm:$0xff]
    %v3696 = vld [vmem:[%s3690 + $0x28] sm:$0xff]
    %v3697 = vld [vmem:[%s3690 + $0x30] sm:$0xff]
    %v3698 = vld [vmem:[%s3690 + $0x38] sm:$0xff]
    %v3699 = vld [vmem:[%s3690 + $0x40] sm:$0xff]
    %v3700 = vld [vmem:[%s3690 + $0x48] sm:$0xff]
    %v3701 = vld [vmem:[%s3690 + $0x50] sm:$0xff]
    %v3702 = vld [vmem:[%s3690 + $0x58] sm:$0xff]
    %v3703 = vld [vmem:[%s3690 + $0x60] sm:$0xff]
    %v3704 = vld [vmem:[%s3690 + $0x68] sm:$0xff]
    %v3705 = vld [vmem:[%s3690 + $0x70] sm:$0xff]
    %v3706 = vld [vmem:[%s3690 + $0x78] sm:$0xff]
    %s3707 = scalar_lea.vmem %s13, 4
    %v3708 = vld [vmem:[%s3707] sm:$0x1]
    %v3709 = vld [vmem:[%s3707 + $0x1] sm:$0x1]
    %v3710 = vld [vmem:[%s3707 + $0x2] sm:$0x1]
    %v3711 = vld [vmem:[%s3707 + $0x3] sm:$0x1]
    %v3716 = vperm.slane %v3708, 0
    %v3717 = vperm.slane %v3709, 0
    %v3718 = vperm.slane %v3710, 0
    %v3719 = vperm.slane %v3711, 0
    %v3725 = vsel %vm343, %v3686, 0
    %3727 = vmatpush.msra.mxu0 0.0
    %3728 = vmatpush.msra.mxu0 0.0
    %3729 = vmatpush.msra.mxu0 0.0
    %3730 = vmatpush.msra.mxu0 0.0
    %3731 = vmatpush.msra.mxu0 0.0
    %3732 = vmatpush.msra.mxu0 0.0
    %3733 = vmatpush.msra.mxu0 0.0
    %3734 = vmatpush.msra.mxu0 0.0
    %3735 = vmatpush.msra.mxu0 0.0
    %3736 = vmatpush.msra.mxu0 0.0
    %3737 = vmatpush.msra.mxu0 0.0
    %3738 = vmatpush.msra.mxu0 0.0
    %3739 = vmatpush.msra.mxu0 %v3694
    %3740 = vmatpush.msra.mxu0 %v3693
    %3741 = vmatpush.msra.mxu0 %v3692
    %3742 = vmatpush.msra.mxu0 %v3691
    %3743 = vmatmul.f32.gmra.mxu0 %v3725
    %v3744 = vpop.f32.mrf.mxu0
    %v3745 = vadd.f32 %v3716, %v3744
    %3746 = vdwg.mxu0
    %v3748 = vsel %vm343, %v3687, 0
    %3750 = vmatpush.msra.mxu0 0.0
    %3751 = vmatpush.msra.mxu0 0.0
    %3752 = vmatpush.msra.mxu0 0.0
    %3753 = vmatpush.msra.mxu0 0.0
    %3754 = vmatpush.msra.mxu0 0.0
    %3755 = vmatpush.msra.mxu0 0.0
    %3756 = vmatpush.msra.mxu0 0.0
    %3757 = vmatpush.msra.mxu0 0.0
    %3758 = vmatpush.msra.mxu0 0.0
    %3759 = vmatpush.msra.mxu0 0.0
    %3760 = vmatpush.msra.mxu0 0.0
    %3761 = vmatpush.msra.mxu0 0.0
    %3762 = vmatpush.msra.mxu0 %v3698
    %3763 = vmatpush.msra.mxu0 %v3697
    %3764 = vmatpush.msra.mxu0 %v3696
    %3765 = vmatpush.msra.mxu0 %v3695
    %3766 = vmatmul.f32.gmra.mxu0 %v3748
    %v3767 = vpop.f32.mrf.mxu0
    %v3768 = vadd.f32 %v3717, %v3767
    %3769 = vdwg.mxu0
    %v3771 = vsel %vm343, %v3688, 0
    %3773 = vmatpush.msra.mxu0 0.0
    %3774 = vmatpush.msra.mxu0 0.0
    %3775 = vmatpush.msra.mxu0 0.0
    %3776 = vmatpush.msra.mxu0 0.0
    %3777 = vmatpush.msra.mxu0 0.0
    %3778 = vmatpush.msra.mxu0 0.0
    %3779 = vmatpush.msra.mxu0 0.0
    %3780 = vmatpush.msra.mxu0 0.0
    %3781 = vmatpush.msra.mxu0 0.0
    %3782 = vmatpush.msra.mxu0 0.0
    %3783 = vmatpush.msra.mxu0 0.0
    %3784 = vmatpush.msra.mxu0 0.0
    %3785 = vmatpush.msra.mxu0 %v3702
    %3786 = vmatpush.msra.mxu0 %v3701
    %3787 = vmatpush.msra.mxu0 %v3700
    %3788 = vmatpush.msra.mxu0 %v3699
    %3789 = vmatmul.f32.gmra.mxu0 %v3771
    %v3790 = vpop.f32.mrf.mxu0
    %v3791 = vadd.f32 %v3718, %v3790
    %3792 = vdwg.mxu0
    %v3794 = vsel %vm343, %v3689, 0
    %3796 = vmatpush.msra.mxu0 0.0
    %3797 = vmatpush.msra.mxu0 0.0
    %3798 = vmatpush.msra.mxu0 0.0
    %3799 = vmatpush.msra.mxu0 0.0
    %3800 = vmatpush.msra.mxu0 0.0
    %3801 = vmatpush.msra.mxu0 0.0
    %3802 = vmatpush.msra.mxu0 0.0
    %3803 = vmatpush.msra.mxu0 0.0
    %3804 = vmatpush.msra.mxu0 0.0
    %3805 = vmatpush.msra.mxu0 0.0
    %3806 = vmatpush.msra.mxu0 0.0
    %3807 = vmatpush.msra.mxu0 0.0
    %3808 = vmatpush.msra.mxu0 %v3706
    %3809 = vmatpush.msra.mxu0 %v3705
    %3810 = vmatpush.msra.mxu0 %v3704
    %3811 = vmatpush.msra.mxu0 %v3703
    %3812 = vmatmul.f32.gmra.mxu0 %v3794
    %v3813 = vpop.f32.mrf.mxu0
    %v3814 = vadd.f32 %v3719, %v3813
    %3815 = vdwg.mxu0
    %v3816 = vmul.f32 %v3745, 0.5
    %v3817 = vmul.f32 %v3768, 0.5
    %v3818 = vmul.f32 %v3791, 0.5
    %v3819 = vmul.f32 %v3814, 0.5
    %v3820 = vmul.f32 %v3745, 0.044715
    %v3821 = vmul.f32 %v3768, 0.044715
    %v3822 = vmul.f32 %v3791, 0.044715
    %v3823 = vmul.f32 %v3814, 0.044715
    %v3824 = vmul.f32 %v3820, %v3745
    %v3825 = vmul.f32 %v3821, %v3768
    %v3826 = vmul.f32 %v3822, %v3791
    %v3827 = vmul.f32 %v3823, %v3814
    %v3828 = vmul.f32 %v3824, %v3745
    %v3829 = vmul.f32 %v3825, %v3768
    %v3830 = vmul.f32 %v3826, %v3791
    %v3831 = vmul.f32 %v3827, %v3814
    %v3832 = vadd.f32 %v3745, %v3828
    %v3833 = vadd.f32 %v3768, %v3829
    %v3834 = vadd.f32 %v3791, %v3830
    %v3835 = vadd.f32 %v3814, %v3831
    %v3836 = vmul.f32 %v3832, 0.7978846
    %v3837 = vmul.f32 %v3833, 0.7978846
    %v3838 = vmul.f32 %v3834, 0.7978846
    %v3839 = vmul.f32 %v3835, 0.7978846
    %v3840 = vtanh.pop %v3836
    %v3841 = vtanh.pop %v3837
    %v3842 = vtanh.pop %v3838
    %v3843 = vtanh.pop %v3839
    %v3844 = vadd.f32 %v3840, 1.0
    %v3845 = vadd.f32 %v3841, 1.0
    %v3846 = vadd.f32 %v3842, 1.0
    %v3847 = vadd.f32 %v3843, 1.0
    %v3848 = vmul.f32 %v3816, %v3844
    %v3849 = vmul.f32 %v3817, %v3845
    %v3850 = vmul.f32 %v3818, %v3846
    %v3851 = vmul.f32 %v3819, %v3847
    %s3852 = scalar_lea.vmem %s14, 256
    %v3853 = vld [vmem:[%s3852] sm:$0xff]
    %v3854 = vld [vmem:[%s3852 + $0x8] sm:$0xff]
    %v3855 = vld [vmem:[%s3852 + $0x10] sm:$0xff]
    %v3856 = vld [vmem:[%s3852 + $0x18] sm:$0xff]
    %v3857 = vld [vmem:[%s3852 + $0x20] sm:$0xff]
    %v3858 = vld [vmem:[%s3852 + $0x28] sm:$0xff]
    %v3859 = vld [vmem:[%s3852 + $0x30] sm:$0xff]
    %v3860 = vld [vmem:[%s3852 + $0x38] sm:$0xff]
    %v3861 = vld [vmem:[%s3852 + $0x40] sm:$0xff]
    %v3862 = vld [vmem:[%s3852 + $0x48] sm:$0xff]
    %v3863 = vld [vmem:[%s3852 + $0x50] sm:$0xff]
    %v3864 = vld [vmem:[%s3852 + $0x58] sm:$0xff]
    %v3865 = vld [vmem:[%s3852 + $0x60] sm:$0xff]
    %v3866 = vld [vmem:[%s3852 + $0x68] sm:$0xff]
    %v3867 = vld [vmem:[%s3852 + $0x70] sm:$0xff]
    %v3868 = vld [vmem:[%s3852 + $0x78] sm:$0xff]
    %v3869 = vld [vmem:[%s3852 + $0x80] sm:$0xff]
    %v3870 = vld [vmem:[%s3852 + $0x88] sm:$0xff]
    %v3871 = vld [vmem:[%s3852 + $0x90] sm:$0xff]
    %v3872 = vld [vmem:[%s3852 + $0x98] sm:$0xff]
    %v3873 = vld [vmem:[%s3852 + $0xa0] sm:$0xff]
    %v3874 = vld [vmem:[%s3852 + $0xa8] sm:$0xff]
    %v3875 = vld [vmem:[%s3852 + $0xb0] sm:$0xff]
    %v3876 = vld [vmem:[%s3852 + $0xb8] sm:$0xff]
    %v3877 = vld [vmem:[%s3852 + $0xc0] sm:$0xff]
    %v3878 = vld [vmem:[%s3852 + $0xc8] sm:$0xff]
    %v3879 = vld [vmem:[%s3852 + $0xd0] sm:$0xff]
    %v3880 = vld [vmem:[%s3852 + $0xd8] sm:$0xff]
    %v3881 = vld [vmem:[%s3852 + $0xe0] sm:$0xff]
    %v3882 = vld [vmem:[%s3852 + $0xe8] sm:$0xff]
    %v3883 = vld [vmem:[%s3852 + $0xf0] sm:$0xff]
    %v3884 = vld [vmem:[%s3852 + $0xf8] sm:$0xff]
    %v3886 = vsel %vm1980, %v3848, 0
    %3888 = vmatpush.msra.mxu0 0.0
    %3889 = vmatpush.msra.mxu0 0.0
    %3890 = vmatpush.msra.mxu0 0.0
    %3891 = vmatpush.msra.mxu0 0.0
    %3892 = vmatpush.msra.mxu0 0.0
    %3893 = vmatpush.msra.mxu0 0.0
    %3894 = vmatpush.msra.mxu0 0.0
    %3895 = vmatpush.msra.mxu0 0.0
    %3896 = vmatpush.msra.mxu0 %v3860
    %3897 = vmatpush.msra.mxu0 %v3859
    %3898 = vmatpush.msra.mxu0 %v3858
    %3899 = vmatpush.msra.mxu0 %v3857
    %3900 = vmatpush.msra.mxu0 %v3856
    %3901 = vmatpush.msra.mxu0 %v3855
    %3902 = vmatpush.msra.mxu0 %v3854
    %3903 = vmatpush.msra.mxu0 %v3853
    %3904 = vmatmul.f32.gmra.mxu0 %v3886
    %v3905 = vpop.f32.mrf.mxu0
    %v3906 = vadd.f32 0.0, %v3905
    %3907 = vdwg.mxu0
    %v3909 = vsel %vm1980, %v3849, 0
    %3911 = vmatpush.msra.mxu0 0.0
    %3912 = vmatpush.msra.mxu0 0.0
    %3913 = vmatpush.msra.mxu0 0.0
    %3914 = vmatpush.msra.mxu0 0.0
    %3915 = vmatpush.msra.mxu0 0.0
    %3916 = vmatpush.msra.mxu0 0.0
    %3917 = vmatpush.msra.mxu0 0.0
    %3918 = vmatpush.msra.mxu0 0.0
    %3919 = vmatpush.msra.mxu0 %v3868
    %3920 = vmatpush.msra.mxu0 %v3867
    %3921 = vmatpush.msra.mxu0 %v3866
    %3922 = vmatpush.msra.mxu0 %v3865
    %3923 = vmatpush.msra.mxu0 %v3864
    %3924 = vmatpush.msra.mxu0 %v3863
    %3925 = vmatpush.msra.mxu0 %v3862
    %3926 = vmatpush.msra.mxu0 %v3861
    %3927 = vmatmul.f32.gmra.mxu0 %v3909
    %v3928 = vpop.f32.mrf.mxu0
    %v3929 = vadd.f32 0.0, %v3928
    %3930 = vdwg.mxu0
    %v3932 = vsel %vm1980, %v3850, 0
    %3934 = vmatpush.msra.mxu0 0.0
    %3935 = vmatpush.msra.mxu0 0.0
    %3936 = vmatpush.msra.mxu0 0.0
    %3937 = vmatpush.msra.mxu0 0.0
    %3938 = vmatpush.msra.mxu0 0.0
    %3939 = vmatpush.msra.mxu0 0.0
    %3940 = vmatpush.msra.mxu0 0.0
    %3941 = vmatpush.msra.mxu0 0.0
    %3942 = vmatpush.msra.mxu0 %v3876
    %3943 = vmatpush.msra.mxu0 %v3875
    %3944 = vmatpush.msra.mxu0 %v3874
    %3945 = vmatpush.msra.mxu0 %v3873
    %3946 = vmatpush.msra.mxu0 %v3872
    %3947 = vmatpush.msra.mxu0 %v3871
    %3948 = vmatpush.msra.mxu0 %v3870
    %3949 = vmatpush.msra.mxu0 %v3869
    %3950 = vmatmul.f32.gmra.mxu0 %v3932
    %v3951 = vpop.f32.mrf.mxu0
    %v3952 = vadd.f32 0.0, %v3951
    %3953 = vdwg.mxu0
    %v3955 = vsel %vm1980, %v3851, 0
    %3957 = vmatpush.msra.mxu0 0.0
    %3958 = vmatpush.msra.mxu0 0.0
    %3959 = vmatpush.msra.mxu0 0.0
    %3960 = vmatpush.msra.mxu0 0.0
    %3961 = vmatpush.msra.mxu0 0.0
    %3962 = vmatpush.msra.mxu0 0.0
    %3963 = vmatpush.msra.mxu0 0.0
    %3964 = vmatpush.msra.mxu0 0.0
    %3965 = vmatpush.msra.mxu0 %v3884
    %3966 = vmatpush.msra.mxu0 %v3883
    %3967 = vmatpush.msra.mxu0 %v3882
    %3968 = vmatpush.msra.mxu0 %v3881
    %3969 = vmatpush.msra.mxu0 %v3880
    %3970 = vmatpush.msra.mxu0 %v3879
    %3971 = vmatpush.msra.mxu0 %v3878
    %3972 = vmatpush.msra.mxu0 %v3877
    %3973 = vmatmul.f32.gmra.mxu0 %v3955
    %v3974 = vpop.f32.mrf.mxu0
    %v3975 = vadd.f32 0.0, %v3974
    %3976 = vdwg.mxu0
    %v3977 = vadd.f32 %v3556, %v3906
    %v3978 = vadd.f32 %v3557, %v3929
    %v3979 = vadd.f32 %v3558, %v3952
    %v3980 = vadd.f32 %v3559, %v3975
    %s3981 = scalar_lea.vmem %s15, 4
    %v3982 = vld [vmem:[%s3981] sm:$0x1]
    %v3983 = vld [vmem:[%s3981 + $0x1] sm:$0x1]
    %v3984 = vld [vmem:[%s3981 + $0x2] sm:$0x1]
    %v3985 = vld [vmem:[%s3981 + $0x3] sm:$0x1]
    %v3990 = vperm.slane %v3982, 0
    %v3991 = vperm.slane %v3983, 0
    %v3992 = vperm.slane %v3984, 0
    %v3993 = vperm.slane %v3985, 0
    %v3998 = vadd.f32 %v3977, %v3990
    %v3999 = vadd.f32 %v3978, %v3991
    %v4000 = vadd.f32 %v3979, %v3992
    %v4001 = vadd.f32 %v3980, %v3993
    %v4004 = vrot.slane %v3999, 7
    %vm4005 = vcmask 1041409
    %v4006 = vsel %vm4005, %v4004, %v3998
    %v4010 = vrot.slane %v4001, 7
    %v4011 = vsel %vm4005, %v4010, %v4000
    %4012 = vrot.lane.b32.xlu0 %v4011, 32
    %v4013 = vpop.permute.xlu0 %4012
    %v4015 = vsel %vm343, %v4006, %v4013
    %vm4016 = vcmask 517120
    %4017 = vst.msk [vmem:[#allocation2] sm:$0x3] %vm4016, %v4015
    %v4018 = vsel %vm4016, %v4015, 0.0
    %4019 = vadd.xlane.f32.xlu0 %v4018
    %v4020 = vpop.xlane.xlu0 %4019
    %v4021 = vrcp.pop 64.0
    %v4022 = vmul.f32 64.0, %v4021
    %v4023 = vsub.f32 1.0, %v4022
    %v4024 = vmul.f32 %v4021, %v4023
    %v4025 = vadd.f32 %v4021, %v4024
    %vm4026 = vweird.f32 %v4021
    %v4027 = vsel %vm4026, %v4021, %v4025
    %v4028 = vmul.f32 %v4020, %v4027
    %v4029 = vsub.f32 %v4015, %v4028
    %v4030 = vmul.f32 %v4029, %v4029
    %v4031 = vsel %vm4016, %v4030, 0.0
    %4032 = vadd.xlane.f32.xlu0 %v4031
    %v4033 = vpop.xlane.xlu0 %4032
    %v4034 = vmul.f32 %v4033, %v4027
    %v4035 = vadd.f32 %v4034, 1e-05
    %v4036 = vrsqrt.pop %v4035
    %v4037 = vmul.f32 %v4036, %v4035
    %v4038 = vmul.f32 %v4037, %v4036
    %v4039 = vmul.f32 0.5, %v4038
    %v4040 = vsub.f32 1.5, %v4039
    %v4041 = vmul.f32 %v4036, %v4040
    %vm4042 = vweird.f32 %v4035
    %vm4043 = vweird.f32 %v4036
    %vm4044 = vmor %vm4042, %vm4043
    %v4045 = vsel %vm4044, %v4036, %v4041
    %v4046 = vmul.f32 %v4029, %v4045
    %v4047 = vld [vmem:[%s16] sm:$0x1]
    %v4049 = vperm.slane %v4047, 0
    %v4051 = vmul.f32 %v4046, %v4049
    %v4052 = vld [vmem:[%s17] sm:$0x1]
    %v4054 = vperm.slane %v4052, 0
    %v4056 = vadd.f32 %v4051, %v4054
    %v4057 = vld [vmem:[%s18] sm:$0xff]
    %v4058 = vld [vmem:[%s18 + $0x8] sm:$0xff]
    %v4059 = vld [vmem:[%s18 + $0x10] sm:$0xff]
    %v4060 = vld [vmem:[%s18 + $0x18] sm:$0xff]
    %v4061 = vld [vmem:[%s18 + $0x20] sm:$0xff]
    %v4062 = vld [vmem:[%s18 + $0x28] sm:$0xff]
    %v4063 = vld [vmem:[%s18 + $0x30] sm:$0xff]
    %v4064 = vld [vmem:[%s18 + $0x38] sm:$0xff]
    %v4065 = vld [vmem:[%s19] sm:$0x1]
    %v4067 = vperm.slane %v4065, 0
    %v4070 = vsel %vm1980, %v4056, 0
    %4072 = vmatpush.msra.mxu0 0.0
    %4073 = vmatpush.msra.mxu0 0.0
    %4074 = vmatpush.msra.mxu0 0.0
    %4075 = vmatpush.msra.mxu0 0.0
    %4076 = vmatpush.msra.mxu0 0.0
    %4077 = vmatpush.msra.mxu0 0.0
    %4078 = vmatpush.msra.mxu0 0.0
    %4079 = vmatpush.msra.mxu0 0.0
    %4080 = vmatpush.msra.mxu0 %v4064
    %4081 = vmatpush.msra.mxu0 %v4063
    %4082 = vmatpush.msra.mxu0 %v4062
    %4083 = vmatpush.msra.mxu0 %v4061
    %4084 = vmatpush.msra.mxu0 %v4060
    %4085 = vmatpush.msra.mxu0 %v4059
    %4086 = vmatpush.msra.mxu0 %v4058
    %4087 = vmatpush.msra.mxu0 %v4057
    %4088 = vmatmul.f32.gmra.mxu0 %v4070
    %v4089 = vpop.f32.mrf.mxu0
    %v4090 = vadd.f32 %v4067, %v4089
    %4091 = vdwg.mxu0
    %vm4092 = vcmask 25600
    %4093 = vst.msk [vmem:[#allocation4] sm:$0x3] %vm4092, %v4090
    // Predicated region
    $region82: #{vit_forward.1} parent=1 // pred_check
      _
    $region83: #{vit_forward.1} parent=1 // pred_check_branch
      %4095 = sbr.rel (0) target = $region85
    $region84: #{vit_forward.1} parent=1 // pred_region
      %4097 = vsyncadd [#allocation3], 0
      %s4099 = sshll.u32 [#allocation2], 4
      %s4100 = int_to_ptr.vmem [resolvable:$true] %s4099
      %s4101 = sshll.u32 %s20, 4
      %s4102 = int_to_ptr.hbm [resolvable:$true] %s4101
      %4104 = dma.vmem_to_hbm [thread:$0]  %s4100, 32, %s4102, [#allocation3]
    $region85: #{vit_forward.1} parent=1 // pred_fallthru
      _
    // Predicated region
    $region86: #{vit_forward.1} parent=1 // pred_check
      _
    $region87: #{vit_forward.1} parent=1 // pred_check_branch
      %4106 = sbr.rel (0) target = $region89
    $region88: #{vit_forward.1} parent=1 // pred_region
      %4108 = vsyncadd [#allocation5], 0
      %s4110 = sshll.u32 [#allocation4], 4
      %s4111 = int_to_ptr.vmem [resolvable:$true] %s4110
      %s4112 = sshll.u32 %s21, 4
      %s4113 = int_to_ptr.hbm [resolvable:$true] %s4112
      %4115 = dma.vmem_to_hbm [thread:$0]  %s4111, 32, %s4113, [#allocation5]
    $region89: #{vit_forward.1} parent=1 // pred_fallthru
      _
    // Predicated region
    $region90: #{vit_forward.1} parent=1 // pred_check
      _
    $region91: #{vit_forward.1} parent=1 // pred_check_branch
      %4117 = sbr.rel (0) target = $region93
    $region92: #{vit_forward.1} parent=1 // pred_region
      %4119 = dma.done [#allocation3], 32
    $region93: #{vit_forward.1} parent=1 // pred_fallthru
      _
    // Predicated region
    $region94: #{vit_forward.1} parent=1 // pred_check
      _
    $region95: #{vit_forward.1} parent=1 // pred_check_branch
      %4121 = sbr.rel (0) target = $region97
    $region96: #{vit_forward.1} parent=1 // pred_region
      %4123 = dma.done [#allocation5], 32
    $region97: #{vit_forward.1} parent=1 // pred_fallthru
      _
    %4124 = vsyncpa [#allocation3], 1
    %4125 = vsyncpa [#allocation5], 1

</llo_original>
